<compile_context>
chip_gen: v5e
topology: v5e:2x2
jax: 0.10.0
libtpu: 0.0.40
codegen_flags: <defaults>
</compile_context>

<pallas_src>
import functools

import jax
import jax.numpy as jnp
from jax import lax
from jax.experimental import pallas as pl
from jax.experimental.pallas import tpu as pltpu


def _affine_stn_kernel(theta_ref, pbase_ref, qbase_ref, x_ref, out_ref,
                       *, NB, IH, IW):
    """One (batch-group, output-pixel-tile) grid step.

    theta_ref : SMEM, flat (N*6,) f32
    pbase_ref : VMEM (TP, 2)  f32   [:,0]=ws (norm x), [:,1]=hs (norm y)
    qbase_ref : VMEM (2, Q)   f32   [0]=input col, [1]=input row (as floats)
    x_ref     : VMEM (NB, C, Q)  f32
    out_ref   : VMEM (NB, C, TP) f32
    """
    n = pl.program_id(0)

    # Hoisted, theta-independent coordinate vectors.
    q_x = qbase_ref[0:1, :]          # (1, Q)
    q_y = qbase_ref[1:2, :]          # (1, Q)
    ws = pbase_ref[:, 0:1]           # (TP, 1) normalized x per output pixel
    hs = pbase_ref[:, 1:2]           # (TP, 1) normalized y per output pixel

    half_w = 0.5 * float(IW - 1)     # align_corners=True mapping
    half_h = 0.5 * float(IH - 1)
    xmax = float(IW - 1)
    ymax = float(IH - 1)

    for b in range(NB):              # static unroll: NB images per grid step
        idx = (n * NB + b) * 6
        t00 = theta_ref[idx + 0]
        t01 = theta_ref[idx + 1]
        t02 = theta_ref[idx + 2]
        t10 = theta_ref[idx + 3]
        t11 = theta_ref[idx + 4]
        t12 = theta_ref[idx + 5]

        # Source grid for this tile of output pixels: theta @ [w, h, 1].
        gx = t00 * ws + t01 * hs + t02               # (TP, 1) in [-1, 1]
        gy = t10 * ws + t11 * hs + t12               # (TP, 1)
        ix = (gx + 1.0) * half_w                     # source pixel coords
        iy = (gy + 1.0) * half_h

        x0 = jnp.floor(ix)
        x1 = x0 + 1.0
        y0 = jnp.floor(iy)
        y1 = y0 + 1.0
        wx1 = ix - x0
        wx0 = 1.0 - wx1
        wy1 = iy - y0
        wy0 = 1.0 - wy1

        # Fold zero-padding bounds into the per-axis weights (exact
        # factorization of the 4-corner zero-padded bilinear kernel).
        wx0 = jnp.where((x0 >= 0.0) & (x0 <= xmax), wx0, 0.0)
        wx1 = jnp.where((x1 >= 0.0) & (x1 <= xmax), wx1, 0.0)
        wy0 = jnp.where((y0 >= 0.0) & (y0 <= ymax), wy0, 0.0)
        wy1 = jnp.where((y1 >= 0.0) & (y1 <= ymax), wy1, 0.0)

        # Separable one-hot weights, (TP, Q) each; samp = WX * WY.
        WX = (jnp.where(q_x == x0, wx0, 0.0) +
              jnp.where(q_x == x1, wx1, 0.0))
        WY = (jnp.where(q_y == y0, wy0, 0.0) +
              jnp.where(q_y == y1, wy1, 0.0))
        samp = (WX * WY).astype(jnp.bfloat16)        # (TP, Q)

        # (C, Q) x (TP, Q)^T on the MXU, bf16 inputs / f32 accumulate.
        x2d = x_ref[b].astype(jnp.bfloat16)          # (C, Q)
        res = lax.dot_general(x2d, samp,
                              dimension_numbers=(((1,), (1,)), ((), ())),
                              preferred_element_type=jnp.float32)  # (C, TP)
        out_ref[b] = res.astype(out_ref.dtype)


def _choose_tp(P, Q, max_tp=512):
    """Output-pixel tile: lane-dense, divides P, bounded VMEM intermediates."""
    # ~3x f32 + 1x bf16 live (TP, Q) slabs kept under ~16 MiB.
    budget_elems = (16 << 20) // 16
    cap = (budget_elems // max(Q, 1)) // 128 * 128
    cap = max(128, min(max_tp, cap))
    if P <= cap:
        return P
    for tp in range(cap, 127, -128):
        if P % tp == 0:
            return tp
    return P  # rare fallback (P not a multiple of 128 and > cap)


def _choose_nb(N, C, Q):
    """Images per grid step: amortize step overhead, keep >= 2 grid steps."""
    target = max(1, (64 * 1024) // max(C * Q * 4, 1))
    nb = 1
    for cand in range(2, N + 1):
        if N % cand == 0 and cand <= target and (N // cand) >= 2:
            nb = cand
    return nb


def affine_spatial_transform(x, theta, OH, OW, *, nb=None, max_tp=512):
    """x: (N, C, IH, IW) f32, theta: (N, 2, 3) f32.

    Returns (out, vertices_out): out (N, C, OH, OW), vertices_out (N, 4, 2),
    matching the PyTorch module's forward().
    """
    N, C, IH, IW = x.shape
    P = OH * OW
    Q = IH * IW
    x_flat = x.reshape(N, C, Q).astype(jnp.float32)
    theta = theta.astype(jnp.float32)
    theta_flat = theta.reshape(N * 6)

    TP = _choose_tp(P, Q, max_tp)
    NB = _choose_nb(N, C, Q) if nb is None else nb
    assert N % NB == 0 and P % TP == 0

    # Constant coordinate buffers (analogue of the module's registered
    # buffers) — keeps all iota / int div-mod out of the kernel.
    ws = jnp.linspace(-1.0, 1.0, OW, dtype=jnp.float32)
    hs = jnp.linspace(-1.0, 1.0, OH, dtype=jnp.float32)
    wgrid = jnp.tile(ws[None, :], (OH, 1)).reshape(P)        # output col coord
    hgrid = jnp.repeat(hs, OW)                               # output row coord
    pbase = jnp.stack([wgrid, hgrid], axis=1)                # (P, 2)
    qx = jnp.tile(jnp.arange(IW, dtype=jnp.float32)[None, :], (IH, 1)).reshape(Q)
    qy = jnp.repeat(jnp.arange(IH, dtype=jnp.float32), IW)
    qbase = jnp.stack([qx, qy], axis=0)                      # (2, Q)

    kernel = functools.partial(_affine_stn_kernel, NB=NB, IH=IH, IW=IW)

    out_flat = pl.pallas_call(
        kernel,
        out_shape=jax.ShapeDtypeStruct((N, C, P), jnp.float32),
        grid_spec=pltpu.PrefetchScalarGridSpec(
            num_scalar_prefetch=0,
            grid=(N // NB, P // TP),          # P-tile axis last: x block reused
            in_specs=[
                # flat theta in SMEM: cheap scalar reads, no 2-D SMEM padding
                pl.BlockSpec(memory_space=pltpu.MemorySpace.SMEM),
                pl.BlockSpec((TP, 2), lambda n, p: (p, 0)),   # pbase
                pl.BlockSpec((2, Q), lambda n, p: (0, 0)),    # qbase
                pl.BlockSpec((NB, C, Q), lambda n, p: (n, 0, 0)),  # x
            ],
            out_specs=pl.BlockSpec((NB, C, TP), lambda n, p: (n, 0, p)),
        ),
        compiler_params=pltpu.CompilerParams(
            dimension_semantics=("parallel", "parallel"),
            vmem_limit_bytes=48 * 1024 * 1024),
    )(theta_flat, pbase, qbase, x_flat)

    out = out_flat.reshape(N, C, OH, OW)

    # Transformed vertices: 24 flops per batch element — plain jnp, keeps the
    # kernel's epilogue lane-dense (no tiny (4,2) masked-store output stream).
    verts = jnp.array([[-1.0, -1.0, 1.0],
                       [-1.0,  1.0, 1.0],
                       [ 1.0,  1.0, 1.0],
                       [ 1.0, -1.0, 1.0]], jnp.float32)
    vout = jnp.einsum('nij,kj->nki', theta, verts)            # (N, 4, 2)
    x_coord = (vout[..., 0] + 1.0) * (IW / 2.0)               # module's convention
    y_coord = (vout[..., 1] + 1.0) * (IH / 2.0)
    vertices_out = jnp.stack([x_coord, y_coord], axis=2)
    return out, vertices_out


def _reference_grid_sample(x, theta, OH, OW):
    """Pure-jnp bilinear grid_sample (align_corners=True, zeros padding)."""
    N, C, IH, IW = x.shape
    ws = jnp.linspace(-1.0, 1.0, OW)
    hs = jnp.linspace(-1.0, 1.0, OH)
    wg, hg = jnp.meshgrid(ws, hs)                             # (OH, OW)
    base = jnp.stack([wg, hg, jnp.ones_like(wg)], axis=-1)    # (OH, OW, 3)
    grid = jnp.einsum('nij,hwj->nhwi', theta, base)           # (N, OH, OW, 2)
    gx, gy = grid[..., 0], grid[..., 1]
    ix = (gx + 1.0) * 0.5 * (IW - 1)
    iy = (gy + 1.0) * 0.5 * (IH - 1)
    x0 = jnp.floor(ix); x1 = x0 + 1.0
    y0 = jnp.floor(iy); y1 = y0 + 1.0
    wx1 = ix - x0; wx0 = 1.0 - wx1
    wy1 = iy - y0; wy0 = 1.0 - wy1

    bidx = jnp.arange(N)[:, None, None, None]
    cidx = jnp.arange(C)[None, :, None, None]

    def gather(yc, xc):
        valid = (xc >= 0) & (xc <= IW - 1) & (yc >= 0) & (yc <= IH - 1)
        xi = jnp.clip(xc, 0, IW - 1).astype(jnp.int32)
        yi = jnp.clip(yc, 0, IH - 1).astype(jnp.int32)
        v = x[bidx, cidx, yi[:, None], xi[:, None]]
        return jnp.where(valid[:, None], v, 0.0)

    return (gather(y0, x0) * (wx0 * wy0)[:, None] +
            gather(y0, x1) * (wx1 * wy0)[:, None] +
            gather(y1, x0) * (wx0 * wy1)[:, None] +
            gather(y1, x1) * (wx1 * wy1)[:, None])


if __name__ == "__main__":
    key = jax.random.PRNGKey(0)
    N, C, IH, IW = 2, 4, 16, 16
    OH, OW = 16, 16

    kx, kt = jax.random.split(key)
    x = jax.random.normal(kx, (N, C, IH, IW), dtype=jnp.float32)
    identity = jnp.tile(jnp.array([[1.0, 0.0, 0.0],
                                   [0.0, 1.0, 0.0]], jnp.float32), (N, 1, 1))
    theta = identity + 0.1 * jax.random.normal(kt, (N, 2, 3), dtype=jnp.float32)

    out, verts = affine_spatial_transform(x, theta, OH, OW)
    jax.block_until_ready((out, verts))

    assert out.shape == (N, C, OH, OW)
    assert verts.shape == (N, 4, 2)

    # Correctness vs. pure-jnp reference (loose tol: bf16 MXU inputs).
    ref = _reference_grid_sample(x, theta, OH, OW)
    max_err = float(jnp.max(jnp.abs(out - ref)))
    assert max_err < 5e-2, f"max abs error {max_err}"

    print("KERNEL_OK")
</pallas_src>

<mosaic_0001>
module attributes {stable_mosaic.version = 11 : i64} {
  func.func @_affine_stn_kernel(%arg0: i32, %arg1: i32, %arg2: memref<12xf32, #tpu.memory_space<smem>>, %arg3: memref<256x2xf32, #tpu.memory_space<vmem>>, %arg4: memref<2x256xf32, #tpu.memory_space<vmem>>, %arg5: memref<1x4x256xf32, #tpu.memory_space<vmem>>, %arg6: memref<1x4x256xf32, #tpu.memory_space<vmem>>) attributes {dimension_semantics = [#tpu.dimension_semantics<parallel>, #tpu.dimension_semantics<parallel>], iteration_bounds = array<i64: 2, 1>, scalar_prefetch = 0 : i64, scratch_operands = 0 : i64, tpu.core_type = #tpu.core_type<tc>, window_params = [{transform_indices = @transform_0, window_bounds = array<i64: 12>}, {transform_indices = @transform_1, window_bounds = array<i64: 256, 2>}, {pipeline_mode = #tpu.pipeline_mode<synchronous>, transform_indices = @transform_2, window_bounds = array<i64: 2, 256>}, {transform_indices = @transform_3, window_bounds = array<i64: 1, 4, 256>}, {transform_indices = @transform_4, window_bounds = array<i64: 1, 4, 256>}]} {
    %c0 = arith.constant 0 : index
    %c0_0 = arith.constant 0 : index
    %0 = vector.load %arg4[%c0, %c0_0] : memref<2x256xf32, #tpu.memory_space<vmem>>, vector<1x256xf32>
    %c1 = arith.constant 1 : index
    %c0_1 = arith.constant 0 : index
    %1 = vector.load %arg4[%c1, %c0_1] : memref<2x256xf32, #tpu.memory_space<vmem>>, vector<1x256xf32>
    %c0_2 = arith.constant 0 : index
    %c0_3 = arith.constant 0 : index
    %2 = vector.load %arg3[%c0_2, %c0_3] : memref<256x2xf32, #tpu.memory_space<vmem>>, vector<256x1xf32>
    %c0_4 = arith.constant 0 : index
    %c1_5 = arith.constant 1 : index
    %3 = vector.load %arg3[%c0_4, %c1_5] : memref<256x2xf32, #tpu.memory_space<vmem>>, vector<256x1xf32>
    %c1_i32 = arith.constant 1 : i32
    %4 = arith.muli %arg0, %c1_i32 : i32
    %c0_i32 = arith.constant 0 : i32
    %5 = arith.addi %4, %c0_i32 : i32
    %c6_i32 = arith.constant 6 : i32
    %6 = arith.muli %5, %c6_i32 : i32
    %c0_i32_6 = arith.constant 0 : i32
    %7 = arith.addi %6, %c0_i32_6 : i32
    %8 = arith.index_cast %7 : i32 to index
    %9 = memref.load %arg2[%8] : memref<12xf32, #tpu.memory_space<smem>>
    %c1_i32_7 = arith.constant 1 : i32
    %10 = arith.addi %6, %c1_i32_7 : i32
    %11 = arith.index_cast %10 : i32 to index
    %12 = memref.load %arg2[%11] : memref<12xf32, #tpu.memory_space<smem>>
    %c2_i32 = arith.constant 2 : i32
    %13 = arith.addi %6, %c2_i32 : i32
    %14 = arith.index_cast %13 : i32 to index
    %15 = memref.load %arg2[%14] : memref<12xf32, #tpu.memory_space<smem>>
    %c3_i32 = arith.constant 3 : i32
    %16 = arith.addi %6, %c3_i32 : i32
    %17 = arith.index_cast %16 : i32 to index
    %18 = memref.load %arg2[%17] : memref<12xf32, #tpu.memory_space<smem>>
    %c4_i32 = arith.constant 4 : i32
    %19 = arith.addi %6, %c4_i32 : i32
    %20 = arith.index_cast %19 : i32 to index
    %21 = memref.load %arg2[%20] : memref<12xf32, #tpu.memory_space<smem>>
    %c5_i32 = arith.constant 5 : i32
    %22 = arith.addi %6, %c5_i32 : i32
    %23 = arith.index_cast %22 : i32 to index
    %24 = memref.load %arg2[%23] : memref<12xf32, #tpu.memory_space<smem>>
    %25 = vector.broadcast %9 : f32 to vector<256x1xf32>
    %26 = arith.mulf %25, %2 : vector<256x1xf32>
    %27 = vector.broadcast %12 : f32 to vector<256x1xf32>
    %28 = arith.mulf %27, %3 : vector<256x1xf32>
    %29 = arith.addf %26, %28 : vector<256x1xf32>
    %30 = vector.broadcast %15 : f32 to vector<256x1xf32>
    %31 = arith.addf %29, %30 : vector<256x1xf32>
    %32 = vector.broadcast %18 : f32 to vector<256x1xf32>
    %33 = arith.mulf %32, %2 : vector<256x1xf32>
    %34 = vector.broadcast %21 : f32 to vector<256x1xf32>
    %35 = arith.mulf %34, %3 : vector<256x1xf32>
    %36 = arith.addf %33, %35 : vector<256x1xf32>
    %37 = vector.broadcast %24 : f32 to vector<256x1xf32>
    %38 = arith.addf %36, %37 : vector<256x1xf32>
    %cst = arith.constant 1.000000e+00 : f32
    %39 = vector.broadcast %cst : f32 to vector<256x1xf32>
    %40 = arith.addf %31, %39 : vector<256x1xf32>
    %cst_8 = arith.constant 7.500000e+00 : f32
    %41 = vector.broadcast %cst_8 : f32 to vector<256x1xf32>
    %42 = arith.mulf %40, %41 : vector<256x1xf32>
    %cst_9 = arith.constant 1.000000e+00 : f32
    %43 = vector.broadcast %cst_9 : f32 to vector<256x1xf32>
    %44 = arith.addf %38, %43 : vector<256x1xf32>
    %cst_10 = arith.constant 7.500000e+00 : f32
    %45 = vector.broadcast %cst_10 : f32 to vector<256x1xf32>
    %46 = arith.mulf %44, %45 : vector<256x1xf32>
    %47 = math.floor %42 : vector<256x1xf32>
    %cst_11 = arith.constant 1.000000e+00 : f32
    %48 = vector.broadcast %cst_11 : f32 to vector<256x1xf32>
    %49 = arith.addf %47, %48 : vector<256x1xf32>
    %50 = math.floor %46 : vector<256x1xf32>
    %cst_12 = arith.constant 1.000000e+00 : f32
    %51 = vector.broadcast %cst_12 : f32 to vector<256x1xf32>
    %52 = arith.addf %50, %51 : vector<256x1xf32>
    %53 = arith.subf %42, %47 : vector<256x1xf32>
    %cst_13 = arith.constant 1.000000e+00 : f32
    %54 = vector.broadcast %cst_13 : f32 to vector<256x1xf32>
    %55 = arith.subf %54, %53 : vector<256x1xf32>
    %56 = arith.subf %46, %50 : vector<256x1xf32>
    %cst_14 = arith.constant 1.000000e+00 : f32
    %57 = vector.broadcast %cst_14 : f32 to vector<256x1xf32>
    %58 = arith.subf %57, %56 : vector<256x1xf32>
    %cst_15 = arith.constant 0.000000e+00 : f32
    %59 = vector.broadcast %cst_15 : f32 to vector<256x1xf32>
    %60 = arith.cmpf oge, %47, %59 : vector<256x1xf32>
    %cst_16 = arith.constant 1.500000e+01 : f32
    %61 = vector.broadcast %cst_16 : f32 to vector<256x1xf32>
    %62 = arith.cmpf ole, %47, %61 : vector<256x1xf32>
    %63 = arith.andi %60, %62 : vector<256x1xi1>
    %cst_17 = arith.constant 0.000000e+00 : f32
    %64 = vector.broadcast %cst_17 : f32 to vector<256x1xf32>
    %65 = arith.select %63, %55, %64 : vector<256x1xi1>, vector<256x1xf32>
    %cst_18 = arith.constant 0.000000e+00 : f32
    %66 = vector.broadcast %cst_18 : f32 to vector<256x1xf32>
    %67 = arith.cmpf oge, %49, %66 : vector<256x1xf32>
    %cst_19 = arith.constant 1.500000e+01 : f32
    %68 = vector.broadcast %cst_19 : f32 to vector<256x1xf32>
    %69 = arith.cmpf ole, %49, %68 : vector<256x1xf32>
    %70 = arith.andi %67, %69 : vector<256x1xi1>
    %cst_20 = arith.constant 0.000000e+00 : f32
    %71 = vector.broadcast %cst_20 : f32 to vector<256x1xf32>
    %72 = arith.select %70, %53, %71 : vector<256x1xi1>, vector<256x1xf32>
    %cst_21 = arith.constant 0.000000e+00 : f32
    %73 = vector.broadcast %cst_21 : f32 to vector<256x1xf32>
    %74 = arith.cmpf oge, %50, %73 : vector<256x1xf32>
    %cst_22 = arith.constant 1.500000e+01 : f32
    %75 = vector.broadcast %cst_22 : f32 to vector<256x1xf32>
    %76 = arith.cmpf ole, %50, %75 : vector<256x1xf32>
    %77 = arith.andi %74, %76 : vector<256x1xi1>
    %cst_23 = arith.constant 0.000000e+00 : f32
    %78 = vector.broadcast %cst_23 : f32 to vector<256x1xf32>
    %79 = arith.select %77, %58, %78 : vector<256x1xi1>, vector<256x1xf32>
    %cst_24 = arith.constant 0.000000e+00 : f32
    %80 = vector.broadcast %cst_24 : f32 to vector<256x1xf32>
    %81 = arith.cmpf oge, %52, %80 : vector<256x1xf32>
    %cst_25 = arith.constant 1.500000e+01 : f32
    %82 = vector.broadcast %cst_25 : f32 to vector<256x1xf32>
    %83 = arith.cmpf ole, %52, %82 : vector<256x1xf32>
    %84 = arith.andi %81, %83 : vector<256x1xi1>
    %cst_26 = arith.constant 0.000000e+00 : f32
    %85 = vector.broadcast %cst_26 : f32 to vector<256x1xf32>
    %86 = arith.select %84, %56, %85 : vector<256x1xi1>, vector<256x1xf32>
    %87 = vector.broadcast %0 : vector<1x256xf32> to vector<256x256xf32>
    %88 = vector.broadcast %47 : vector<256x1xf32> to vector<256x256xf32>
    %89 = arith.cmpf oeq, %87, %88 : vector<256x256xf32>
    %cst_27 = arith.constant 0.000000e+00 : f32
    %90 = vector.shape_cast %65 : vector<256x1xf32> to vector<256x1xf32>
    %91 = vector.broadcast %90 : vector<256x1xf32> to vector<256x256xf32>
    %92 = vector.broadcast %cst_27 : f32 to vector<256x256xf32>
    %93 = arith.select %89, %91, %92 : vector<256x256xi1>, vector<256x256xf32>
    %94 = vector.broadcast %0 : vector<1x256xf32> to vector<256x256xf32>
    %95 = vector.broadcast %49 : vector<256x1xf32> to vector<256x256xf32>
    %96 = arith.cmpf oeq, %94, %95 : vector<256x256xf32>
    %cst_28 = arith.constant 0.000000e+00 : f32
    %97 = vector.shape_cast %72 : vector<256x1xf32> to vector<256x1xf32>
    %98 = vector.broadcast %97 : vector<256x1xf32> to vector<256x256xf32>
    %99 = vector.broadcast %cst_28 : f32 to vector<256x256xf32>
    %100 = arith.select %96, %98, %99 : vector<256x256xi1>, vector<256x256xf32>
    %101 = arith.addf %93, %100 : vector<256x256xf32>
    %102 = vector.broadcast %1 : vector<1x256xf32> to vector<256x256xf32>
    %103 = vector.broadcast %50 : vector<256x1xf32> to vector<256x256xf32>
    %104 = arith.cmpf oeq, %102, %103 : vector<256x256xf32>
    %cst_29 = arith.constant 0.000000e+00 : f32
    %105 = vector.shape_cast %79 : vector<256x1xf32> to vector<256x1xf32>
    %106 = vector.broadcast %105 : vector<256x1xf32> to vector<256x256xf32>
    %107 = vector.broadcast %cst_29 : f32 to vector<256x256xf32>
    %108 = arith.select %104, %106, %107 : vector<256x256xi1>, vector<256x256xf32>
    %109 = vector.broadcast %1 : vector<1x256xf32> to vector<256x256xf32>
    %110 = vector.broadcast %52 : vector<256x1xf32> to vector<256x256xf32>
    %111 = arith.cmpf oeq, %109, %110 : vector<256x256xf32>
    %cst_30 = arith.constant 0.000000e+00 : f32
    %112 = vector.shape_cast %86 : vector<256x1xf32> to vector<256x1xf32>
    %113 = vector.broadcast %112 : vector<256x1xf32> to vector<256x256xf32>
    %114 = vector.broadcast %cst_30 : f32 to vector<256x256xf32>
    %115 = arith.select %111, %113, %114 : vector<256x256xi1>, vector<256x256xf32>
    %116 = arith.addf %108, %115 : vector<256x256xf32>
    %117 = arith.mulf %101, %116 : vector<256x256xf32>
    %118 = arith.truncf %117 : vector<256x256xf32> to vector<256x256xbf16>
    %c0_31 = arith.constant 0 : index
    %c0_32 = arith.constant 0 : index
    %c0_33 = arith.constant 0 : index
    %119 = vector.load %arg5[%c0_31, %c0_32, %c0_33] : memref<1x4x256xf32, #tpu.memory_space<vmem>>, vector<1x4x256xf32>
    %120 = vector.shape_cast %119 : vector<1x4x256xf32> to vector<4x256xf32>
    %121 = arith.truncf %120 : vector<4x256xf32> to vector<4x256xbf16>
    %cst_34 = arith.constant dense<0.000000e+00> : vector<4x256xf32>
    %122 = tpu.matmul %121, %118, %cst_34 {dimension_numbers = #tpu.dot_dimension_numbers<[1], [1], [0], [0], [0, 0, 1, 0], [], []>} : vector<4x256xbf16>, vector<256x256xbf16>, vector<4x256xf32> -> vector<4x256xf32>
    %c0_35 = arith.constant 0 : index
    %c0_36 = arith.constant 0 : index
    %c0_37 = arith.constant 0 : index
    %123 = vector.load %arg6[%c0_35, %c0_36, %c0_37] : memref<1x4x256xf32, #tpu.memory_space<vmem>>, vector<1x4x256xf32>
    %124 = vector.shape_cast %123 : vector<1x4x256xf32> to vector<4x256xf32>
    %125 = vector.shape_cast %122 : vector<4x256xf32> to vector<1x4x256xf32>
    tpu.vector_store %arg6[%c0_35, %c0_36, %c0_37], %125 {strides = array<i32>} : memref<1x4x256xf32, #tpu.memory_space<vmem>>, vector<1x4x256xf32>,
    return
  }
  func.func @transform_0(%arg0: i32, %arg1: i32) -> i32 {
    %c0_i32 = arith.constant 0 : i32
    %c0_i32_0 = arith.constant 0 : i32
    return %c0_i32 : i32
  }
  func.func @transform_1(%arg0: i32, %arg1: i32) -> (i32, i32) {
    %c0_i32 = arith.constant 0 : i32
    %c0_i32_0 = arith.constant 0 : i32
    return %arg1, %c0_i32 : i32, i32
  }
  func.func @transform_2(%arg0: i32, %arg1: i32) -> (i32, i32) {
    %c0_i32 = arith.constant 0 : i32
    %c0_i32_0 = arith.constant 0 : i32
    %c0_i32_1 = arith.constant 0 : i32
    return %c0_i32, %c0_i32_0 : i32, i32
  }
  func.func @transform_3(%arg0: i32, %arg1: i32) -> (i32, i32, i32) {
    %c0_i32 = arith.constant 0 : i32
    %c0_i32_0 = arith.constant 0 : i32
    %c0_i32_1 = arith.constant 0 : i32
    return %arg0, %c0_i32, %c0_i32_0 : i32, i32, i32
  }
  func.func @transform_4(%arg0: i32, %arg1: i32) -> (i32, i32, i32) {
    %c0_i32 = arith.constant 0 : i32
    %c0_i32_0 = arith.constant 0 : i32
    return %arg0, %c0_i32, %arg1 : i32, i32, i32
  }
}

</mosaic_0001>

<llo_original>
// kernel: tpu_custom_call.1
$region0: #{tpu_custom_call.1}
  #allocation0 [shape = 'u32[]', space=smem, size = 0x4, offset = 0x4, fixed_abs, tag = 'smem constant byte address 0x4 - core index']
  #allocation1 [shape = 'u32[72,128]{1,0:T(1,128)}', space=vmem, size = 0x9000, scoped, tag = 'internal scratch']
  %s0 = inlined_call_operand.vmem [shape: f32[12], index: 0, kind: input, shape index: {}]
  %s1 = inlined_call_operand.vmem [shape: f32[256,2], index: 1, kind: input, shape index: {}]
  %s2 = inlined_call_operand.vmem [shape: f32[2,256], index: 2, kind: input, shape index: {}]
  %s3 = inlined_call_operand.vmem [shape: f32[2,4,256], index: 3, kind: input, shape index: {}]
  %s4 = inlined_call_operand.hbm [shape: f32[2,4,256], index: 4, kind: output, shape index: {}]
  %s5 = sld [smem:[#allocation0]]
  $region53: #{tpu_custom_call.1} parent=0
    _
  %s7 = ssub.s32 1, %s5
  %s8 = scalar_select 0, %s7, %s5
  $region1: #{tpu_custom_call.1} parent=0
    #allocation2 [shape = 'u8[512]{0}', space=smem, size = 0x200, scoped, tag = 'input window, operand 0, single buffered']
    #allocation3 [shape = 's32[2]{0}', space=sflag, size = 0x8, scoped, tag = 'scoped memory for tpu_custom_call.1']
    #allocation4 [shape = 's32[2]{0}', space=sflag, size = 0x8, scoped, tag = 'scoped memory for tpu_custom_call.1']
    #allocation5 [shape = 'u8[8192]{0}', space=vmem, size = 0x2000, scoped, tag = 'output window, operand 0']
    %9 = vsyncpa [#allocation4], 0
    %10 = vsyncpa [#allocation3], 0
    %s11 = scalar_lea.sflag [#allocation3], 1
    %12 = vsyncpa %s11, 0
    loop: start=0, step=1, limit=4
    $region2: #{tpu_custom_call.1} parent=1 // loop_pre_header
      _
    $region3: #{tpu_custom_call.1} parent=1 // loop_header
      %s14 = sphi 0, %s18
      %p15 = scmp.ge.s32.totalorder %s14, 4
      %s21 = sphi 0, %s33
      %s22 = sphi 0, %s29
      %s23 = sphi 0, %s21
      %s24 = sphi 0, %s22
      %s25 = sphi 0, %s23
      %s26 = sphi 0, %s24
      %s34 = sphi 0, %s34
      %s36 = sphi 0, %s34
      %s37 = sphi 0, %s36
      %s51 = sphi 0, %s37
      %s57 = sphi 0, %s59
      %s60 = sphi 0, %s57
      %s61 = sphi 0, %s60
      %s77 = sphi 0, %s61
      %s81 = sphi 0, %s81
      %s83 = sphi 0, %s81
      %s84 = sphi 0, %s83
      %s98 = sphi 0, %s84
      %s104 = sphi 0, %s106
      %s107 = sphi 0, %s104
      %s108 = sphi 0, %s107
      %s124 = sphi 0, %s108
      %s132 = sphi 0, %s134
      %s135 = sphi 0, %s132
      %s136 = sphi 0, %s135
      %s152 = sphi 0, %s136
    $region4: #{tpu_custom_call.1} parent=1 // loop_header_branch
      %17 = sbr.rel (%p15) target = $region8
    $region5: #{tpu_custom_call.1} parent=1 // loop_body
      %s19 = ssub.s32 %s14, 1
      %s20 = ssub.s32 %s14, 2
      %s27 = sadd.s32 1, %s22
      %p28 = scmp.ge.s32.totalorder %s27, 1
      %s29 = scalar_select %p28, 0, %s27
      %s30 = sadd.s32 1, %s21
      %s31 = scalar_select %p28, %s30, %s21
      %p32 = scmp.ge.s32.totalorder %s31, 2
      %s33 = scalar_select %p32, 0, %s31
      %s35 = sadd.s32 %s34, 1
      %p38 = scmp.eq.s32.totalorder %s14, 1
      %p39 = scmp.ne.s32.totalorder %s34, %s36
      %p40 = scmp.eq.s32.totalorder %s14, 0
      %p41 = por %p39, %p40
      %p42 = scmp.ne.s32.totalorder %s34, %s36
      %p43 = scmp.eq.s32.totalorder %s19, 1
      %p44 = por %p42, %p43
      %p45 = scmp.ne.s32.totalorder %s36, %s37
      %p46 = scmp.eq.s32.totalorder %s19, 0
      %p47 = por %p45, %p46
      %p48 = scmp.ne.s32.totalorder %s36, %s37
      %p49 = scmp.eq.s32.totalorder %s20, 1
      %p50 = por %p48, %p49
      %p52 = scmp.ne.s32.totalorder %s37, %s51
      %p53 = scmp.eq.s32.totalorder %s20, 0
      %p54 = por %p52, %p53
      %s55 = ssub.s32 %s22, %s29
      %p56 = scmp.eq.s32.totalorder %s55, 0
      %s58 = sadd.s32 %s57, 1
      %s59 = scalar_select %p56, %s57, %s58
      %p62 = pneg %p56
      %p63 = scmp.eq.s32.totalorder %s14, 1
      %p64 = por %p62, %p63
      %p65 = scmp.ne.s32.totalorder %s57, %s60
      %p66 = scmp.eq.s32.totalorder %s14, 0
      %p67 = por %p65, %p66
      %p68 = scmp.ne.s32.totalorder %s57, %s60
      %p69 = scmp.eq.s32.totalorder %s19, 1
      %p70 = por %p68, %p69
      %p71 = scmp.ne.s32.totalorder %s60, %s61
      %p72 = scmp.eq.s32.totalorder %s19, 0
      %p73 = por %p71, %p72
      %p74 = scmp.ne.s32.totalorder %s60, %s61
      %p75 = scmp.eq.s32.totalorder %s20, 1
      %p76 = por %p74, %p75
      %p78 = scmp.ne.s32.totalorder %s61, %s77
      %p79 = scmp.eq.s32.totalorder %s20, 0
      %p80 = por %p78, %p79
      %s82 = sadd.s32 %s81, 1
      %p85 = scmp.eq.s32.totalorder %s14, 1
      %p86 = scmp.ne.s32.totalorder %s81, %s83
      %p87 = scmp.eq.s32.totalorder %s14, 0
      %p88 = por %p86, %p87
      %p89 = scmp.ne.s32.totalorder %s81, %s83
      %p90 = scmp.eq.s32.totalorder %s19, 1
      %p91 = por %p89, %p90
      %p92 = scmp.ne.s32.totalorder %s83, %s84
      %p93 = scmp.eq.s32.totalorder %s19, 0
      %p94 = por %p92, %p93
      %p95 = scmp.ne.s32.totalorder %s83, %s84
      %p96 = scmp.eq.s32.totalorder %s20, 1
      %p97 = por %p95, %p96
      %p99 = scmp.ne.s32.totalorder %s84, %s98
      %p100 = scmp.eq.s32.totalorder %s20, 0
      %p101 = por %p99, %p100
      %s102 = ssub.s32 %s21, %s33
      %p103 = scmp.eq.s32.totalorder %s102, 0
      %s105 = sadd.s32 %s104, 1
      %s106 = scalar_select %p103, %s104, %s105
      %p109 = pneg %p103
      %p110 = scmp.eq.s32.totalorder %s14, 1
      %p111 = por %p109, %p110
      %p112 = scmp.ne.s32.totalorder %s104, %s107
      %p113 = scmp.eq.s32.totalorder %s14, 0
      %p114 = por %p112, %p113
      %p115 = scmp.ne.s32.totalorder %s104, %s107
      %p116 = scmp.eq.s32.totalorder %s19, 1
      %p117 = por %p115, %p116
      %p118 = scmp.ne.s32.totalorder %s107, %s108
      %p119 = scmp.eq.s32.totalorder %s19, 0
      %p120 = por %p118, %p119
      %p121 = scmp.ne.s32.totalorder %s107, %s108
      %p122 = scmp.eq.s32.totalorder %s20, 1
      %p123 = por %p121, %p122
      %p125 = scmp.ne.s32.totalorder %s108, %s124
      %p126 = scmp.eq.s32.totalorder %s20, 0
      %p127 = por %p125, %p126
      %s128 = ssub.s32 %s21, %s33
      %s129 = ssub.s32 %s22, %s29
      %s130 = sor.u32 %s128, %s129
      %p131 = scmp.eq.s32.totalorder %s130, 0
      %s133 = sadd.s32 %s132, 1
      %s134 = scalar_select %p131, %s132, %s133
      %p137 = pneg %p131
      %p138 = scmp.eq.s32.totalorder %s14, 1
      %p139 = por %p137, %p138
      %p140 = scmp.ne.s32.totalorder %s132, %s135
      %p141 = scmp.eq.s32.totalorder %s14, 0
      %p142 = por %p140, %p141
      %p143 = scmp.ne.s32.totalorder %s132, %s135
      %p144 = scmp.eq.s32.totalorder %s19, 1
      %p145 = por %p143, %p144
      %p146 = scmp.ne.s32.totalorder %s135, %s136
      %p147 = scmp.eq.s32.totalorder %s19, 0
      %p148 = por %p146, %p147
      %p149 = scmp.ne.s32.totalorder %s135, %s136
      %p150 = scmp.eq.s32.totalorder %s20, 1
      %p151 = por %p149, %p150
      %p153 = scmp.ne.s32.totalorder %s136, %s152
      %p154 = scmp.eq.s32.totalorder %s20, 0
      %p155 = por %p153, %p154
      %p156 = scmp.le.s32.totalorder 1, %s14
      %p157 = scmp.lt.s32.totalorder %s14, 3
      %p158 = pnand %p156, %p157
      %p159 = pneg %p158
      // Predicated region
      $region9: #{tpu_custom_call.1} parent=5 // pred_check
        _
      $region10: #{tpu_custom_call.1} parent=5 // pred_check_branch
        %161 = sbr.rel (%p158) target = $region12
      $region11: #{tpu_custom_call.1} parent=5 // pred_region
        %s162 = ssub.s32 %s14, 1
        // Predicated region
        $region13: #{tpu_custom_call.1} parent=11 // pred_check
          %p163 = pneg %p47
        $region14: #{tpu_custom_call.1} parent=11 // pred_check_branch
          %165 = sbr.rel (%p163) target = $region16
        $region15: #{tpu_custom_call.1} parent=11 // pred_region
          %167 = vsyncadd [#allocation4], 0
          %s169 = sshll.u32 %s0, 4
          %s170 = int_to_ptr.vmem [resolvable:$true] %s169
          %172 = dma.vmem_to_smem %s170, 16, [#allocation2], [#allocation4]
        $region16: #{tpu_custom_call.1} parent=11 // pred_fallthru
          _
        // Predicated region
        $region17: #{tpu_custom_call.1} parent=11 // pred_check
          %p173 = pneg %p73
        $region18: #{tpu_custom_call.1} parent=11 // pred_check_branch
          %175 = sbr.rel (%p173) target = $region20
        $region19: #{tpu_custom_call.1} parent=11 // pred_region
          %s176 = smul.u32 32, %s24
          %p177 = scmp.lt.s32.totalorder %s176, 31
          %s178 = scalar_select %p177, %s176, 31
          %s179 = smul.addr %s178, 8
          %s180 = scalar_lea.vmem %s1, %s179
          %s181 = smul.u32 32, %s24
        $region20: #{tpu_custom_call.1} parent=11 // pred_fallthru
          _
        // Predicated region
        $region21: #{tpu_custom_call.1} parent=11 // pred_check
          %p182 = pneg %p94
        $region22: #{tpu_custom_call.1} parent=11 // pred_check_branch
          %184 = sbr.rel (%p182) target = $region24
        $region23: #{tpu_custom_call.1} parent=11 // pred_region
          _
        $region24: #{tpu_custom_call.1} parent=11 // pred_fallthru
          _
      $region12: #{tpu_custom_call.1} parent=5 // pred_fallthru
        _
      %p185 = scmp.lt.s32.totalorder %s14, 2
      // Predicated region
      $region25: #{tpu_custom_call.1} parent=5 // pred_check
        %p186 = pneg %p185
      $region26: #{tpu_custom_call.1} parent=5 // pred_check_branch
        %188 = sbr.rel (%p186) target = $region28
      $region27: #{tpu_custom_call.1} parent=5 // pred_region
        // Predicated region
        $region29: #{tpu_custom_call.1} parent=27 // pred_check
          %p189 = pneg %p114
        $region30: #{tpu_custom_call.1} parent=27 // pred_check_branch
          %191 = sbr.rel (%p189) target = $region32
        $region31: #{tpu_custom_call.1} parent=27 // pred_region
          %p192 = scmp.lt.s32.totalorder %s21, 1
          %s193 = scalar_select %p192, %s21, 1
          %s194 = smul.addr %s193, 2
          %s195 = smul.addr %s194, 4
          %s196 = scalar_lea.vmem %s3, %s195
        $region32: #{tpu_custom_call.1} parent=27 // pred_fallthru
          _
      $region28: #{tpu_custom_call.1} parent=5 // pred_fallthru
        _
      %p197 = scmp.le.s32.totalorder 1, %s14
      %p198 = scmp.lt.s32.totalorder %s14, 3
      %p199 = pnand %p197, %p198
      %p200 = pneg %p199
      // Predicated region
      $region33: #{tpu_custom_call.1} parent=5 // pred_check
        _
      $region34: #{tpu_custom_call.1} parent=5 // pred_check_branch
        %202 = sbr.rel (%p199) target = $region36
      $region35: #{tpu_custom_call.1} parent=5 // pred_region
        %s203 = ssub.s32 %s14, 1
        // Predicated region
        $region37: #{tpu_custom_call.1} parent=35 // pred_check
          %p204 = pneg %p47
        $region38: #{tpu_custom_call.1} parent=35 // pred_check_branch
          %206 = sbr.rel (%p204) target = $region40
        $region39: #{tpu_custom_call.1} parent=35 // pred_region
          %208 = dma.done [#allocation4], 16
        $region40: #{tpu_custom_call.1} parent=35 // pred_fallthru
          _
        %209 = sfence
        %p210 = pneg %p47
        %p211 = pneg %p44
        %s212 = smul.u32 32, %s24
        %p213 = scmp.lt.s32.totalorder %s212, 31
        %s214 = scalar_select %p213, %s212, 31
        %s215 = smul.addr %s214, 8
        %s216 = scalar_lea.vmem %s1, %s215
        %p217 = pneg %p73
        %p218 = pneg %p70
        %p219 = pneg %p94
        %p220 = pneg %p91
        %p221 = scmp.lt.s32.totalorder %s23, 1
        %s222 = scalar_select %p221, %s23, 1
        %s223 = smul.addr %s222, 2
        %s224 = smul.addr %s223, 4
        %s225 = scalar_lea.vmem %s3, %s224
        %p226 = pneg %p120
        %p227 = pneg %p117
        %p228 = pneg %p148
        %p229 = pneg %p145
        %s230 = sand.u32 %s135, 1
        %s231 = scalar_lea.sflag [#allocation3], %s230
        %s232 = sand.u32 %s135, 1
        %s233 = smul.addr %s232, 8
        %s234 = scalar_lea.vmem [#allocation5], %s233
        %s235 = smul.u32 32, %s24
        %p236 = scmp.lt.s32.totalorder %s235, 31
        %s237 = scalar_select %p236, %s235, 31
        %s238 = smul.addr %s237, 8
        %s239 = scalar_lea.vmem %s1, %s238
        %s240 = smul.u32 32, %s24
        %p241 = scmp.lt.s32.totalorder %s23, 1
        %s242 = scalar_select %p241, %s23, 1
        %s243 = smul.addr %s242, 2
        %s244 = smul.addr %s243, 4
        %s245 = scalar_lea.vmem %s3, %s244
        %s246 = smul.u32 2, %s24
        %v247 = vld [vmem:[%s2] ss:$2 sm:$0x3]
        %s248 = scalar_lea.vmem %s2, 1
        %v249 = vld [vmem:[%s248] ss:$2 sm:$0x3]
        %v250 = vld [vmem:[%s239] sm:$0xff]
        %v251 = vld [vmem:[%s239 + $0x8] sm:$0xff]
        %v252 = vld [vmem:[%s239 + $0x10] sm:$0xff]
        %v253 = vld [vmem:[%s239 + $0x18] sm:$0xff]
        %v254 = vld [vmem:[%s239 + $0x20] sm:$0xff]
        %v255 = vld [vmem:[%s239 + $0x28] sm:$0xff]
        %v256 = vld [vmem:[%s239 + $0x30] sm:$0xff]
        %v257 = vld [vmem:[%s239 + $0x38] sm:$0xff]
        %v258 = vld [vmem:[%s239 + $0x40] sm:$0xff]
        %v259 = vld [vmem:[%s239 + $0x48] sm:$0xff]
        %v260 = vld [vmem:[%s239 + $0x50] sm:$0xff]
        %v261 = vld [vmem:[%s239 + $0x58] sm:$0xff]
        %v262 = vld [vmem:[%s239 + $0x60] sm:$0xff]
        %v263 = vld [vmem:[%s239 + $0x68] sm:$0xff]
        %v264 = vld [vmem:[%s239 + $0x70] sm:$0xff]
        %v265 = vld [vmem:[%s239 + $0x78] sm:$0xff]
        %v266 = vld [vmem:[%s239 + $0x80] sm:$0xff]
        %v267 = vld [vmem:[%s239 + $0x88] sm:$0xff]
        %v268 = vld [vmem:[%s239 + $0x90] sm:$0xff]
        %v269 = vld [vmem:[%s239 + $0x98] sm:$0xff]
        %v270 = vld [vmem:[%s239 + $0xa0] sm:$0xff]
        %v271 = vld [vmem:[%s239 + $0xa8] sm:$0xff]
        %v272 = vld [vmem:[%s239 + $0xb0] sm:$0xff]
        %v273 = vld [vmem:[%s239 + $0xb8] sm:$0xff]
        %v274 = vld [vmem:[%s239 + $0xc0] sm:$0xff]
        %v275 = vld [vmem:[%s239 + $0xc8] sm:$0xff]
        %v276 = vld [vmem:[%s239 + $0xd0] sm:$0xff]
        %v277 = vld [vmem:[%s239 + $0xd8] sm:$0xff]
        %v278 = vld [vmem:[%s239 + $0xe0] sm:$0xff]
        %v279 = vld [vmem:[%s239 + $0xe8] sm:$0xff]
        %v280 = vld [vmem:[%s239 + $0xf0] sm:$0xff]
        %v281 = vld [vmem:[%s239 + $0xf8] sm:$0xff]
        %s282 = smul.u32 %s23, 6
        %s283 = sld [smem:[#allocation2 + %s282]]
        %s284 = sadd.s32 %s282, 1
        %s285 = sld [smem:[#allocation2 + %s284]]
        %s286 = sadd.s32 %s282, 2
        %s287 = sld [smem:[#allocation2 + %s286]]
        %s288 = sadd.s32 %s282, 3
        %s289 = sld [smem:[#allocation2 + %s288]]
        %s290 = sadd.s32 %s282, 4
        %s291 = sld [smem:[#allocation2 + %s290]]
        %s292 = sadd.s32 %s282, 5
        %s293 = sld [smem:[#allocation2 + %s292]]
        %v294 = vstv %s283
        %v295 = vmul.f32 %v294, %v250
        %v296 = vmul.f32 %v294, %v251
        %v297 = vmul.f32 %v294, %v252
        %v298 = vmul.f32 %v294, %v253
        %v299 = vmul.f32 %v294, %v254
        %v300 = vmul.f32 %v294, %v255
        %v301 = vmul.f32 %v294, %v256
        %v302 = vmul.f32 %v294, %v257
        %v303 = vmul.f32 %v294, %v258
        %v304 = vmul.f32 %v294, %v259
        %v305 = vmul.f32 %v294, %v260
        %v306 = vmul.f32 %v294, %v261
        %v307 = vmul.f32 %v294, %v262
        %v308 = vmul.f32 %v294, %v263
        %v309 = vmul.f32 %v294, %v264
        %v310 = vmul.f32 %v294, %v265
        %v311 = vmul.f32 %v294, %v266
        %v312 = vmul.f32 %v294, %v267
        %v313 = vmul.f32 %v294, %v268
        %v314 = vmul.f32 %v294, %v269
        %v315 = vmul.f32 %v294, %v270
        %v316 = vmul.f32 %v294, %v271
        %v317 = vmul.f32 %v294, %v272
        %v318 = vmul.f32 %v294, %v273
        %v319 = vmul.f32 %v294, %v274
        %v320 = vmul.f32 %v294, %v275
        %v321 = vmul.f32 %v294, %v276
        %v322 = vmul.f32 %v294, %v277
        %v323 = vmul.f32 %v294, %v278
        %v324 = vmul.f32 %v294, %v279
        %v325 = vmul.f32 %v294, %v280
        %v326 = vmul.f32 %v294, %v281
        %v327 = vstv %s285
        %v328 = vmul.f32 %v327, %v250
        %v329 = vmul.f32 %v327, %v251
        %v330 = vmul.f32 %v327, %v252
        %v331 = vmul.f32 %v327, %v253
        %v332 = vmul.f32 %v327, %v254
        %v333 = vmul.f32 %v327, %v255
        %v334 = vmul.f32 %v327, %v256
        %v335 = vmul.f32 %v327, %v257
        %v336 = vmul.f32 %v327, %v258
        %v337 = vmul.f32 %v327, %v259
        %v338 = vmul.f32 %v327, %v260
        %v339 = vmul.f32 %v327, %v261
        %v340 = vmul.f32 %v327, %v262
        %v341 = vmul.f32 %v327, %v263
        %v342 = vmul.f32 %v327, %v264
        %v343 = vmul.f32 %v327, %v265
        %v344 = vmul.f32 %v327, %v266
        %v345 = vmul.f32 %v327, %v267
        %v346 = vmul.f32 %v327, %v268
        %v347 = vmul.f32 %v327, %v269
        %v348 = vmul.f32 %v327, %v270
        %v349 = vmul.f32 %v327, %v271
        %v350 = vmul.f32 %v327, %v272
        %v351 = vmul.f32 %v327, %v273
        %v352 = vmul.f32 %v327, %v274
        %v353 = vmul.f32 %v327, %v275
        %v354 = vmul.f32 %v327, %v276
        %v355 = vmul.f32 %v327, %v277
        %v356 = vmul.f32 %v327, %v278
        %v357 = vmul.f32 %v327, %v279
        %v358 = vmul.f32 %v327, %v280
        %v359 = vmul.f32 %v327, %v281
        %392 = vrot.lane.b32.xlu0 %v328, 127
        %v393 = vpop.permute.xlu0 %392
        %394 = vrot.lane.b32.xlu0 %v329, 127
        %v395 = vpop.permute.xlu0 %394
        %396 = vrot.lane.b32.xlu0 %v330, 127
        %v397 = vpop.permute.xlu0 %396
        %398 = vrot.lane.b32.xlu0 %v331, 127
        %v399 = vpop.permute.xlu0 %398
        %400 = vrot.lane.b32.xlu0 %v332, 127
        %v401 = vpop.permute.xlu0 %400
        %402 = vrot.lane.b32.xlu0 %v333, 127
        %v403 = vpop.permute.xlu0 %402
        %404 = vrot.lane.b32.xlu0 %v334, 127
        %v405 = vpop.permute.xlu0 %404
        %406 = vrot.lane.b32.xlu0 %v335, 127
        %v407 = vpop.permute.xlu0 %406
        %408 = vrot.lane.b32.xlu0 %v336, 127
        %v409 = vpop.permute.xlu0 %408
        %410 = vrot.lane.b32.xlu0 %v337, 127
        %v411 = vpop.permute.xlu0 %410
        %412 = vrot.lane.b32.xlu0 %v338, 127
        %v413 = vpop.permute.xlu0 %412
        %414 = vrot.lane.b32.xlu0 %v339, 127
        %v415 = vpop.permute.xlu0 %414
        %416 = vrot.lane.b32.xlu0 %v340, 127
        %v417 = vpop.permute.xlu0 %416
        %418 = vrot.lane.b32.xlu0 %v341, 127
        %v419 = vpop.permute.xlu0 %418
        %420 = vrot.lane.b32.xlu0 %v342, 127
        %v421 = vpop.permute.xlu0 %420
        %422 = vrot.lane.b32.xlu0 %v343, 127
        %v423 = vpop.permute.xlu0 %422
        %424 = vrot.lane.b32.xlu0 %v344, 127
        %v425 = vpop.permute.xlu0 %424
        %426 = vrot.lane.b32.xlu0 %v345, 127
        %v427 = vpop.permute.xlu0 %426
        %428 = vrot.lane.b32.xlu0 %v346, 127
        %v429 = vpop.permute.xlu0 %428
        %430 = vrot.lane.b32.xlu0 %v347, 127
        %v431 = vpop.permute.xlu0 %430
        %432 = vrot.lane.b32.xlu0 %v348, 127
        %v433 = vpop.permute.xlu0 %432
        %434 = vrot.lane.b32.xlu0 %v349, 127
        %v435 = vpop.permute.xlu0 %434
        %436 = vrot.lane.b32.xlu0 %v350, 127
        %v437 = vpop.permute.xlu0 %436
        %438 = vrot.lane.b32.xlu0 %v351, 127
        %v439 = vpop.permute.xlu0 %438
        %440 = vrot.lane.b32.xlu0 %v352, 127
        %v441 = vpop.permute.xlu0 %440
        %442 = vrot.lane.b32.xlu0 %v353, 127
        %v443 = vpop.permute.xlu0 %442
        %444 = vrot.lane.b32.xlu0 %v354, 127
        %v445 = vpop.permute.xlu0 %444
        %446 = vrot.lane.b32.xlu0 %v355, 127
        %v447 = vpop.permute.xlu0 %446
        %448 = vrot.lane.b32.xlu0 %v356, 127
        %v449 = vpop.permute.xlu0 %448
        %450 = vrot.lane.b32.xlu0 %v357, 127
        %v451 = vpop.permute.xlu0 %450
        %452 = vrot.lane.b32.xlu0 %v358, 127
        %v453 = vpop.permute.xlu0 %452
        %454 = vrot.lane.b32.xlu0 %v359, 127
        %v455 = vpop.permute.xlu0 %454
        %v488 = vadd.f32 %v295, %v393
        %v489 = vadd.f32 %v296, %v395
        %v490 = vadd.f32 %v297, %v397
        %v491 = vadd.f32 %v298, %v399
        %v492 = vadd.f32 %v299, %v401
        %v493 = vadd.f32 %v300, %v403
        %v494 = vadd.f32 %v301, %v405
        %v495 = vadd.f32 %v302, %v407
        %v496 = vadd.f32 %v303, %v409
        %v497 = vadd.f32 %v304, %v411
        %v498 = vadd.f32 %v305, %v413
        %v499 = vadd.f32 %v306, %v415
        %v500 = vadd.f32 %v307, %v417
        %v501 = vadd.f32 %v308, %v419
        %v502 = vadd.f32 %v309, %v421
        %v503 = vadd.f32 %v310, %v423
        %v504 = vadd.f32 %v311, %v425
        %v505 = vadd.f32 %v312, %v427
        %v506 = vadd.f32 %v313, %v429
        %v507 = vadd.f32 %v314, %v431
        %v508 = vadd.f32 %v315, %v433
        %v509 = vadd.f32 %v316, %v435
        %v510 = vadd.f32 %v317, %v437
        %v511 = vadd.f32 %v318, %v439
        %v512 = vadd.f32 %v319, %v441
        %v513 = vadd.f32 %v320, %v443
        %v514 = vadd.f32 %v321, %v445
        %v515 = vadd.f32 %v322, %v447
        %v516 = vadd.f32 %v323, %v449
        %v517 = vadd.f32 %v324, %v451
        %v518 = vadd.f32 %v325, %v453
        %v519 = vadd.f32 %v326, %v455
        %v520 = vstv %s287
        %v521 = vadd.f32 %v488, %v520
        %v522 = vadd.f32 %v489, %v520
        %v523 = vadd.f32 %v490, %v520
        %v524 = vadd.f32 %v491, %v520
        %v525 = vadd.f32 %v492, %v520
        %v526 = vadd.f32 %v493, %v520
        %v527 = vadd.f32 %v494, %v520
        %v528 = vadd.f32 %v495, %v520
        %v529 = vadd.f32 %v496, %v520
        %v530 = vadd.f32 %v497, %v520
        %v531 = vadd.f32 %v498, %v520
        %v532 = vadd.f32 %v499, %v520
        %v533 = vadd.f32 %v500, %v520
        %v534 = vadd.f32 %v501, %v520
        %v535 = vadd.f32 %v502, %v520
        %v536 = vadd.f32 %v503, %v520
        %v537 = vadd.f32 %v504, %v520
        %v538 = vadd.f32 %v505, %v520
        %v539 = vadd.f32 %v506, %v520
        %v540 = vadd.f32 %v507, %v520
        %v541 = vadd.f32 %v508, %v520
        %v542 = vadd.f32 %v509, %v520
        %v543 = vadd.f32 %v510, %v520
        %v544 = vadd.f32 %v511, %v520
        %v545 = vadd.f32 %v512, %v520
        %v546 = vadd.f32 %v513, %v520
        %v547 = vadd.f32 %v514, %v520
        %v548 = vadd.f32 %v515, %v520
        %v549 = vadd.f32 %v516, %v520
        %v550 = vadd.f32 %v517, %v520
        %v551 = vadd.f32 %v518, %v520
        %v552 = vadd.f32 %v519, %v520
        %v553 = vstv %s289
        %v554 = vmul.f32 %v553, %v250
        %v555 = vmul.f32 %v553, %v251
        %v556 = vmul.f32 %v553, %v252
        %v557 = vmul.f32 %v553, %v253
        %v558 = vmul.f32 %v553, %v254
        %v559 = vmul.f32 %v553, %v255
        %v560 = vmul.f32 %v553, %v256
        %v561 = vmul.f32 %v553, %v257
        %v562 = vmul.f32 %v553, %v258
        %v563 = vmul.f32 %v553, %v259
        %v564 = vmul.f32 %v553, %v260
        %v565 = vmul.f32 %v553, %v261
        %v566 = vmul.f32 %v553, %v262
        %v567 = vmul.f32 %v553, %v263
        %v568 = vmul.f32 %v553, %v264
        %v569 = vmul.f32 %v553, %v265
        %v570 = vmul.f32 %v553, %v266
        %v571 = vmul.f32 %v553, %v267
        %v572 = vmul.f32 %v553, %v268
        %v573 = vmul.f32 %v553, %v269
        %v574 = vmul.f32 %v553, %v270
        %v575 = vmul.f32 %v553, %v271
        %v576 = vmul.f32 %v553, %v272
        %v577 = vmul.f32 %v553, %v273
        %v578 = vmul.f32 %v553, %v274
        %v579 = vmul.f32 %v553, %v275
        %v580 = vmul.f32 %v553, %v276
        %v581 = vmul.f32 %v553, %v277
        %v582 = vmul.f32 %v553, %v278
        %v583 = vmul.f32 %v553, %v279
        %v584 = vmul.f32 %v553, %v280
        %v585 = vmul.f32 %v553, %v281
        %v586 = vstv %s291
        %v587 = vmul.f32 %v586, %v250
        %v588 = vmul.f32 %v586, %v251
        %v589 = vmul.f32 %v586, %v252
        %v590 = vmul.f32 %v586, %v253
        %v591 = vmul.f32 %v586, %v254
        %v592 = vmul.f32 %v586, %v255
        %v593 = vmul.f32 %v586, %v256
        %v594 = vmul.f32 %v586, %v257
        %v595 = vmul.f32 %v586, %v258
        %v596 = vmul.f32 %v586, %v259
        %v597 = vmul.f32 %v586, %v260
        %v598 = vmul.f32 %v586, %v261
        %v599 = vmul.f32 %v586, %v262
        %v600 = vmul.f32 %v586, %v263
        %v601 = vmul.f32 %v586, %v264
        %v602 = vmul.f32 %v586, %v265
        %v603 = vmul.f32 %v586, %v266
        %v604 = vmul.f32 %v586, %v267
        %v605 = vmul.f32 %v586, %v268
        %v606 = vmul.f32 %v586, %v269
        %v607 = vmul.f32 %v586, %v270
        %v608 = vmul.f32 %v586, %v271
        %v609 = vmul.f32 %v586, %v272
        %v610 = vmul.f32 %v586, %v273
        %v611 = vmul.f32 %v586, %v274
        %v612 = vmul.f32 %v586, %v275
        %v613 = vmul.f32 %v586, %v276
        %v614 = vmul.f32 %v586, %v277
        %v615 = vmul.f32 %v586, %v278
        %v616 = vmul.f32 %v586, %v279
        %v617 = vmul.f32 %v586, %v280
        %v618 = vmul.f32 %v586, %v281
        %651 = vrot.lane.b32.xlu0 %v587, 127
        %v652 = vpop.permute.xlu0 %651
        %653 = vrot.lane.b32.xlu0 %v588, 127
        %v654 = vpop.permute.xlu0 %653
        %655 = vrot.lane.b32.xlu0 %v589, 127
        %v656 = vpop.permute.xlu0 %655
        %657 = vrot.lane.b32.xlu0 %v590, 127
        %v658 = vpop.permute.xlu0 %657
        %659 = vrot.lane.b32.xlu0 %v591, 127
        %v660 = vpop.permute.xlu0 %659
        %661 = vrot.lane.b32.xlu0 %v592, 127
        %v662 = vpop.permute.xlu0 %661
        %663 = vrot.lane.b32.xlu0 %v593, 127
        %v664 = vpop.permute.xlu0 %663
        %665 = vrot.lane.b32.xlu0 %v594, 127
        %v666 = vpop.permute.xlu0 %665
        %667 = vrot.lane.b32.xlu0 %v595, 127
        %v668 = vpop.permute.xlu0 %667
        %669 = vrot.lane.b32.xlu0 %v596, 127
        %v670 = vpop.permute.xlu0 %669
        %671 = vrot.lane.b32.xlu0 %v597, 127
        %v672 = vpop.permute.xlu0 %671
        %673 = vrot.lane.b32.xlu0 %v598, 127
        %v674 = vpop.permute.xlu0 %673
        %675 = vrot.lane.b32.xlu0 %v599, 127
        %v676 = vpop.permute.xlu0 %675
        %677 = vrot.lane.b32.xlu0 %v600, 127
        %v678 = vpop.permute.xlu0 %677
        %679 = vrot.lane.b32.xlu0 %v601, 127
        %v680 = vpop.permute.xlu0 %679
        %681 = vrot.lane.b32.xlu0 %v602, 127
        %v682 = vpop.permute.xlu0 %681
        %683 = vrot.lane.b32.xlu0 %v603, 127
        %v684 = vpop.permute.xlu0 %683
        %685 = vrot.lane.b32.xlu0 %v604, 127
        %v686 = vpop.permute.xlu0 %685
        %687 = vrot.lane.b32.xlu0 %v605, 127
        %v688 = vpop.permute.xlu0 %687
        %689 = vrot.lane.b32.xlu0 %v606, 127
        %v690 = vpop.permute.xlu0 %689
        %691 = vrot.lane.b32.xlu0 %v607, 127
        %v692 = vpop.permute.xlu0 %691
        %693 = vrot.lane.b32.xlu0 %v608, 127
        %v694 = vpop.permute.xlu0 %693
        %695 = vrot.lane.b32.xlu0 %v609, 127
        %v696 = vpop.permute.xlu0 %695
        %697 = vrot.lane.b32.xlu0 %v610, 127
        %v698 = vpop.permute.xlu0 %697
        %699 = vrot.lane.b32.xlu0 %v611, 127
        %v700 = vpop.permute.xlu0 %699
        %701 = vrot.lane.b32.xlu0 %v612, 127
        %v702 = vpop.permute.xlu0 %701
        %703 = vrot.lane.b32.xlu0 %v613, 127
        %v704 = vpop.permute.xlu0 %703
        %705 = vrot.lane.b32.xlu0 %v614, 127
        %v706 = vpop.permute.xlu0 %705
        %707 = vrot.lane.b32.xlu0 %v615, 127
        %v708 = vpop.permute.xlu0 %707
        %709 = vrot.lane.b32.xlu0 %v616, 127
        %v710 = vpop.permute.xlu0 %709
        %711 = vrot.lane.b32.xlu0 %v617, 127
        %v712 = vpop.permute.xlu0 %711
        %713 = vrot.lane.b32.xlu0 %v618, 127
        %v714 = vpop.permute.xlu0 %713
        %v747 = vadd.f32 %v554, %v652
        %v748 = vadd.f32 %v555, %v654
        %v749 = vadd.f32 %v556, %v656
        %v750 = vadd.f32 %v557, %v658
        %v751 = vadd.f32 %v558, %v660
        %v752 = vadd.f32 %v559, %v662
        %v753 = vadd.f32 %v560, %v664
        %v754 = vadd.f32 %v561, %v666
        %v755 = vadd.f32 %v562, %v668
        %v756 = vadd.f32 %v563, %v670
        %v757 = vadd.f32 %v564, %v672
        %v758 = vadd.f32 %v565, %v674
        %v759 = vadd.f32 %v566, %v676
        %v760 = vadd.f32 %v567, %v678
        %v761 = vadd.f32 %v568, %v680
        %v762 = vadd.f32 %v569, %v682
        %v763 = vadd.f32 %v570, %v684
        %v764 = vadd.f32 %v571, %v686
        %v765 = vadd.f32 %v572, %v688
        %v766 = vadd.f32 %v573, %v690
        %v767 = vadd.f32 %v574, %v692
        %v768 = vadd.f32 %v575, %v694
        %v769 = vadd.f32 %v576, %v696
        %v770 = vadd.f32 %v577, %v698
        %v771 = vadd.f32 %v578, %v700
        %v772 = vadd.f32 %v579, %v702
        %v773 = vadd.f32 %v580, %v704
        %v774 = vadd.f32 %v581, %v706
        %v775 = vadd.f32 %v582, %v708
        %v776 = vadd.f32 %v583, %v710
        %v777 = vadd.f32 %v584, %v712
        %v778 = vadd.f32 %v585, %v714
        %v779 = vstv %s293
        %v780 = vadd.f32 %v747, %v779
        %v781 = vadd.f32 %v748, %v779
        %v782 = vadd.f32 %v749, %v779
        %v783 = vadd.f32 %v750, %v779
        %v784 = vadd.f32 %v751, %v779
        %v785 = vadd.f32 %v752, %v779
        %v786 = vadd.f32 %v753, %v779
        %v787 = vadd.f32 %v754, %v779
        %v788 = vadd.f32 %v755, %v779
        %v789 = vadd.f32 %v756, %v779
        %v790 = vadd.f32 %v757, %v779
        %v791 = vadd.f32 %v758, %v779
        %v792 = vadd.f32 %v759, %v779
        %v793 = vadd.f32 %v760, %v779
        %v794 = vadd.f32 %v761, %v779
        %v795 = vadd.f32 %v762, %v779
        %v796 = vadd.f32 %v763, %v779
        %v797 = vadd.f32 %v764, %v779
        %v798 = vadd.f32 %v765, %v779
        %v799 = vadd.f32 %v766, %v779
        %v800 = vadd.f32 %v767, %v779
        %v801 = vadd.f32 %v768, %v779
        %v802 = vadd.f32 %v769, %v779
        %v803 = vadd.f32 %v770, %v779
        %v804 = vadd.f32 %v771, %v779
        %v805 = vadd.f32 %v772, %v779
        %v806 = vadd.f32 %v773, %v779
        %v807 = vadd.f32 %v774, %v779
        %v808 = vadd.f32 %v775, %v779
        %v809 = vadd.f32 %v776, %v779
        %v810 = vadd.f32 %v777, %v779
        %v811 = vadd.f32 %v778, %v779
        %v812 = vadd.f32 %v521, 1.0
        %v813 = vadd.f32 %v522, 1.0
        %v814 = vadd.f32 %v523, 1.0
        %v815 = vadd.f32 %v524, 1.0
        %v816 = vadd.f32 %v525, 1.0
        %v817 = vadd.f32 %v526, 1.0
        %v818 = vadd.f32 %v527, 1.0
        %v819 = vadd.f32 %v528, 1.0
        %v820 = vadd.f32 %v529, 1.0
        %v821 = vadd.f32 %v530, 1.0
        %v822 = vadd.f32 %v531, 1.0
        %v823 = vadd.f32 %v532, 1.0
        %v824 = vadd.f32 %v533, 1.0
        %v825 = vadd.f32 %v534, 1.0
        %v826 = vadd.f32 %v535, 1.0
        %v827 = vadd.f32 %v536, 1.0
        %v828 = vadd.f32 %v537, 1.0
        %v829 = vadd.f32 %v538, 1.0
        %v830 = vadd.f32 %v539, 1.0
        %v831 = vadd.f32 %v540, 1.0
        %v832 = vadd.f32 %v541, 1.0
        %v833 = vadd.f32 %v542, 1.0
        %v834 = vadd.f32 %v543, 1.0
        %v835 = vadd.f32 %v544, 1.0
        %v836 = vadd.f32 %v545, 1.0
        %v837 = vadd.f32 %v546, 1.0
        %v838 = vadd.f32 %v547, 1.0
        %v839 = vadd.f32 %v548, 1.0
        %v840 = vadd.f32 %v549, 1.0
        %v841 = vadd.f32 %v550, 1.0
        %v842 = vadd.f32 %v551, 1.0
        %v843 = vadd.f32 %v552, 1.0
        %v844 = vmul.f32 %v812, 7.5
        %v845 = vmul.f32 %v813, 7.5
        %v846 = vmul.f32 %v814, 7.5
        %v847 = vmul.f32 %v815, 7.5
        %v848 = vmul.f32 %v816, 7.5
        %v849 = vmul.f32 %v817, 7.5
        %v850 = vmul.f32 %v818, 7.5
        %v851 = vmul.f32 %v819, 7.5
        %v852 = vmul.f32 %v820, 7.5
        %v853 = vmul.f32 %v821, 7.5
        %v854 = vmul.f32 %v822, 7.5
        %v855 = vmul.f32 %v823, 7.5
        %v856 = vmul.f32 %v824, 7.5
        %v857 = vmul.f32 %v825, 7.5
        %v858 = vmul.f32 %v826, 7.5
        %v859 = vmul.f32 %v827, 7.5
        %v860 = vmul.f32 %v828, 7.5
        %v861 = vmul.f32 %v829, 7.5
        %v862 = vmul.f32 %v830, 7.5
        %v863 = vmul.f32 %v831, 7.5
        %v864 = vmul.f32 %v832, 7.5
        %v865 = vmul.f32 %v833, 7.5
        %v866 = vmul.f32 %v834, 7.5
        %v867 = vmul.f32 %v835, 7.5
        %v868 = vmul.f32 %v836, 7.5
        %v869 = vmul.f32 %v837, 7.5
        %v870 = vmul.f32 %v838, 7.5
        %v871 = vmul.f32 %v839, 7.5
        %v872 = vmul.f32 %v840, 7.5
        %v873 = vmul.f32 %v841, 7.5
        %v874 = vmul.f32 %v842, 7.5
        %v875 = vmul.f32 %v843, 7.5
        %v876 = vadd.f32 %v780, 1.0
        %v877 = vadd.f32 %v781, 1.0
        %v878 = vadd.f32 %v782, 1.0
        %v879 = vadd.f32 %v783, 1.0
        %v880 = vadd.f32 %v784, 1.0
        %v881 = vadd.f32 %v785, 1.0
        %v882 = vadd.f32 %v786, 1.0
        %v883 = vadd.f32 %v787, 1.0
        %v884 = vadd.f32 %v788, 1.0
        %v885 = vadd.f32 %v789, 1.0
        %v886 = vadd.f32 %v790, 1.0
        %v887 = vadd.f32 %v791, 1.0
        %v888 = vadd.f32 %v792, 1.0
        %v889 = vadd.f32 %v793, 1.0
        %v890 = vadd.f32 %v794, 1.0
        %v891 = vadd.f32 %v795, 1.0
        %v892 = vadd.f32 %v796, 1.0
        %v893 = vadd.f32 %v797, 1.0
        %v894 = vadd.f32 %v798, 1.0
        %v895 = vadd.f32 %v799, 1.0
        %v896 = vadd.f32 %v800, 1.0
        %v897 = vadd.f32 %v801, 1.0
        %v898 = vadd.f32 %v802, 1.0
        %v899 = vadd.f32 %v803, 1.0
        %v900 = vadd.f32 %v804, 1.0
        %v901 = vadd.f32 %v805, 1.0
        %v902 = vadd.f32 %v806, 1.0
        %v903 = vadd.f32 %v807, 1.0
        %v904 = vadd.f32 %v808, 1.0
        %v905 = vadd.f32 %v809, 1.0
        %v906 = vadd.f32 %v810, 1.0
        %v907 = vadd.f32 %v811, 1.0
        %v908 = vmul.f32 %v876, 7.5
        %v909 = vmul.f32 %v877, 7.5
        %v910 = vmul.f32 %v878, 7.5
        %v911 = vmul.f32 %v879, 7.5
        %v912 = vmul.f32 %v880, 7.5
        %v913 = vmul.f32 %v881, 7.5
        %v914 = vmul.f32 %v882, 7.5
        %v915 = vmul.f32 %v883, 7.5
        %v916 = vmul.f32 %v884, 7.5
        %v917 = vmul.f32 %v885, 7.5
        %v918 = vmul.f32 %v886, 7.5
        %v919 = vmul.f32 %v887, 7.5
        %v920 = vmul.f32 %v888, 7.5
        %v921 = vmul.f32 %v889, 7.5
        %v922 = vmul.f32 %v890, 7.5
        %v923 = vmul.f32 %v891, 7.5
        %v924 = vmul.f32 %v892, 7.5
        %v925 = vmul.f32 %v893, 7.5
        %v926 = vmul.f32 %v894, 7.5
        %v927 = vmul.f32 %v895, 7.5
        %v928 = vmul.f32 %v896, 7.5
        %v929 = vmul.f32 %v897, 7.5
        %v930 = vmul.f32 %v898, 7.5
        %v931 = vmul.f32 %v899, 7.5
        %v932 = vmul.f32 %v900, 7.5
        %v933 = vmul.f32 %v901, 7.5
        %v934 = vmul.f32 %v902, 7.5
        %v935 = vmul.f32 %v903, 7.5
        %v936 = vmul.f32 %v904, 7.5
        %v937 = vmul.f32 %v905, 7.5
        %v938 = vmul.f32 %v906, 7.5
        %v939 = vmul.f32 %v907, 7.5
        %v940 = vfloor.f32 %v844
        %v941 = vfloor.f32 %v845
        %v942 = vfloor.f32 %v846
        %v943 = vfloor.f32 %v847
        %v944 = vfloor.f32 %v848
        %v945 = vfloor.f32 %v849
        %v946 = vfloor.f32 %v850
        %v947 = vfloor.f32 %v851
        %v948 = vfloor.f32 %v852
        %v949 = vfloor.f32 %v853
        %v950 = vfloor.f32 %v854
        %v951 = vfloor.f32 %v855
        %v952 = vfloor.f32 %v856
        %v953 = vfloor.f32 %v857
        %v954 = vfloor.f32 %v858
        %v955 = vfloor.f32 %v859
        %v956 = vfloor.f32 %v860
        %v957 = vfloor.f32 %v861
        %v958 = vfloor.f32 %v862
        %v959 = vfloor.f32 %v863
        %v960 = vfloor.f32 %v864
        %v961 = vfloor.f32 %v865
        %v962 = vfloor.f32 %v866
        %v963 = vfloor.f32 %v867
        %v964 = vfloor.f32 %v868
        %v965 = vfloor.f32 %v869
        %v966 = vfloor.f32 %v870
        %v967 = vfloor.f32 %v871
        %v968 = vfloor.f32 %v872
        %v969 = vfloor.f32 %v873
        %v970 = vfloor.f32 %v874
        %v971 = vfloor.f32 %v875
        %v972 = vadd.f32 %v940, 1.0
        %v973 = vadd.f32 %v941, 1.0
        %v974 = vadd.f32 %v942, 1.0
        %v975 = vadd.f32 %v943, 1.0
        %v976 = vadd.f32 %v944, 1.0
        %v977 = vadd.f32 %v945, 1.0
        %v978 = vadd.f32 %v946, 1.0
        %v979 = vadd.f32 %v947, 1.0
        %v980 = vadd.f32 %v948, 1.0
        %v981 = vadd.f32 %v949, 1.0
        %v982 = vadd.f32 %v950, 1.0
        %v983 = vadd.f32 %v951, 1.0
        %v984 = vadd.f32 %v952, 1.0
        %v985 = vadd.f32 %v953, 1.0
        %v986 = vadd.f32 %v954, 1.0
        %v987 = vadd.f32 %v955, 1.0
        %v988 = vadd.f32 %v956, 1.0
        %v989 = vadd.f32 %v957, 1.0
        %v990 = vadd.f32 %v958, 1.0
        %v991 = vadd.f32 %v959, 1.0
        %v992 = vadd.f32 %v960, 1.0
        %v993 = vadd.f32 %v961, 1.0
        %v994 = vadd.f32 %v962, 1.0
        %v995 = vadd.f32 %v963, 1.0
        %v996 = vadd.f32 %v964, 1.0
        %v997 = vadd.f32 %v965, 1.0
        %v998 = vadd.f32 %v966, 1.0
        %v999 = vadd.f32 %v967, 1.0
        %v1000 = vadd.f32 %v968, 1.0
        %v1001 = vadd.f32 %v969, 1.0
        %v1002 = vadd.f32 %v970, 1.0
        %v1003 = vadd.f32 %v971, 1.0
        %v1004 = vfloor.f32 %v908
        %v1005 = vfloor.f32 %v909
        %v1006 = vfloor.f32 %v910
        %v1007 = vfloor.f32 %v911
        %v1008 = vfloor.f32 %v912
        %v1009 = vfloor.f32 %v913
        %v1010 = vfloor.f32 %v914
        %v1011 = vfloor.f32 %v915
        %v1012 = vfloor.f32 %v916
        %v1013 = vfloor.f32 %v917
        %v1014 = vfloor.f32 %v918
        %v1015 = vfloor.f32 %v919
        %v1016 = vfloor.f32 %v920
        %v1017 = vfloor.f32 %v921
        %v1018 = vfloor.f32 %v922
        %v1019 = vfloor.f32 %v923
        %v1020 = vfloor.f32 %v924
        %v1021 = vfloor.f32 %v925
        %v1022 = vfloor.f32 %v926
        %v1023 = vfloor.f32 %v927
        %v1024 = vfloor.f32 %v928
        %v1025 = vfloor.f32 %v929
        %v1026 = vfloor.f32 %v930
        %v1027 = vfloor.f32 %v931
        %v1028 = vfloor.f32 %v932
        %v1029 = vfloor.f32 %v933
        %v1030 = vfloor.f32 %v934
        %v1031 = vfloor.f32 %v935
        %v1032 = vfloor.f32 %v936
        %v1033 = vfloor.f32 %v937
        %v1034 = vfloor.f32 %v938
        %v1035 = vfloor.f32 %v939
        %v1036 = vadd.f32 %v1004, 1.0
        %v1037 = vadd.f32 %v1005, 1.0
        %v1038 = vadd.f32 %v1006, 1.0
        %v1039 = vadd.f32 %v1007, 1.0
        %v1040 = vadd.f32 %v1008, 1.0
        %v1041 = vadd.f32 %v1009, 1.0
        %v1042 = vadd.f32 %v1010, 1.0
        %v1043 = vadd.f32 %v1011, 1.0
        %v1044 = vadd.f32 %v1012, 1.0
        %v1045 = vadd.f32 %v1013, 1.0
        %v1046 = vadd.f32 %v1014, 1.0
        %v1047 = vadd.f32 %v1015, 1.0
        %v1048 = vadd.f32 %v1016, 1.0
        %v1049 = vadd.f32 %v1017, 1.0
        %v1050 = vadd.f32 %v1018, 1.0
        %v1051 = vadd.f32 %v1019, 1.0
        %v1052 = vadd.f32 %v1020, 1.0
        %v1053 = vadd.f32 %v1021, 1.0
        %v1054 = vadd.f32 %v1022, 1.0
        %v1055 = vadd.f32 %v1023, 1.0
        %v1056 = vadd.f32 %v1024, 1.0
        %v1057 = vadd.f32 %v1025, 1.0
        %v1058 = vadd.f32 %v1026, 1.0
        %v1059 = vadd.f32 %v1027, 1.0
        %v1060 = vadd.f32 %v1028, 1.0
        %v1061 = vadd.f32 %v1029, 1.0
        %v1062 = vadd.f32 %v1030, 1.0
        %v1063 = vadd.f32 %v1031, 1.0
        %v1064 = vadd.f32 %v1032, 1.0
        %v1065 = vadd.f32 %v1033, 1.0
        %v1066 = vadd.f32 %v1034, 1.0
        %v1067 = vadd.f32 %v1035, 1.0
        %v1068 = vsub.f32 %v844, %v940
        %v1069 = vsub.f32 %v845, %v941
        %v1070 = vsub.f32 %v846, %v942
        %v1071 = vsub.f32 %v847, %v943
        %v1072 = vsub.f32 %v848, %v944
        %v1073 = vsub.f32 %v849, %v945
        %v1074 = vsub.f32 %v850, %v946
        %v1075 = vsub.f32 %v851, %v947
        %v1076 = vsub.f32 %v852, %v948
        %v1077 = vsub.f32 %v853, %v949
        %v1078 = vsub.f32 %v854, %v950
        %v1079 = vsub.f32 %v855, %v951
        %v1080 = vsub.f32 %v856, %v952
        %v1081 = vsub.f32 %v857, %v953
        %v1082 = vsub.f32 %v858, %v954
        %v1083 = vsub.f32 %v859, %v955
        %v1084 = vsub.f32 %v860, %v956
        %v1085 = vsub.f32 %v861, %v957
        %v1086 = vsub.f32 %v862, %v958
        %v1087 = vsub.f32 %v863, %v959
        %v1088 = vsub.f32 %v864, %v960
        %v1089 = vsub.f32 %v865, %v961
        %v1090 = vsub.f32 %v866, %v962
        %v1091 = vsub.f32 %v867, %v963
        %v1092 = vsub.f32 %v868, %v964
        %v1093 = vsub.f32 %v869, %v965
        %v1094 = vsub.f32 %v870, %v966
        %v1095 = vsub.f32 %v871, %v967
        %v1096 = vsub.f32 %v872, %v968
        %v1097 = vsub.f32 %v873, %v969
        %v1098 = vsub.f32 %v874, %v970
        %v1099 = vsub.f32 %v875, %v971
        %v1100 = vsub.f32 1.0, %v1068
        %v1101 = vsub.f32 1.0, %v1069
        %v1102 = vsub.f32 1.0, %v1070
        %v1103 = vsub.f32 1.0, %v1071
        %v1104 = vsub.f32 1.0, %v1072
        %v1105 = vsub.f32 1.0, %v1073
        %v1106 = vsub.f32 1.0, %v1074
        %v1107 = vsub.f32 1.0, %v1075
        %v1108 = vsub.f32 1.0, %v1076
        %v1109 = vsub.f32 1.0, %v1077
        %v1110 = vsub.f32 1.0, %v1078
        %v1111 = vsub.f32 1.0, %v1079
        %v1112 = vsub.f32 1.0, %v1080
        %v1113 = vsub.f32 1.0, %v1081
        %v1114 = vsub.f32 1.0, %v1082
        %v1115 = vsub.f32 1.0, %v1083
        %v1116 = vsub.f32 1.0, %v1084
        %v1117 = vsub.f32 1.0, %v1085
        %v1118 = vsub.f32 1.0, %v1086
        %v1119 = vsub.f32 1.0, %v1087
        %v1120 = vsub.f32 1.0, %v1088
        %v1121 = vsub.f32 1.0, %v1089
        %v1122 = vsub.f32 1.0, %v1090
        %v1123 = vsub.f32 1.0, %v1091
        %v1124 = vsub.f32 1.0, %v1092
        %v1125 = vsub.f32 1.0, %v1093
        %v1126 = vsub.f32 1.0, %v1094
        %v1127 = vsub.f32 1.0, %v1095
        %v1128 = vsub.f32 1.0, %v1096
        %v1129 = vsub.f32 1.0, %v1097
        %v1130 = vsub.f32 1.0, %v1098
        %v1131 = vsub.f32 1.0, %v1099
        %v1132 = vsub.f32 %v908, %v1004
        %v1133 = vsub.f32 %v909, %v1005
        %v1134 = vsub.f32 %v910, %v1006
        %v1135 = vsub.f32 %v911, %v1007
        %v1136 = vsub.f32 %v912, %v1008
        %v1137 = vsub.f32 %v913, %v1009
        %v1138 = vsub.f32 %v914, %v1010
        %v1139 = vsub.f32 %v915, %v1011
        %v1140 = vsub.f32 %v916, %v1012
        %v1141 = vsub.f32 %v917, %v1013
        %v1142 = vsub.f32 %v918, %v1014
        %v1143 = vsub.f32 %v919, %v1015
        %v1144 = vsub.f32 %v920, %v1016
        %v1145 = vsub.f32 %v921, %v1017
        %v1146 = vsub.f32 %v922, %v1018
        %v1147 = vsub.f32 %v923, %v1019
        %v1148 = vsub.f32 %v924, %v1020
        %v1149 = vsub.f32 %v925, %v1021
        %v1150 = vsub.f32 %v926, %v1022
        %v1151 = vsub.f32 %v927, %v1023
        %v1152 = vsub.f32 %v928, %v1024
        %v1153 = vsub.f32 %v929, %v1025
        %v1154 = vsub.f32 %v930, %v1026
        %v1155 = vsub.f32 %v931, %v1027
        %v1156 = vsub.f32 %v932, %v1028
        %v1157 = vsub.f32 %v933, %v1029
        %v1158 = vsub.f32 %v934, %v1030
        %v1159 = vsub.f32 %v935, %v1031
        %v1160 = vsub.f32 %v936, %v1032
        %v1161 = vsub.f32 %v937, %v1033
        %v1162 = vsub.f32 %v938, %v1034
        %v1163 = vsub.f32 %v939, %v1035
        %v1164 = vsub.f32 1.0, %v1132
        %v1165 = vsub.f32 1.0, %v1133
        %v1166 = vsub.f32 1.0, %v1134
        %v1167 = vsub.f32 1.0, %v1135
        %v1168 = vsub.f32 1.0, %v1136
        %v1169 = vsub.f32 1.0, %v1137
        %v1170 = vsub.f32 1.0, %v1138
        %v1171 = vsub.f32 1.0, %v1139
        %v1172 = vsub.f32 1.0, %v1140
        %v1173 = vsub.f32 1.0, %v1141
        %v1174 = vsub.f32 1.0, %v1142
        %v1175 = vsub.f32 1.0, %v1143
        %v1176 = vsub.f32 1.0, %v1144
        %v1177 = vsub.f32 1.0, %v1145
        %v1178 = vsub.f32 1.0, %v1146
        %v1179 = vsub.f32 1.0, %v1147
        %v1180 = vsub.f32 1.0, %v1148
        %v1181 = vsub.f32 1.0, %v1149
        %v1182 = vsub.f32 1.0, %v1150
        %v1183 = vsub.f32 1.0, %v1151
        %v1184 = vsub.f32 1.0, %v1152
        %v1185 = vsub.f32 1.0, %v1153
        %v1186 = vsub.f32 1.0, %v1154
        %v1187 = vsub.f32 1.0, %v1155
        %v1188 = vsub.f32 1.0, %v1156
        %v1189 = vsub.f32 1.0, %v1157
        %v1190 = vsub.f32 1.0, %v1158
        %v1191 = vsub.f32 1.0, %v1159
        %v1192 = vsub.f32 1.0, %v1160
        %v1193 = vsub.f32 1.0, %v1161
        %v1194 = vsub.f32 1.0, %v1162
        %v1195 = vsub.f32 1.0, %v1163
        %vm1196 = vcmp.ge.f32.partialorder %v940, 0.0
        %vm1197 = vcmp.ge.f32.partialorder %v941, 0.0
        %vm1198 = vcmp.ge.f32.partialorder %v942, 0.0
        %vm1199 = vcmp.ge.f32.partialorder %v943, 0.0
        %vm1200 = vcmp.ge.f32.partialorder %v944, 0.0
        %vm1201 = vcmp.ge.f32.partialorder %v945, 0.0
        %vm1202 = vcmp.ge.f32.partialorder %v946, 0.0
        %vm1203 = vcmp.ge.f32.partialorder %v947, 0.0
        %vm1204 = vcmp.ge.f32.partialorder %v948, 0.0
        %vm1205 = vcmp.ge.f32.partialorder %v949, 0.0
        %vm1206 = vcmp.ge.f32.partialorder %v950, 0.0
        %vm1207 = vcmp.ge.f32.partialorder %v951, 0.0
        %vm1208 = vcmp.ge.f32.partialorder %v952, 0.0
        %vm1209 = vcmp.ge.f32.partialorder %v953, 0.0
        %vm1210 = vcmp.ge.f32.partialorder %v954, 0.0
        %vm1211 = vcmp.ge.f32.partialorder %v955, 0.0
        %vm1212 = vcmp.ge.f32.partialorder %v956, 0.0
        %vm1213 = vcmp.ge.f32.partialorder %v957, 0.0
        %vm1214 = vcmp.ge.f32.partialorder %v958, 0.0
        %vm1215 = vcmp.ge.f32.partialorder %v959, 0.0
        %vm1216 = vcmp.ge.f32.partialorder %v960, 0.0
        %vm1217 = vcmp.ge.f32.partialorder %v961, 0.0
        %vm1218 = vcmp.ge.f32.partialorder %v962, 0.0
        %vm1219 = vcmp.ge.f32.partialorder %v963, 0.0
        %vm1220 = vcmp.ge.f32.partialorder %v964, 0.0
        %vm1221 = vcmp.ge.f32.partialorder %v965, 0.0
        %vm1222 = vcmp.ge.f32.partialorder %v966, 0.0
        %vm1223 = vcmp.ge.f32.partialorder %v967, 0.0
        %vm1224 = vcmp.ge.f32.partialorder %v968, 0.0
        %vm1225 = vcmp.ge.f32.partialorder %v969, 0.0
        %vm1226 = vcmp.ge.f32.partialorder %v970, 0.0
        %vm1227 = vcmp.ge.f32.partialorder %v971, 0.0
        %vm1228 = vcmp.le.f32.partialorder %v940, 15.0
        %vm1229 = vcmp.le.f32.partialorder %v941, 15.0
        %vm1230 = vcmp.le.f32.partialorder %v942, 15.0
        %vm1231 = vcmp.le.f32.partialorder %v943, 15.0
        %vm1232 = vcmp.le.f32.partialorder %v944, 15.0
        %vm1233 = vcmp.le.f32.partialorder %v945, 15.0
        %vm1234 = vcmp.le.f32.partialorder %v946, 15.0
        %vm1235 = vcmp.le.f32.partialorder %v947, 15.0
        %vm1236 = vcmp.le.f32.partialorder %v948, 15.0
        %vm1237 = vcmp.le.f32.partialorder %v949, 15.0
        %vm1238 = vcmp.le.f32.partialorder %v950, 15.0
        %vm1239 = vcmp.le.f32.partialorder %v951, 15.0
        %vm1240 = vcmp.le.f32.partialorder %v952, 15.0
        %vm1241 = vcmp.le.f32.partialorder %v953, 15.0
        %vm1242 = vcmp.le.f32.partialorder %v954, 15.0
        %vm1243 = vcmp.le.f32.partialorder %v955, 15.0
        %vm1244 = vcmp.le.f32.partialorder %v956, 15.0
        %vm1245 = vcmp.le.f32.partialorder %v957, 15.0
        %vm1246 = vcmp.le.f32.partialorder %v958, 15.0
        %vm1247 = vcmp.le.f32.partialorder %v959, 15.0
        %vm1248 = vcmp.le.f32.partialorder %v960, 15.0
        %vm1249 = vcmp.le.f32.partialorder %v961, 15.0
        %vm1250 = vcmp.le.f32.partialorder %v962, 15.0
        %vm1251 = vcmp.le.f32.partialorder %v963, 15.0
        %vm1252 = vcmp.le.f32.partialorder %v964, 15.0
        %vm1253 = vcmp.le.f32.partialorder %v965, 15.0
        %vm1254 = vcmp.le.f32.partialorder %v966, 15.0
        %vm1255 = vcmp.le.f32.partialorder %v967, 15.0
        %vm1256 = vcmp.le.f32.partialorder %v968, 15.0
        %vm1257 = vcmp.le.f32.partialorder %v969, 15.0
        %vm1258 = vcmp.le.f32.partialorder %v970, 15.0
        %vm1259 = vcmp.le.f32.partialorder %v971, 15.0
        %vm1260 = vmand %vm1196, %vm1228
        %vm1261 = vmand %vm1197, %vm1229
        %vm1262 = vmand %vm1198, %vm1230
        %vm1263 = vmand %vm1199, %vm1231
        %vm1264 = vmand %vm1200, %vm1232
        %vm1265 = vmand %vm1201, %vm1233
        %vm1266 = vmand %vm1202, %vm1234
        %vm1267 = vmand %vm1203, %vm1235
        %vm1268 = vmand %vm1204, %vm1236
        %vm1269 = vmand %vm1205, %vm1237
        %vm1270 = vmand %vm1206, %vm1238
        %vm1271 = vmand %vm1207, %vm1239
        %vm1272 = vmand %vm1208, %vm1240
        %vm1273 = vmand %vm1209, %vm1241
        %vm1274 = vmand %vm1210, %vm1242
        %vm1275 = vmand %vm1211, %vm1243
        %vm1276 = vmand %vm1212, %vm1244
        %vm1277 = vmand %vm1213, %vm1245
        %vm1278 = vmand %vm1214, %vm1246
        %vm1279 = vmand %vm1215, %vm1247
        %vm1280 = vmand %vm1216, %vm1248
        %vm1281 = vmand %vm1217, %vm1249
        %vm1282 = vmand %vm1218, %vm1250
        %vm1283 = vmand %vm1219, %vm1251
        %vm1284 = vmand %vm1220, %vm1252
        %vm1285 = vmand %vm1221, %vm1253
        %vm1286 = vmand %vm1222, %vm1254
        %vm1287 = vmand %vm1223, %vm1255
        %vm1288 = vmand %vm1224, %vm1256
        %vm1289 = vmand %vm1225, %vm1257
        %vm1290 = vmand %vm1226, %vm1258
        %vm1291 = vmand %vm1227, %vm1259
        %v1292 = vsel %vm1260, %v1100, 0.0
        %v1293 = vsel %vm1261, %v1101, 0.0
        %v1294 = vsel %vm1262, %v1102, 0.0
        %v1295 = vsel %vm1263, %v1103, 0.0
        %v1296 = vsel %vm1264, %v1104, 0.0
        %v1297 = vsel %vm1265, %v1105, 0.0
        %v1298 = vsel %vm1266, %v1106, 0.0
        %v1299 = vsel %vm1267, %v1107, 0.0
        %v1300 = vsel %vm1268, %v1108, 0.0
        %v1301 = vsel %vm1269, %v1109, 0.0
        %v1302 = vsel %vm1270, %v1110, 0.0
        %v1303 = vsel %vm1271, %v1111, 0.0
        %v1304 = vsel %vm1272, %v1112, 0.0
        %v1305 = vsel %vm1273, %v1113, 0.0
        %v1306 = vsel %vm1274, %v1114, 0.0
        %v1307 = vsel %vm1275, %v1115, 0.0
        %v1308 = vsel %vm1276, %v1116, 0.0
        %v1309 = vsel %vm1277, %v1117, 0.0
        %v1310 = vsel %vm1278, %v1118, 0.0
        %v1311 = vsel %vm1279, %v1119, 0.0
        %v1312 = vsel %vm1280, %v1120, 0.0
        %v1313 = vsel %vm1281, %v1121, 0.0
        %v1314 = vsel %vm1282, %v1122, 0.0
        %v1315 = vsel %vm1283, %v1123, 0.0
        %v1316 = vsel %vm1284, %v1124, 0.0
        %v1317 = vsel %vm1285, %v1125, 0.0
        %v1318 = vsel %vm1286, %v1126, 0.0
        %v1319 = vsel %vm1287, %v1127, 0.0
        %v1320 = vsel %vm1288, %v1128, 0.0
        %v1321 = vsel %vm1289, %v1129, 0.0
        %v1322 = vsel %vm1290, %v1130, 0.0
        %v1323 = vsel %vm1291, %v1131, 0.0
        %vm1324 = vcmp.ge.f32.partialorder %v972, 0.0
        %vm1325 = vcmp.ge.f32.partialorder %v973, 0.0
        %vm1326 = vcmp.ge.f32.partialorder %v974, 0.0
        %vm1327 = vcmp.ge.f32.partialorder %v975, 0.0
        %vm1328 = vcmp.ge.f32.partialorder %v976, 0.0
        %vm1329 = vcmp.ge.f32.partialorder %v977, 0.0
        %vm1330 = vcmp.ge.f32.partialorder %v978, 0.0
        %vm1331 = vcmp.ge.f32.partialorder %v979, 0.0
        %vm1332 = vcmp.ge.f32.partialorder %v980, 0.0
        %vm1333 = vcmp.ge.f32.partialorder %v981, 0.0
        %vm1334 = vcmp.ge.f32.partialorder %v982, 0.0
        %vm1335 = vcmp.ge.f32.partialorder %v983, 0.0
        %vm1336 = vcmp.ge.f32.partialorder %v984, 0.0
        %vm1337 = vcmp.ge.f32.partialorder %v985, 0.0
        %vm1338 = vcmp.ge.f32.partialorder %v986, 0.0
        %vm1339 = vcmp.ge.f32.partialorder %v987, 0.0
        %vm1340 = vcmp.ge.f32.partialorder %v988, 0.0
        %vm1341 = vcmp.ge.f32.partialorder %v989, 0.0
        %vm1342 = vcmp.ge.f32.partialorder %v990, 0.0
        %vm1343 = vcmp.ge.f32.partialorder %v991, 0.0
        %vm1344 = vcmp.ge.f32.partialorder %v992, 0.0
        %vm1345 = vcmp.ge.f32.partialorder %v993, 0.0
        %vm1346 = vcmp.ge.f32.partialorder %v994, 0.0
        %vm1347 = vcmp.ge.f32.partialorder %v995, 0.0
        %vm1348 = vcmp.ge.f32.partialorder %v996, 0.0
        %vm1349 = vcmp.ge.f32.partialorder %v997, 0.0
        %vm1350 = vcmp.ge.f32.partialorder %v998, 0.0
        %vm1351 = vcmp.ge.f32.partialorder %v999, 0.0
        %vm1352 = vcmp.ge.f32.partialorder %v1000, 0.0
        %vm1353 = vcmp.ge.f32.partialorder %v1001, 0.0
        %vm1354 = vcmp.ge.f32.partialorder %v1002, 0.0
        %vm1355 = vcmp.ge.f32.partialorder %v1003, 0.0
        %vm1356 = vcmp.le.f32.partialorder %v972, 15.0
        %vm1357 = vcmp.le.f32.partialorder %v973, 15.0
        %vm1358 = vcmp.le.f32.partialorder %v974, 15.0
        %vm1359 = vcmp.le.f32.partialorder %v975, 15.0
        %vm1360 = vcmp.le.f32.partialorder %v976, 15.0
        %vm1361 = vcmp.le.f32.partialorder %v977, 15.0
        %vm1362 = vcmp.le.f32.partialorder %v978, 15.0
        %vm1363 = vcmp.le.f32.partialorder %v979, 15.0
        %vm1364 = vcmp.le.f32.partialorder %v980, 15.0
        %vm1365 = vcmp.le.f32.partialorder %v981, 15.0
        %vm1366 = vcmp.le.f32.partialorder %v982, 15.0
        %vm1367 = vcmp.le.f32.partialorder %v983, 15.0
        %vm1368 = vcmp.le.f32.partialorder %v984, 15.0
        %vm1369 = vcmp.le.f32.partialorder %v985, 15.0
        %vm1370 = vcmp.le.f32.partialorder %v986, 15.0
        %vm1371 = vcmp.le.f32.partialorder %v987, 15.0
        %vm1372 = vcmp.le.f32.partialorder %v988, 15.0
        %vm1373 = vcmp.le.f32.partialorder %v989, 15.0
        %vm1374 = vcmp.le.f32.partialorder %v990, 15.0
        %vm1375 = vcmp.le.f32.partialorder %v991, 15.0
        %vm1376 = vcmp.le.f32.partialorder %v992, 15.0
        %vm1377 = vcmp.le.f32.partialorder %v993, 15.0
        %vm1378 = vcmp.le.f32.partialorder %v994, 15.0
        %vm1379 = vcmp.le.f32.partialorder %v995, 15.0
        %vm1380 = vcmp.le.f32.partialorder %v996, 15.0
        %vm1381 = vcmp.le.f32.partialorder %v997, 15.0
        %vm1382 = vcmp.le.f32.partialorder %v998, 15.0
        %vm1383 = vcmp.le.f32.partialorder %v999, 15.0
        %vm1384 = vcmp.le.f32.partialorder %v1000, 15.0
        %vm1385 = vcmp.le.f32.partialorder %v1001, 15.0
        %vm1386 = vcmp.le.f32.partialorder %v1002, 15.0
        %vm1387 = vcmp.le.f32.partialorder %v1003, 15.0
        %vm1388 = vmand %vm1324, %vm1356
        %vm1389 = vmand %vm1325, %vm1357
        %vm1390 = vmand %vm1326, %vm1358
        %vm1391 = vmand %vm1327, %vm1359
        %vm1392 = vmand %vm1328, %vm1360
        %vm1393 = vmand %vm1329, %vm1361
        %vm1394 = vmand %vm1330, %vm1362
        %vm1395 = vmand %vm1331, %vm1363
        %vm1396 = vmand %vm1332, %vm1364
        %vm1397 = vmand %vm1333, %vm1365
        %vm1398 = vmand %vm1334, %vm1366
        %vm1399 = vmand %vm1335, %vm1367
        %vm1400 = vmand %vm1336, %vm1368
        %vm1401 = vmand %vm1337, %vm1369
        %vm1402 = vmand %vm1338, %vm1370
        %vm1403 = vmand %vm1339, %vm1371
        %vm1404 = vmand %vm1340, %vm1372
        %vm1405 = vmand %vm1341, %vm1373
        %vm1406 = vmand %vm1342, %vm1374
        %vm1407 = vmand %vm1343, %vm1375
        %vm1408 = vmand %vm1344, %vm1376
        %vm1409 = vmand %vm1345, %vm1377
        %vm1410 = vmand %vm1346, %vm1378
        %vm1411 = vmand %vm1347, %vm1379
        %vm1412 = vmand %vm1348, %vm1380
        %vm1413 = vmand %vm1349, %vm1381
        %vm1414 = vmand %vm1350, %vm1382
        %vm1415 = vmand %vm1351, %vm1383
        %vm1416 = vmand %vm1352, %vm1384
        %vm1417 = vmand %vm1353, %vm1385
        %vm1418 = vmand %vm1354, %vm1386
        %vm1419 = vmand %vm1355, %vm1387
        %v1420 = vsel %vm1388, %v1068, 0.0
        %v1421 = vsel %vm1389, %v1069, 0.0
        %v1422 = vsel %vm1390, %v1070, 0.0
        %v1423 = vsel %vm1391, %v1071, 0.0
        %v1424 = vsel %vm1392, %v1072, 0.0
        %v1425 = vsel %vm1393, %v1073, 0.0
        %v1426 = vsel %vm1394, %v1074, 0.0
        %v1427 = vsel %vm1395, %v1075, 0.0
        %v1428 = vsel %vm1396, %v1076, 0.0
        %v1429 = vsel %vm1397, %v1077, 0.0
        %v1430 = vsel %vm1398, %v1078, 0.0
        %v1431 = vsel %vm1399, %v1079, 0.0
        %v1432 = vsel %vm1400, %v1080, 0.0
        %v1433 = vsel %vm1401, %v1081, 0.0
        %v1434 = vsel %vm1402, %v1082, 0.0
        %v1435 = vsel %vm1403, %v1083, 0.0
        %v1436 = vsel %vm1404, %v1084, 0.0
        %v1437 = vsel %vm1405, %v1085, 0.0
        %v1438 = vsel %vm1406, %v1086, 0.0
        %v1439 = vsel %vm1407, %v1087, 0.0
        %v1440 = vsel %vm1408, %v1088, 0.0
        %v1441 = vsel %vm1409, %v1089, 0.0
        %v1442 = vsel %vm1410, %v1090, 0.0
        %v1443 = vsel %vm1411, %v1091, 0.0
        %v1444 = vsel %vm1412, %v1092, 0.0
        %v1445 = vsel %vm1413, %v1093, 0.0
        %v1446 = vsel %vm1414, %v1094, 0.0
        %v1447 = vsel %vm1415, %v1095, 0.0
        %v1448 = vsel %vm1416, %v1096, 0.0
        %v1449 = vsel %vm1417, %v1097, 0.0
        %v1450 = vsel %vm1418, %v1098, 0.0
        %v1451 = vsel %vm1419, %v1099, 0.0
        %vm1452 = vcmp.ge.f32.partialorder %v1004, 0.0
        %vm1453 = vcmp.ge.f32.partialorder %v1005, 0.0
        %vm1454 = vcmp.ge.f32.partialorder %v1006, 0.0
        %vm1455 = vcmp.ge.f32.partialorder %v1007, 0.0
        %vm1456 = vcmp.ge.f32.partialorder %v1008, 0.0
        %vm1457 = vcmp.ge.f32.partialorder %v1009, 0.0
        %vm1458 = vcmp.ge.f32.partialorder %v1010, 0.0
        %vm1459 = vcmp.ge.f32.partialorder %v1011, 0.0
        %vm1460 = vcmp.ge.f32.partialorder %v1012, 0.0
        %vm1461 = vcmp.ge.f32.partialorder %v1013, 0.0
        %vm1462 = vcmp.ge.f32.partialorder %v1014, 0.0
        %vm1463 = vcmp.ge.f32.partialorder %v1015, 0.0
        %vm1464 = vcmp.ge.f32.partialorder %v1016, 0.0
        %vm1465 = vcmp.ge.f32.partialorder %v1017, 0.0
        %vm1466 = vcmp.ge.f32.partialorder %v1018, 0.0
        %vm1467 = vcmp.ge.f32.partialorder %v1019, 0.0
        %vm1468 = vcmp.ge.f32.partialorder %v1020, 0.0
        %vm1469 = vcmp.ge.f32.partialorder %v1021, 0.0
        %vm1470 = vcmp.ge.f32.partialorder %v1022, 0.0
        %vm1471 = vcmp.ge.f32.partialorder %v1023, 0.0
        %vm1472 = vcmp.ge.f32.partialorder %v1024, 0.0
        %vm1473 = vcmp.ge.f32.partialorder %v1025, 0.0
        %vm1474 = vcmp.ge.f32.partialorder %v1026, 0.0
        %vm1475 = vcmp.ge.f32.partialorder %v1027, 0.0
        %vm1476 = vcmp.ge.f32.partialorder %v1028, 0.0
        %vm1477 = vcmp.ge.f32.partialorder %v1029, 0.0
        %vm1478 = vcmp.ge.f32.partialorder %v1030, 0.0
        %vm1479 = vcmp.ge.f32.partialorder %v1031, 0.0
        %vm1480 = vcmp.ge.f32.partialorder %v1032, 0.0
        %vm1481 = vcmp.ge.f32.partialorder %v1033, 0.0
        %vm1482 = vcmp.ge.f32.partialorder %v1034, 0.0
        %vm1483 = vcmp.ge.f32.partialorder %v1035, 0.0
        %vm1484 = vcmp.le.f32.partialorder %v1004, 15.0
        %vm1485 = vcmp.le.f32.partialorder %v1005, 15.0
        %vm1486 = vcmp.le.f32.partialorder %v1006, 15.0
        %vm1487 = vcmp.le.f32.partialorder %v1007, 15.0
        %vm1488 = vcmp.le.f32.partialorder %v1008, 15.0
        %vm1489 = vcmp.le.f32.partialorder %v1009, 15.0
        %vm1490 = vcmp.le.f32.partialorder %v1010, 15.0
        %vm1491 = vcmp.le.f32.partialorder %v1011, 15.0
        %vm1492 = vcmp.le.f32.partialorder %v1012, 15.0
        %vm1493 = vcmp.le.f32.partialorder %v1013, 15.0
        %vm1494 = vcmp.le.f32.partialorder %v1014, 15.0
        %vm1495 = vcmp.le.f32.partialorder %v1015, 15.0
        %vm1496 = vcmp.le.f32.partialorder %v1016, 15.0
        %vm1497 = vcmp.le.f32.partialorder %v1017, 15.0
        %vm1498 = vcmp.le.f32.partialorder %v1018, 15.0
        %vm1499 = vcmp.le.f32.partialorder %v1019, 15.0
        %vm1500 = vcmp.le.f32.partialorder %v1020, 15.0
        %vm1501 = vcmp.le.f32.partialorder %v1021, 15.0
        %vm1502 = vcmp.le.f32.partialorder %v1022, 15.0
        %vm1503 = vcmp.le.f32.partialorder %v1023, 15.0
        %vm1504 = vcmp.le.f32.partialorder %v1024, 15.0
        %vm1505 = vcmp.le.f32.partialorder %v1025, 15.0
        %vm1506 = vcmp.le.f32.partialorder %v1026, 15.0
        %vm1507 = vcmp.le.f32.partialorder %v1027, 15.0
        %vm1508 = vcmp.le.f32.partialorder %v1028, 15.0
        %vm1509 = vcmp.le.f32.partialorder %v1029, 15.0
        %vm1510 = vcmp.le.f32.partialorder %v1030, 15.0
        %vm1511 = vcmp.le.f32.partialorder %v1031, 15.0
        %vm1512 = vcmp.le.f32.partialorder %v1032, 15.0
        %vm1513 = vcmp.le.f32.partialorder %v1033, 15.0
        %vm1514 = vcmp.le.f32.partialorder %v1034, 15.0
        %vm1515 = vcmp.le.f32.partialorder %v1035, 15.0
        %vm1516 = vmand %vm1452, %vm1484
        %vm1517 = vmand %vm1453, %vm1485
        %vm1518 = vmand %vm1454, %vm1486
        %vm1519 = vmand %vm1455, %vm1487
        %vm1520 = vmand %vm1456, %vm1488
        %vm1521 = vmand %vm1457, %vm1489
        %vm1522 = vmand %vm1458, %vm1490
        %vm1523 = vmand %vm1459, %vm1491
        %vm1524 = vmand %vm1460, %vm1492
        %vm1525 = vmand %vm1461, %vm1493
        %vm1526 = vmand %vm1462, %vm1494
        %vm1527 = vmand %vm1463, %vm1495
        %vm1528 = vmand %vm1464, %vm1496
        %vm1529 = vmand %vm1465, %vm1497
        %vm1530 = vmand %vm1466, %vm1498
        %vm1531 = vmand %vm1467, %vm1499
        %vm1532 = vmand %vm1468, %vm1500
        %vm1533 = vmand %vm1469, %vm1501
        %vm1534 = vmand %vm1470, %vm1502
        %vm1535 = vmand %vm1471, %vm1503
        %vm1536 = vmand %vm1472, %vm1504
        %vm1537 = vmand %vm1473, %vm1505
        %vm1538 = vmand %vm1474, %vm1506
        %vm1539 = vmand %vm1475, %vm1507
        %vm1540 = vmand %vm1476, %vm1508
        %vm1541 = vmand %vm1477, %vm1509
        %vm1542 = vmand %vm1478, %vm1510
        %vm1543 = vmand %vm1479, %vm1511
        %vm1544 = vmand %vm1480, %vm1512
        %vm1545 = vmand %vm1481, %vm1513
        %vm1546 = vmand %vm1482, %vm1514
        %vm1547 = vmand %vm1483, %vm1515
        %v1548 = vsel %vm1516, %v1164, 0.0
        %v1549 = vsel %vm1517, %v1165, 0.0
        %v1550 = vsel %vm1518, %v1166, 0.0
        %v1551 = vsel %vm1519, %v1167, 0.0
        %v1552 = vsel %vm1520, %v1168, 0.0
        %v1553 = vsel %vm1521, %v1169, 0.0
        %v1554 = vsel %vm1522, %v1170, 0.0
        %v1555 = vsel %vm1523, %v1171, 0.0
        %v1556 = vsel %vm1524, %v1172, 0.0
        %v1557 = vsel %vm1525, %v1173, 0.0
        %v1558 = vsel %vm1526, %v1174, 0.0
        %v1559 = vsel %vm1527, %v1175, 0.0
        %v1560 = vsel %vm1528, %v1176, 0.0
        %v1561 = vsel %vm1529, %v1177, 0.0
        %v1562 = vsel %vm1530, %v1178, 0.0
        %v1563 = vsel %vm1531, %v1179, 0.0
        %v1564 = vsel %vm1532, %v1180, 0.0
        %v1565 = vsel %vm1533, %v1181, 0.0
        %v1566 = vsel %vm1534, %v1182, 0.0
        %v1567 = vsel %vm1535, %v1183, 0.0
        %v1568 = vsel %vm1536, %v1184, 0.0
        %v1569 = vsel %vm1537, %v1185, 0.0
        %v1570 = vsel %vm1538, %v1186, 0.0
        %v1571 = vsel %vm1539, %v1187, 0.0
        %v1572 = vsel %vm1540, %v1188, 0.0
        %v1573 = vsel %vm1541, %v1189, 0.0
        %v1574 = vsel %vm1542, %v1190, 0.0
        %v1575 = vsel %vm1543, %v1191, 0.0
        %v1576 = vsel %vm1544, %v1192, 0.0
        %v1577 = vsel %vm1545, %v1193, 0.0
        %v1578 = vsel %vm1546, %v1194, 0.0
        %v1579 = vsel %vm1547, %v1195, 0.0
        %vm1580 = vcmp.ge.f32.partialorder %v1036, 0.0
        %vm1581 = vcmp.ge.f32.partialorder %v1037, 0.0
        %vm1582 = vcmp.ge.f32.partialorder %v1038, 0.0
        %vm1583 = vcmp.ge.f32.partialorder %v1039, 0.0
        %vm1584 = vcmp.ge.f32.partialorder %v1040, 0.0
        %vm1585 = vcmp.ge.f32.partialorder %v1041, 0.0
        %vm1586 = vcmp.ge.f32.partialorder %v1042, 0.0
        %vm1587 = vcmp.ge.f32.partialorder %v1043, 0.0
        %vm1588 = vcmp.ge.f32.partialorder %v1044, 0.0
        %vm1589 = vcmp.ge.f32.partialorder %v1045, 0.0
        %vm1590 = vcmp.ge.f32.partialorder %v1046, 0.0
        %vm1591 = vcmp.ge.f32.partialorder %v1047, 0.0
        %vm1592 = vcmp.ge.f32.partialorder %v1048, 0.0
        %vm1593 = vcmp.ge.f32.partialorder %v1049, 0.0
        %vm1594 = vcmp.ge.f32.partialorder %v1050, 0.0
        %vm1595 = vcmp.ge.f32.partialorder %v1051, 0.0
        %vm1596 = vcmp.ge.f32.partialorder %v1052, 0.0
        %vm1597 = vcmp.ge.f32.partialorder %v1053, 0.0
        %vm1598 = vcmp.ge.f32.partialorder %v1054, 0.0
        %vm1599 = vcmp.ge.f32.partialorder %v1055, 0.0
        %vm1600 = vcmp.ge.f32.partialorder %v1056, 0.0
        %vm1601 = vcmp.ge.f32.partialorder %v1057, 0.0
        %vm1602 = vcmp.ge.f32.partialorder %v1058, 0.0
        %vm1603 = vcmp.ge.f32.partialorder %v1059, 0.0
        %vm1604 = vcmp.ge.f32.partialorder %v1060, 0.0
        %vm1605 = vcmp.ge.f32.partialorder %v1061, 0.0
        %vm1606 = vcmp.ge.f32.partialorder %v1062, 0.0
        %vm1607 = vcmp.ge.f32.partialorder %v1063, 0.0
        %vm1608 = vcmp.ge.f32.partialorder %v1064, 0.0
        %vm1609 = vcmp.ge.f32.partialorder %v1065, 0.0
        %vm1610 = vcmp.ge.f32.partialorder %v1066, 0.0
        %vm1611 = vcmp.ge.f32.partialorder %v1067, 0.0
        %vm1612 = vcmp.le.f32.partialorder %v1036, 15.0
        %vm1613 = vcmp.le.f32.partialorder %v1037, 15.0
        %vm1614 = vcmp.le.f32.partialorder %v1038, 15.0
        %vm1615 = vcmp.le.f32.partialorder %v1039, 15.0
        %vm1616 = vcmp.le.f32.partialorder %v1040, 15.0
        %vm1617 = vcmp.le.f32.partialorder %v1041, 15.0
        %vm1618 = vcmp.le.f32.partialorder %v1042, 15.0
        %vm1619 = vcmp.le.f32.partialorder %v1043, 15.0
        %vm1620 = vcmp.le.f32.partialorder %v1044, 15.0
        %vm1621 = vcmp.le.f32.partialorder %v1045, 15.0
        %vm1622 = vcmp.le.f32.partialorder %v1046, 15.0
        %vm1623 = vcmp.le.f32.partialorder %v1047, 15.0
        %vm1624 = vcmp.le.f32.partialorder %v1048, 15.0
        %vm1625 = vcmp.le.f32.partialorder %v1049, 15.0
        %vm1626 = vcmp.le.f32.partialorder %v1050, 15.0
        %vm1627 = vcmp.le.f32.partialorder %v1051, 15.0
        %vm1628 = vcmp.le.f32.partialorder %v1052, 15.0
        %vm1629 = vcmp.le.f32.partialorder %v1053, 15.0
        %vm1630 = vcmp.le.f32.partialorder %v1054, 15.0
        %vm1631 = vcmp.le.f32.partialorder %v1055, 15.0
        %vm1632 = vcmp.le.f32.partialorder %v1056, 15.0
        %vm1633 = vcmp.le.f32.partialorder %v1057, 15.0
        %vm1634 = vcmp.le.f32.partialorder %v1058, 15.0
        %vm1635 = vcmp.le.f32.partialorder %v1059, 15.0
        %vm1636 = vcmp.le.f32.partialorder %v1060, 15.0
        %vm1637 = vcmp.le.f32.partialorder %v1061, 15.0
        %vm1638 = vcmp.le.f32.partialorder %v1062, 15.0
        %vm1639 = vcmp.le.f32.partialorder %v1063, 15.0
        %vm1640 = vcmp.le.f32.partialorder %v1064, 15.0
        %vm1641 = vcmp.le.f32.partialorder %v1065, 15.0
        %vm1642 = vcmp.le.f32.partialorder %v1066, 15.0
        %vm1643 = vcmp.le.f32.partialorder %v1067, 15.0
        %vm1644 = vmand %vm1580, %vm1612
        %vm1645 = vmand %vm1581, %vm1613
        %vm1646 = vmand %vm1582, %vm1614
        %vm1647 = vmand %vm1583, %vm1615
        %vm1648 = vmand %vm1584, %vm1616
        %vm1649 = vmand %vm1585, %vm1617
        %vm1650 = vmand %vm1586, %vm1618
        %vm1651 = vmand %vm1587, %vm1619
        %vm1652 = vmand %vm1588, %vm1620
        %vm1653 = vmand %vm1589, %vm1621
        %vm1654 = vmand %vm1590, %vm1622
        %vm1655 = vmand %vm1591, %vm1623
        %vm1656 = vmand %vm1592, %vm1624
        %vm1657 = vmand %vm1593, %vm1625
        %vm1658 = vmand %vm1594, %vm1626
        %vm1659 = vmand %vm1595, %vm1627
        %vm1660 = vmand %vm1596, %vm1628
        %vm1661 = vmand %vm1597, %vm1629
        %vm1662 = vmand %vm1598, %vm1630
        %vm1663 = vmand %vm1599, %vm1631
        %vm1664 = vmand %vm1600, %vm1632
        %vm1665 = vmand %vm1601, %vm1633
        %vm1666 = vmand %vm1602, %vm1634
        %vm1667 = vmand %vm1603, %vm1635
        %vm1668 = vmand %vm1604, %vm1636
        %vm1669 = vmand %vm1605, %vm1637
        %vm1670 = vmand %vm1606, %vm1638
        %vm1671 = vmand %vm1607, %vm1639
        %vm1672 = vmand %vm1608, %vm1640
        %vm1673 = vmand %vm1609, %vm1641
        %vm1674 = vmand %vm1610, %vm1642
        %vm1675 = vmand %vm1611, %vm1643
        %v1676 = vsel %vm1644, %v1132, 0.0
        %v1677 = vsel %vm1645, %v1133, 0.0
        %v1678 = vsel %vm1646, %v1134, 0.0
        %v1679 = vsel %vm1647, %v1135, 0.0
        %v1680 = vsel %vm1648, %v1136, 0.0
        %v1681 = vsel %vm1649, %v1137, 0.0
        %v1682 = vsel %vm1650, %v1138, 0.0
        %v1683 = vsel %vm1651, %v1139, 0.0
        %v1684 = vsel %vm1652, %v1140, 0.0
        %v1685 = vsel %vm1653, %v1141, 0.0
        %v1686 = vsel %vm1654, %v1142, 0.0
        %v1687 = vsel %vm1655, %v1143, 0.0
        %v1688 = vsel %vm1656, %v1144, 0.0
        %v1689 = vsel %vm1657, %v1145, 0.0
        %v1690 = vsel %vm1658, %v1146, 0.0
        %v1691 = vsel %vm1659, %v1147, 0.0
        %v1692 = vsel %vm1660, %v1148, 0.0
        %v1693 = vsel %vm1661, %v1149, 0.0
        %v1694 = vsel %vm1662, %v1150, 0.0
        %v1695 = vsel %vm1663, %v1151, 0.0
        %v1696 = vsel %vm1664, %v1152, 0.0
        %v1697 = vsel %vm1665, %v1153, 0.0
        %v1698 = vsel %vm1666, %v1154, 0.0
        %v1699 = vsel %vm1667, %v1155, 0.0
        %v1700 = vsel %vm1668, %v1156, 0.0
        %v1701 = vsel %vm1669, %v1157, 0.0
        %v1702 = vsel %vm1670, %v1158, 0.0
        %v1703 = vsel %vm1671, %v1159, 0.0
        %v1704 = vsel %vm1672, %v1160, 0.0
        %v1705 = vsel %vm1673, %v1161, 0.0
        %v1706 = vsel %vm1674, %v1162, 0.0
        %v1707 = vsel %vm1675, %v1163, 0.0
        %v1709 = vperm.slane %v247, 0
        %v1710 = vperm.slane %v247, 1
        %1714 = vset.pattern.permute.xlu0 0
        %1715 = vperm.xlu0 %1714, %v940
        %v1716 = vpop.permute.xlu0 %1715
        %1719 = vset.pattern.permute.xlu0 0
        %1720 = vperm.xlu0 %1719, %v941
        %v1721 = vpop.permute.xlu0 %1720
        %1724 = vset.pattern.permute.xlu0 0
        %1725 = vperm.xlu0 %1724, %v942
        %v1726 = vpop.permute.xlu0 %1725
        %1729 = vset.pattern.permute.xlu0 0
        %1730 = vperm.xlu0 %1729, %v943
        %v1731 = vpop.permute.xlu0 %1730
        %1734 = vset.pattern.permute.xlu0 0
        %1735 = vperm.xlu0 %1734, %v944
        %v1736 = vpop.permute.xlu0 %1735
        %1739 = vset.pattern.permute.xlu0 0
        %1740 = vperm.xlu0 %1739, %v945
        %v1741 = vpop.permute.xlu0 %1740
        %1744 = vset.pattern.permute.xlu0 0
        %1745 = vperm.xlu0 %1744, %v946
        %v1746 = vpop.permute.xlu0 %1745
        %1749 = vset.pattern.permute.xlu0 0
        %1750 = vperm.xlu0 %1749, %v947
        %v1751 = vpop.permute.xlu0 %1750
        %1754 = vset.pattern.permute.xlu0 0
        %1755 = vperm.xlu0 %1754, %v948
        %v1756 = vpop.permute.xlu0 %1755
        %1759 = vset.pattern.permute.xlu0 0
        %1760 = vperm.xlu0 %1759, %v949
        %v1761 = vpop.permute.xlu0 %1760
        %1764 = vset.pattern.permute.xlu0 0
        %1765 = vperm.xlu0 %1764, %v950
        %v1766 = vpop.permute.xlu0 %1765
        %1769 = vset.pattern.permute.xlu0 0
        %1770 = vperm.xlu0 %1769, %v951
        %v1771 = vpop.permute.xlu0 %1770
        %1774 = vset.pattern.permute.xlu0 0
        %1775 = vperm.xlu0 %1774, %v952
        %v1776 = vpop.permute.xlu0 %1775
        %1779 = vset.pattern.permute.xlu0 0
        %1780 = vperm.xlu0 %1779, %v953
        %v1781 = vpop.permute.xlu0 %1780
        %1784 = vset.pattern.permute.xlu0 0
        %1785 = vperm.xlu0 %1784, %v954
        %v1786 = vpop.permute.xlu0 %1785
        %1789 = vset.pattern.permute.xlu0 0
        %1790 = vperm.xlu0 %1789, %v955
        %v1791 = vpop.permute.xlu0 %1790
        %1794 = vset.pattern.permute.xlu0 0
        %1795 = vperm.xlu0 %1794, %v956
        %v1796 = vpop.permute.xlu0 %1795
        %1799 = vset.pattern.permute.xlu0 0
        %1800 = vperm.xlu0 %1799, %v957
        %v1801 = vpop.permute.xlu0 %1800
        %1804 = vset.pattern.permute.xlu0 0
        %1805 = vperm.xlu0 %1804, %v958
        %v1806 = vpop.permute.xlu0 %1805
        %1809 = vset.pattern.permute.xlu0 0
        %1810 = vperm.xlu0 %1809, %v959
        %v1811 = vpop.permute.xlu0 %1810
        %1814 = vset.pattern.permute.xlu0 0
        %1815 = vperm.xlu0 %1814, %v960
        %v1816 = vpop.permute.xlu0 %1815
        %1819 = vset.pattern.permute.xlu0 0
        %1820 = vperm.xlu0 %1819, %v961
        %v1821 = vpop.permute.xlu0 %1820
        %1824 = vset.pattern.permute.xlu0 0
        %1825 = vperm.xlu0 %1824, %v962
        %v1826 = vpop.permute.xlu0 %1825
        %1829 = vset.pattern.permute.xlu0 0
        %1830 = vperm.xlu0 %1829, %v963
        %v1831 = vpop.permute.xlu0 %1830
        %1834 = vset.pattern.permute.xlu0 0
        %1835 = vperm.xlu0 %1834, %v964
        %v1836 = vpop.permute.xlu0 %1835
        %1839 = vset.pattern.permute.xlu0 0
        %1840 = vperm.xlu0 %1839, %v965
        %v1841 = vpop.permute.xlu0 %1840
        %1844 = vset.pattern.permute.xlu0 0
        %1845 = vperm.xlu0 %1844, %v966
        %v1846 = vpop.permute.xlu0 %1845
        %1849 = vset.pattern.permute.xlu0 0
        %1850 = vperm.xlu0 %1849, %v967
        %v1851 = vpop.permute.xlu0 %1850
        %1854 = vset.pattern.permute.xlu0 0
        %1855 = vperm.xlu0 %1854, %v968
        %v1856 = vpop.permute.xlu0 %1855
        %1859 = vset.pattern.permute.xlu0 0
        %1860 = vperm.xlu0 %1859, %v969
        %v1861 = vpop.permute.xlu0 %1860
        %1864 = vset.pattern.permute.xlu0 0
        %1865 = vperm.xlu0 %1864, %v970
        %v1866 = vpop.permute.xlu0 %1865
        %1869 = vset.pattern.permute.xlu0 0
        %1870 = vperm.xlu0 %1869, %v971
        %v1871 = vpop.permute.xlu0 %1870
        %vm1873 = vcmp.eq.f32.partialorder %v1709, %v1716
        %vm1874 = vcmp.eq.f32.partialorder %v1710, %v1716
        %vm1875 = vcmp.eq.f32.partialorder %v1709, %v1721
        %vm1876 = vcmp.eq.f32.partialorder %v1710, %v1721
        %vm1877 = vcmp.eq.f32.partialorder %v1709, %v1726
        %vm1878 = vcmp.eq.f32.partialorder %v1710, %v1726
        %vm1879 = vcmp.eq.f32.partialorder %v1709, %v1731
        %vm1880 = vcmp.eq.f32.partialorder %v1710, %v1731
        %vm1881 = vcmp.eq.f32.partialorder %v1709, %v1736
        %vm1882 = vcmp.eq.f32.partialorder %v1710, %v1736
        %vm1883 = vcmp.eq.f32.partialorder %v1709, %v1741
        %vm1884 = vcmp.eq.f32.partialorder %v1710, %v1741
        %vm1885 = vcmp.eq.f32.partialorder %v1709, %v1746
        %vm1886 = vcmp.eq.f32.partialorder %v1710, %v1746
        %vm1887 = vcmp.eq.f32.partialorder %v1709, %v1751
        %vm1888 = vcmp.eq.f32.partialorder %v1710, %v1751
        %vm1889 = vcmp.eq.f32.partialorder %v1709, %v1756
        %vm1890 = vcmp.eq.f32.partialorder %v1710, %v1756
        %vm1891 = vcmp.eq.f32.partialorder %v1709, %v1761
        %vm1892 = vcmp.eq.f32.partialorder %v1710, %v1761
        %vm1893 = vcmp.eq.f32.partialorder %v1709, %v1766
        %vm1894 = vcmp.eq.f32.partialorder %v1710, %v1766
        %vm1895 = vcmp.eq.f32.partialorder %v1709, %v1771
        %vm1896 = vcmp.eq.f32.partialorder %v1710, %v1771
        %vm1897 = vcmp.eq.f32.partialorder %v1709, %v1776
        %vm1898 = vcmp.eq.f32.partialorder %v1710, %v1776
        %vm1899 = vcmp.eq.f32.partialorder %v1709, %v1781
        %vm1900 = vcmp.eq.f32.partialorder %v1710, %v1781
        %vm1901 = vcmp.eq.f32.partialorder %v1709, %v1786
        %vm1902 = vcmp.eq.f32.partialorder %v1710, %v1786
        %vm1903 = vcmp.eq.f32.partialorder %v1709, %v1791
        %vm1904 = vcmp.eq.f32.partialorder %v1710, %v1791
        %vm1905 = vcmp.eq.f32.partialorder %v1709, %v1796
        %vm1906 = vcmp.eq.f32.partialorder %v1710, %v1796
        %vm1907 = vcmp.eq.f32.partialorder %v1709, %v1801
        %vm1908 = vcmp.eq.f32.partialorder %v1710, %v1801
        %vm1909 = vcmp.eq.f32.partialorder %v1709, %v1806
        %vm1910 = vcmp.eq.f32.partialorder %v1710, %v1806
        %vm1911 = vcmp.eq.f32.partialorder %v1709, %v1811
        %vm1912 = vcmp.eq.f32.partialorder %v1710, %v1811
        %vm1913 = vcmp.eq.f32.partialorder %v1709, %v1816
        %vm1914 = vcmp.eq.f32.partialorder %v1710, %v1816
        %vm1915 = vcmp.eq.f32.partialorder %v1709, %v1821
        %vm1916 = vcmp.eq.f32.partialorder %v1710, %v1821
        %vm1917 = vcmp.eq.f32.partialorder %v1709, %v1826
        %vm1918 = vcmp.eq.f32.partialorder %v1710, %v1826
        %vm1919 = vcmp.eq.f32.partialorder %v1709, %v1831
        %vm1920 = vcmp.eq.f32.partialorder %v1710, %v1831
        %vm1921 = vcmp.eq.f32.partialorder %v1709, %v1836
        %vm1922 = vcmp.eq.f32.partialorder %v1710, %v1836
        %vm1923 = vcmp.eq.f32.partialorder %v1709, %v1841
        %vm1924 = vcmp.eq.f32.partialorder %v1710, %v1841
        %vm1925 = vcmp.eq.f32.partialorder %v1709, %v1846
        %vm1926 = vcmp.eq.f32.partialorder %v1710, %v1846
        %vm1927 = vcmp.eq.f32.partialorder %v1709, %v1851
        %vm1928 = vcmp.eq.f32.partialorder %v1710, %v1851
        %vm1929 = vcmp.eq.f32.partialorder %v1709, %v1856
        %vm1930 = vcmp.eq.f32.partialorder %v1710, %v1856
        %vm1931 = vcmp.eq.f32.partialorder %v1709, %v1861
        %vm1932 = vcmp.eq.f32.partialorder %v1710, %v1861
        %vm1933 = vcmp.eq.f32.partialorder %v1709, %v1866
        %vm1934 = vcmp.eq.f32.partialorder %v1710, %v1866
        %vm1935 = vcmp.eq.f32.partialorder %v1709, %v1871
        %vm1936 = vcmp.eq.f32.partialorder %v1710, %v1871
        %1938 = vset.pattern.permute.xlu0 0
        %1939 = vperm.xlu0 %1938, %v1292
        %v1940 = vpop.permute.xlu0 %1939
        %1943 = vset.pattern.permute.xlu0 0
        %1944 = vperm.xlu0 %1943, %v1293
        %v1945 = vpop.permute.xlu0 %1944
        %1948 = vset.pattern.permute.xlu0 0
        %1949 = vperm.xlu0 %1948, %v1294
        %v1950 = vpop.permute.xlu0 %1949
        %1953 = vset.pattern.permute.xlu0 0
        %1954 = vperm.xlu0 %1953, %v1295
        %v1955 = vpop.permute.xlu0 %1954
        %1958 = vset.pattern.permute.xlu0 0
        %1959 = vperm.xlu0 %1958, %v1296
        %v1960 = vpop.permute.xlu0 %1959
        %1963 = vset.pattern.permute.xlu0 0
        %1964 = vperm.xlu0 %1963, %v1297
        %v1965 = vpop.permute.xlu0 %1964
        %1968 = vset.pattern.permute.xlu0 0
        %1969 = vperm.xlu0 %1968, %v1298
        %v1970 = vpop.permute.xlu0 %1969
        %1973 = vset.pattern.permute.xlu0 0
        %1974 = vperm.xlu0 %1973, %v1299
        %v1975 = vpop.permute.xlu0 %1974
        %1978 = vset.pattern.permute.xlu0 0
        %1979 = vperm.xlu0 %1978, %v1300
        %v1980 = vpop.permute.xlu0 %1979
        %1983 = vset.pattern.permute.xlu0 0
        %1984 = vperm.xlu0 %1983, %v1301
        %v1985 = vpop.permute.xlu0 %1984
        %1988 = vset.pattern.permute.xlu0 0
        %1989 = vperm.xlu0 %1988, %v1302
        %v1990 = vpop.permute.xlu0 %1989
        %1993 = vset.pattern.permute.xlu0 0
        %1994 = vperm.xlu0 %1993, %v1303
        %v1995 = vpop.permute.xlu0 %1994
        %1998 = vset.pattern.permute.xlu0 0
        %1999 = vperm.xlu0 %1998, %v1304
        %v2000 = vpop.permute.xlu0 %1999
        %2003 = vset.pattern.permute.xlu0 0
        %2004 = vperm.xlu0 %2003, %v1305
        %v2005 = vpop.permute.xlu0 %2004
        %2008 = vset.pattern.permute.xlu0 0
        %2009 = vperm.xlu0 %2008, %v1306
        %v2010 = vpop.permute.xlu0 %2009
        %2013 = vset.pattern.permute.xlu0 0
        %2014 = vperm.xlu0 %2013, %v1307
        %v2015 = vpop.permute.xlu0 %2014
        %2018 = vset.pattern.permute.xlu0 0
        %2019 = vperm.xlu0 %2018, %v1308
        %v2020 = vpop.permute.xlu0 %2019
        %2023 = vset.pattern.permute.xlu0 0
        %2024 = vperm.xlu0 %2023, %v1309
        %v2025 = vpop.permute.xlu0 %2024
        %2028 = vset.pattern.permute.xlu0 0
        %2029 = vperm.xlu0 %2028, %v1310
        %v2030 = vpop.permute.xlu0 %2029
        %2033 = vset.pattern.permute.xlu0 0
        %2034 = vperm.xlu0 %2033, %v1311
        %v2035 = vpop.permute.xlu0 %2034
        %2038 = vset.pattern.permute.xlu0 0
        %2039 = vperm.xlu0 %2038, %v1312
        %v2040 = vpop.permute.xlu0 %2039
        %2043 = vset.pattern.permute.xlu0 0
        %2044 = vperm.xlu0 %2043, %v1313
        %v2045 = vpop.permute.xlu0 %2044
        %2048 = vset.pattern.permute.xlu0 0
        %2049 = vperm.xlu0 %2048, %v1314
        %v2050 = vpop.permute.xlu0 %2049
        %2053 = vset.pattern.permute.xlu0 0
        %2054 = vperm.xlu0 %2053, %v1315
        %v2055 = vpop.permute.xlu0 %2054
        %2058 = vset.pattern.permute.xlu0 0
        %2059 = vperm.xlu0 %2058, %v1316
        %v2060 = vpop.permute.xlu0 %2059
        %2063 = vset.pattern.permute.xlu0 0
        %2064 = vperm.xlu0 %2063, %v1317
        %v2065 = vpop.permute.xlu0 %2064
        %2068 = vset.pattern.permute.xlu0 0
        %2069 = vperm.xlu0 %2068, %v1318
        %v2070 = vpop.permute.xlu0 %2069
        %2073 = vset.pattern.permute.xlu0 0
        %2074 = vperm.xlu0 %2073, %v1319
        %v2075 = vpop.permute.xlu0 %2074
        %2078 = vset.pattern.permute.xlu0 0
        %2079 = vperm.xlu0 %2078, %v1320
        %v2080 = vpop.permute.xlu0 %2079
        %2083 = vset.pattern.permute.xlu0 0
        %2084 = vperm.xlu0 %2083, %v1321
        %v2085 = vpop.permute.xlu0 %2084
        %2088 = vset.pattern.permute.xlu0 0
        %2089 = vperm.xlu0 %2088, %v1322
        %v2090 = vpop.permute.xlu0 %2089
        %2093 = vset.pattern.permute.xlu0 0
        %2094 = vperm.xlu0 %2093, %v1323
        %v2095 = vpop.permute.xlu0 %2094
        %v2097 = vsel %vm1873, %v1940, 0.0
        %v2098 = vsel %vm1874, %v1940, 0.0
        %v2099 = vsel %vm1875, %v1945, 0.0
        %v2100 = vsel %vm1876, %v1945, 0.0
        %v2101 = vsel %vm1877, %v1950, 0.0
        %v2102 = vsel %vm1878, %v1950, 0.0
        %v2103 = vsel %vm1879, %v1955, 0.0
        %v2104 = vsel %vm1880, %v1955, 0.0
        %v2105 = vsel %vm1881, %v1960, 0.0
        %v2106 = vsel %vm1882, %v1960, 0.0
        %v2107 = vsel %vm1883, %v1965, 0.0
        %v2108 = vsel %vm1884, %v1965, 0.0
        %v2109 = vsel %vm1885, %v1970, 0.0
        %v2110 = vsel %vm1886, %v1970, 0.0
        %v2111 = vsel %vm1887, %v1975, 0.0
        %v2112 = vsel %vm1888, %v1975, 0.0
        %v2113 = vsel %vm1889, %v1980, 0.0
        %v2114 = vsel %vm1890, %v1980, 0.0
        %v2115 = vsel %vm1891, %v1985, 0.0
        %v2116 = vsel %vm1892, %v1985, 0.0
        %v2117 = vsel %vm1893, %v1990, 0.0
        %v2118 = vsel %vm1894, %v1990, 0.0
        %v2119 = vsel %vm1895, %v1995, 0.0
        %v2120 = vsel %vm1896, %v1995, 0.0
        %v2121 = vsel %vm1897, %v2000, 0.0
        %v2122 = vsel %vm1898, %v2000, 0.0
        %v2123 = vsel %vm1899, %v2005, 0.0
        %v2124 = vsel %vm1900, %v2005, 0.0
        %v2125 = vsel %vm1901, %v2010, 0.0
        %v2126 = vsel %vm1902, %v2010, 0.0
        %v2127 = vsel %vm1903, %v2015, 0.0
        %v2128 = vsel %vm1904, %v2015, 0.0
        %v2129 = vsel %vm1905, %v2020, 0.0
        %v2130 = vsel %vm1906, %v2020, 0.0
        %v2131 = vsel %vm1907, %v2025, 0.0
        %v2132 = vsel %vm1908, %v2025, 0.0
        %v2133 = vsel %vm1909, %v2030, 0.0
        %v2134 = vsel %vm1910, %v2030, 0.0
        %v2135 = vsel %vm1911, %v2035, 0.0
        %v2136 = vsel %vm1912, %v2035, 0.0
        %v2137 = vsel %vm1913, %v2040, 0.0
        %v2138 = vsel %vm1914, %v2040, 0.0
        %v2139 = vsel %vm1915, %v2045, 0.0
        %v2140 = vsel %vm1916, %v2045, 0.0
        %v2141 = vsel %vm1917, %v2050, 0.0
        %v2142 = vsel %vm1918, %v2050, 0.0
        %v2143 = vsel %vm1919, %v2055, 0.0
        %v2144 = vsel %vm1920, %v2055, 0.0
        %v2145 = vsel %vm1921, %v2060, 0.0
        %v2146 = vsel %vm1922, %v2060, 0.0
        %v2147 = vsel %vm1923, %v2065, 0.0
        %v2148 = vsel %vm1924, %v2065, 0.0
        %v2149 = vsel %vm1925, %v2070, 0.0
        %v2150 = vsel %vm1926, %v2070, 0.0
        %v2151 = vsel %vm1927, %v2075, 0.0
        %v2152 = vsel %vm1928, %v2075, 0.0
        %v2153 = vsel %vm1929, %v2080, 0.0
        %v2154 = vsel %vm1930, %v2080, 0.0
        %v2155 = vsel %vm1931, %v2085, 0.0
        %v2156 = vsel %vm1932, %v2085, 0.0
        %v2157 = vsel %vm1933, %v2090, 0.0
        %v2158 = vsel %vm1934, %v2090, 0.0
        %v2159 = vsel %vm1935, %v2095, 0.0
        %v2160 = vsel %vm1936, %v2095, 0.0
        %2162 = vset.pattern.permute.xlu0 0
        %2163 = vperm.xlu0 %2162, %v972
        %v2164 = vpop.permute.xlu0 %2163
        %2167 = vset.pattern.permute.xlu0 0
        %2168 = vperm.xlu0 %2167, %v973
        %v2169 = vpop.permute.xlu0 %2168
        %2172 = vset.pattern.permute.xlu0 0
        %2173 = vperm.xlu0 %2172, %v974
        %v2174 = vpop.permute.xlu0 %2173
        %2177 = vset.pattern.permute.xlu0 0
        %2178 = vperm.xlu0 %2177, %v975
        %v2179 = vpop.permute.xlu0 %2178
        %2182 = vset.pattern.permute.xlu0 0
        %2183 = vperm.xlu0 %2182, %v976
        %v2184 = vpop.permute.xlu0 %2183
        %2187 = vset.pattern.permute.xlu0 0
        %2188 = vperm.xlu0 %2187, %v977
        %v2189 = vpop.permute.xlu0 %2188
        %2192 = vset.pattern.permute.xlu0 0
        %2193 = vperm.xlu0 %2192, %v978
        %v2194 = vpop.permute.xlu0 %2193
        %2197 = vset.pattern.permute.xlu0 0
        %2198 = vperm.xlu0 %2197, %v979
        %v2199 = vpop.permute.xlu0 %2198
        %2202 = vset.pattern.permute.xlu0 0
        %2203 = vperm.xlu0 %2202, %v980
        %v2204 = vpop.permute.xlu0 %2203
        %2207 = vset.pattern.permute.xlu0 0
        %2208 = vperm.xlu0 %2207, %v981
        %v2209 = vpop.permute.xlu0 %2208
        %2212 = vset.pattern.permute.xlu0 0
        %2213 = vperm.xlu0 %2212, %v982
        %v2214 = vpop.permute.xlu0 %2213
        %2217 = vset.pattern.permute.xlu0 0
        %2218 = vperm.xlu0 %2217, %v983
        %v2219 = vpop.permute.xlu0 %2218
        %2222 = vset.pattern.permute.xlu0 0
        %2223 = vperm.xlu0 %2222, %v984
        %v2224 = vpop.permute.xlu0 %2223
        %2227 = vset.pattern.permute.xlu0 0
        %2228 = vperm.xlu0 %2227, %v985
        %v2229 = vpop.permute.xlu0 %2228
        %2232 = vset.pattern.permute.xlu0 0
        %2233 = vperm.xlu0 %2232, %v986
        %v2234 = vpop.permute.xlu0 %2233
        %2237 = vset.pattern.permute.xlu0 0
        %2238 = vperm.xlu0 %2237, %v987
        %v2239 = vpop.permute.xlu0 %2238
        %2242 = vset.pattern.permute.xlu0 0
        %2243 = vperm.xlu0 %2242, %v988
        %v2244 = vpop.permute.xlu0 %2243
        %2247 = vset.pattern.permute.xlu0 0
        %2248 = vperm.xlu0 %2247, %v989
        %v2249 = vpop.permute.xlu0 %2248
        %2252 = vset.pattern.permute.xlu0 0
        %2253 = vperm.xlu0 %2252, %v990
        %v2254 = vpop.permute.xlu0 %2253
        %2257 = vset.pattern.permute.xlu0 0
        %2258 = vperm.xlu0 %2257, %v991
        %v2259 = vpop.permute.xlu0 %2258
        %2262 = vset.pattern.permute.xlu0 0
        %2263 = vperm.xlu0 %2262, %v992
        %v2264 = vpop.permute.xlu0 %2263
        %2267 = vset.pattern.permute.xlu0 0
        %2268 = vperm.xlu0 %2267, %v993
        %v2269 = vpop.permute.xlu0 %2268
        %2272 = vset.pattern.permute.xlu0 0
        %2273 = vperm.xlu0 %2272, %v994
        %v2274 = vpop.permute.xlu0 %2273
        %2277 = vset.pattern.permute.xlu0 0
        %2278 = vperm.xlu0 %2277, %v995
        %v2279 = vpop.permute.xlu0 %2278
        %2282 = vset.pattern.permute.xlu0 0
        %2283 = vperm.xlu0 %2282, %v996
        %v2284 = vpop.permute.xlu0 %2283
        %2287 = vset.pattern.permute.xlu0 0
        %2288 = vperm.xlu0 %2287, %v997
        %v2289 = vpop.permute.xlu0 %2288
        %2292 = vset.pattern.permute.xlu0 0
        %2293 = vperm.xlu0 %2292, %v998
        %v2294 = vpop.permute.xlu0 %2293
        %2297 = vset.pattern.permute.xlu0 0
        %2298 = vperm.xlu0 %2297, %v999
        %v2299 = vpop.permute.xlu0 %2298
        %2302 = vset.pattern.permute.xlu0 0
        %2303 = vperm.xlu0 %2302, %v1000
        %v2304 = vpop.permute.xlu0 %2303
        %2307 = vset.pattern.permute.xlu0 0
        %2308 = vperm.xlu0 %2307, %v1001
        %v2309 = vpop.permute.xlu0 %2308
        %2312 = vset.pattern.permute.xlu0 0
        %2313 = vperm.xlu0 %2312, %v1002
        %v2314 = vpop.permute.xlu0 %2313
        %2317 = vset.pattern.permute.xlu0 0
        %2318 = vperm.xlu0 %2317, %v1003
        %v2319 = vpop.permute.xlu0 %2318
        %vm2321 = vcmp.eq.f32.partialorder %v1709, %v2164
        %vm2322 = vcmp.eq.f32.partialorder %v1710, %v2164
        %vm2323 = vcmp.eq.f32.partialorder %v1709, %v2169
        %vm2324 = vcmp.eq.f32.partialorder %v1710, %v2169
        %vm2325 = vcmp.eq.f32.partialorder %v1709, %v2174
        %vm2326 = vcmp.eq.f32.partialorder %v1710, %v2174
        %vm2327 = vcmp.eq.f32.partialorder %v1709, %v2179
        %vm2328 = vcmp.eq.f32.partialorder %v1710, %v2179
        %vm2329 = vcmp.eq.f32.partialorder %v1709, %v2184
        %vm2330 = vcmp.eq.f32.partialorder %v1710, %v2184
        %vm2331 = vcmp.eq.f32.partialorder %v1709, %v2189
        %vm2332 = vcmp.eq.f32.partialorder %v1710, %v2189
        %vm2333 = vcmp.eq.f32.partialorder %v1709, %v2194
        %vm2334 = vcmp.eq.f32.partialorder %v1710, %v2194
        %vm2335 = vcmp.eq.f32.partialorder %v1709, %v2199
        %vm2336 = vcmp.eq.f32.partialorder %v1710, %v2199
        %vm2337 = vcmp.eq.f32.partialorder %v1709, %v2204
        %vm2338 = vcmp.eq.f32.partialorder %v1710, %v2204
        %vm2339 = vcmp.eq.f32.partialorder %v1709, %v2209
        %vm2340 = vcmp.eq.f32.partialorder %v1710, %v2209
        %vm2341 = vcmp.eq.f32.partialorder %v1709, %v2214
        %vm2342 = vcmp.eq.f32.partialorder %v1710, %v2214
        %vm2343 = vcmp.eq.f32.partialorder %v1709, %v2219
        %vm2344 = vcmp.eq.f32.partialorder %v1710, %v2219
        %vm2345 = vcmp.eq.f32.partialorder %v1709, %v2224
        %vm2346 = vcmp.eq.f32.partialorder %v1710, %v2224
        %vm2347 = vcmp.eq.f32.partialorder %v1709, %v2229
        %vm2348 = vcmp.eq.f32.partialorder %v1710, %v2229
        %vm2349 = vcmp.eq.f32.partialorder %v1709, %v2234
        %vm2350 = vcmp.eq.f32.partialorder %v1710, %v2234
        %vm2351 = vcmp.eq.f32.partialorder %v1709, %v2239
        %vm2352 = vcmp.eq.f32.partialorder %v1710, %v2239
        %vm2353 = vcmp.eq.f32.partialorder %v1709, %v2244
        %vm2354 = vcmp.eq.f32.partialorder %v1710, %v2244
        %vm2355 = vcmp.eq.f32.partialorder %v1709, %v2249
        %vm2356 = vcmp.eq.f32.partialorder %v1710, %v2249
        %vm2357 = vcmp.eq.f32.partialorder %v1709, %v2254
        %vm2358 = vcmp.eq.f32.partialorder %v1710, %v2254
        %vm2359 = vcmp.eq.f32.partialorder %v1709, %v2259
        %vm2360 = vcmp.eq.f32.partialorder %v1710, %v2259
        %vm2361 = vcmp.eq.f32.partialorder %v1709, %v2264
        %vm2362 = vcmp.eq.f32.partialorder %v1710, %v2264
        %vm2363 = vcmp.eq.f32.partialorder %v1709, %v2269
        %vm2364 = vcmp.eq.f32.partialorder %v1710, %v2269
        %vm2365 = vcmp.eq.f32.partialorder %v1709, %v2274
        %vm2366 = vcmp.eq.f32.partialorder %v1710, %v2274
        %vm2367 = vcmp.eq.f32.partialorder %v1709, %v2279
        %vm2368 = vcmp.eq.f32.partialorder %v1710, %v2279
        %vm2369 = vcmp.eq.f32.partialorder %v1709, %v2284
        %vm2370 = vcmp.eq.f32.partialorder %v1710, %v2284
        %vm2371 = vcmp.eq.f32.partialorder %v1709, %v2289
        %vm2372 = vcmp.eq.f32.partialorder %v1710, %v2289
        %vm2373 = vcmp.eq.f32.partialorder %v1709, %v2294
        %vm2374 = vcmp.eq.f32.partialorder %v1710, %v2294
        %vm2375 = vcmp.eq.f32.partialorder %v1709, %v2299
        %vm2376 = vcmp.eq.f32.partialorder %v1710, %v2299
        %vm2377 = vcmp.eq.f32.partialorder %v1709, %v2304
        %vm2378 = vcmp.eq.f32.partialorder %v1710, %v2304
        %vm2379 = vcmp.eq.f32.partialorder %v1709, %v2309
        %vm2380 = vcmp.eq.f32.partialorder %v1710, %v2309
        %vm2381 = vcmp.eq.f32.partialorder %v1709, %v2314
        %vm2382 = vcmp.eq.f32.partialorder %v1710, %v2314
        %vm2383 = vcmp.eq.f32.partialorder %v1709, %v2319
        %vm2384 = vcmp.eq.f32.partialorder %v1710, %v2319
        %2386 = vset.pattern.permute.xlu0 0
        %2387 = vperm.xlu0 %2386, %v1420
        %v2388 = vpop.permute.xlu0 %2387
        %2391 = vset.pattern.permute.xlu0 0
        %2392 = vperm.xlu0 %2391, %v1421
        %v2393 = vpop.permute.xlu0 %2392
        %2396 = vset.pattern.permute.xlu0 0
        %2397 = vperm.xlu0 %2396, %v1422
        %v2398 = vpop.permute.xlu0 %2397
        %2401 = vset.pattern.permute.xlu0 0
        %2402 = vperm.xlu0 %2401, %v1423
        %v2403 = vpop.permute.xlu0 %2402
        %2406 = vset.pattern.permute.xlu0 0
        %2407 = vperm.xlu0 %2406, %v1424
        %v2408 = vpop.permute.xlu0 %2407
        %2411 = vset.pattern.permute.xlu0 0
        %2412 = vperm.xlu0 %2411, %v1425
        %v2413 = vpop.permute.xlu0 %2412
        %2416 = vset.pattern.permute.xlu0 0
        %2417 = vperm.xlu0 %2416, %v1426
        %v2418 = vpop.permute.xlu0 %2417
        %2421 = vset.pattern.permute.xlu0 0
        %2422 = vperm.xlu0 %2421, %v1427
        %v2423 = vpop.permute.xlu0 %2422
        %2426 = vset.pattern.permute.xlu0 0
        %2427 = vperm.xlu0 %2426, %v1428
        %v2428 = vpop.permute.xlu0 %2427
        %2431 = vset.pattern.permute.xlu0 0
        %2432 = vperm.xlu0 %2431, %v1429
        %v2433 = vpop.permute.xlu0 %2432
        %2436 = vset.pattern.permute.xlu0 0
        %2437 = vperm.xlu0 %2436, %v1430
        %v2438 = vpop.permute.xlu0 %2437
        %2441 = vset.pattern.permute.xlu0 0
        %2442 = vperm.xlu0 %2441, %v1431
        %v2443 = vpop.permute.xlu0 %2442
        %2446 = vset.pattern.permute.xlu0 0
        %2447 = vperm.xlu0 %2446, %v1432
        %v2448 = vpop.permute.xlu0 %2447
        %2451 = vset.pattern.permute.xlu0 0
        %2452 = vperm.xlu0 %2451, %v1433
        %v2453 = vpop.permute.xlu0 %2452
        %2456 = vset.pattern.permute.xlu0 0
        %2457 = vperm.xlu0 %2456, %v1434
        %v2458 = vpop.permute.xlu0 %2457
        %2461 = vset.pattern.permute.xlu0 0
        %2462 = vperm.xlu0 %2461, %v1435
        %v2463 = vpop.permute.xlu0 %2462
        %2466 = vset.pattern.permute.xlu0 0
        %2467 = vperm.xlu0 %2466, %v1436
        %v2468 = vpop.permute.xlu0 %2467
        %2471 = vset.pattern.permute.xlu0 0
        %2472 = vperm.xlu0 %2471, %v1437
        %v2473 = vpop.permute.xlu0 %2472
        %2476 = vset.pattern.permute.xlu0 0
        %2477 = vperm.xlu0 %2476, %v1438
        %v2478 = vpop.permute.xlu0 %2477
        %2481 = vset.pattern.permute.xlu0 0
        %2482 = vperm.xlu0 %2481, %v1439
        %v2483 = vpop.permute.xlu0 %2482
        %2486 = vset.pattern.permute.xlu0 0
        %2487 = vperm.xlu0 %2486, %v1440
        %v2488 = vpop.permute.xlu0 %2487
        %2491 = vset.pattern.permute.xlu0 0
        %2492 = vperm.xlu0 %2491, %v1441
        %v2493 = vpop.permute.xlu0 %2492
        %2496 = vset.pattern.permute.xlu0 0
        %2497 = vperm.xlu0 %2496, %v1442
        %v2498 = vpop.permute.xlu0 %2497
        %2501 = vset.pattern.permute.xlu0 0
        %2502 = vperm.xlu0 %2501, %v1443
        %v2503 = vpop.permute.xlu0 %2502
        %2506 = vset.pattern.permute.xlu0 0
        %2507 = vperm.xlu0 %2506, %v1444
        %v2508 = vpop.permute.xlu0 %2507
        %2511 = vset.pattern.permute.xlu0 0
        %2512 = vperm.xlu0 %2511, %v1445
        %v2513 = vpop.permute.xlu0 %2512
        %2516 = vset.pattern.permute.xlu0 0
        %2517 = vperm.xlu0 %2516, %v1446
        %v2518 = vpop.permute.xlu0 %2517
        %2521 = vset.pattern.permute.xlu0 0
        %2522 = vperm.xlu0 %2521, %v1447
        %v2523 = vpop.permute.xlu0 %2522
        %2526 = vset.pattern.permute.xlu0 0
        %2527 = vperm.xlu0 %2526, %v1448
        %v2528 = vpop.permute.xlu0 %2527
        %2531 = vset.pattern.permute.xlu0 0
        %2532 = vperm.xlu0 %2531, %v1449
        %v2533 = vpop.permute.xlu0 %2532
        %2536 = vset.pattern.permute.xlu0 0
        %2537 = vperm.xlu0 %2536, %v1450
        %v2538 = vpop.permute.xlu0 %2537
        %2541 = vset.pattern.permute.xlu0 0
        %2542 = vperm.xlu0 %2541, %v1451
        %v2543 = vpop.permute.xlu0 %2542
        %v2545 = vsel %vm2321, %v2388, 0.0
        %v2546 = vsel %vm2322, %v2388, 0.0
        %v2547 = vsel %vm2323, %v2393, 0.0
        %v2548 = vsel %vm2324, %v2393, 0.0
        %v2549 = vsel %vm2325, %v2398, 0.0
        %v2550 = vsel %vm2326, %v2398, 0.0
        %v2551 = vsel %vm2327, %v2403, 0.0
        %v2552 = vsel %vm2328, %v2403, 0.0
        %v2553 = vsel %vm2329, %v2408, 0.0
        %v2554 = vsel %vm2330, %v2408, 0.0
        %v2555 = vsel %vm2331, %v2413, 0.0
        %v2556 = vsel %vm2332, %v2413, 0.0
        %v2557 = vsel %vm2333, %v2418, 0.0
        %v2558 = vsel %vm2334, %v2418, 0.0
        %v2559 = vsel %vm2335, %v2423, 0.0
        %v2560 = vsel %vm2336, %v2423, 0.0
        %v2561 = vsel %vm2337, %v2428, 0.0
        %v2562 = vsel %vm2338, %v2428, 0.0
        %v2563 = vsel %vm2339, %v2433, 0.0
        %v2564 = vsel %vm2340, %v2433, 0.0
        %v2565 = vsel %vm2341, %v2438, 0.0
        %v2566 = vsel %vm2342, %v2438, 0.0
        %v2567 = vsel %vm2343, %v2443, 0.0
        %v2568 = vsel %vm2344, %v2443, 0.0
        %v2569 = vsel %vm2345, %v2448, 0.0
        %v2570 = vsel %vm2346, %v2448, 0.0
        %v2571 = vsel %vm2347, %v2453, 0.0
        %v2572 = vsel %vm2348, %v2453, 0.0
        %v2573 = vsel %vm2349, %v2458, 0.0
        %v2574 = vsel %vm2350, %v2458, 0.0
        %v2575 = vsel %vm2351, %v2463, 0.0
        %v2576 = vsel %vm2352, %v2463, 0.0
        %v2577 = vsel %vm2353, %v2468, 0.0
        %v2578 = vsel %vm2354, %v2468, 0.0
        %v2579 = vsel %vm2355, %v2473, 0.0
        %v2580 = vsel %vm2356, %v2473, 0.0
        %v2581 = vsel %vm2357, %v2478, 0.0
        %v2582 = vsel %vm2358, %v2478, 0.0
        %v2583 = vsel %vm2359, %v2483, 0.0
        %v2584 = vsel %vm2360, %v2483, 0.0
        %v2585 = vsel %vm2361, %v2488, 0.0
        %v2586 = vsel %vm2362, %v2488, 0.0
        %v2587 = vsel %vm2363, %v2493, 0.0
        %v2588 = vsel %vm2364, %v2493, 0.0
        %v2589 = vsel %vm2365, %v2498, 0.0
        %v2590 = vsel %vm2366, %v2498, 0.0
        %v2591 = vsel %vm2367, %v2503, 0.0
        %v2592 = vsel %vm2368, %v2503, 0.0
        %v2593 = vsel %vm2369, %v2508, 0.0
        %v2594 = vsel %vm2370, %v2508, 0.0
        %v2595 = vsel %vm2371, %v2513, 0.0
        %v2596 = vsel %vm2372, %v2513, 0.0
        %v2597 = vsel %vm2373, %v2518, 0.0
        %v2598 = vsel %vm2374, %v2518, 0.0
        %v2599 = vsel %vm2375, %v2523, 0.0
        %v2600 = vsel %vm2376, %v2523, 0.0
        %v2601 = vsel %vm2377, %v2528, 0.0
        %v2602 = vsel %vm2378, %v2528, 0.0
        %v2603 = vsel %vm2379, %v2533, 0.0
        %v2604 = vsel %vm2380, %v2533, 0.0
        %v2605 = vsel %vm2381, %v2538, 0.0
        %v2606 = vsel %vm2382, %v2538, 0.0
        %v2607 = vsel %vm2383, %v2543, 0.0
        %v2608 = vsel %vm2384, %v2543, 0.0
        %v2609 = vadd.f32 %v2097, %v2545
        %v2610 = vadd.f32 %v2098, %v2546
        %v2611 = vadd.f32 %v2099, %v2547
        %v2612 = vadd.f32 %v2100, %v2548
        %v2613 = vadd.f32 %v2101, %v2549
        %v2614 = vadd.f32 %v2102, %v2550
        %v2615 = vadd.f32 %v2103, %v2551
        %v2616 = vadd.f32 %v2104, %v2552
        %v2617 = vadd.f32 %v2105, %v2553
        %v2618 = vadd.f32 %v2106, %v2554
        %v2619 = vadd.f32 %v2107, %v2555
        %v2620 = vadd.f32 %v2108, %v2556
        %v2621 = vadd.f32 %v2109, %v2557
        %v2622 = vadd.f32 %v2110, %v2558
        %v2623 = vadd.f32 %v2111, %v2559
        %v2624 = vadd.f32 %v2112, %v2560
        %v2625 = vadd.f32 %v2113, %v2561
        %v2626 = vadd.f32 %v2114, %v2562
        %v2627 = vadd.f32 %v2115, %v2563
        %v2628 = vadd.f32 %v2116, %v2564
        %v2629 = vadd.f32 %v2117, %v2565
        %v2630 = vadd.f32 %v2118, %v2566
        %v2631 = vadd.f32 %v2119, %v2567
        %v2632 = vadd.f32 %v2120, %v2568
        %v2633 = vadd.f32 %v2121, %v2569
        %v2634 = vadd.f32 %v2122, %v2570
        %v2635 = vadd.f32 %v2123, %v2571
        %v2636 = vadd.f32 %v2124, %v2572
        %v2637 = vadd.f32 %v2125, %v2573
        %v2638 = vadd.f32 %v2126, %v2574
        %v2639 = vadd.f32 %v2127, %v2575
        %v2640 = vadd.f32 %v2128, %v2576
        %v2641 = vadd.f32 %v2129, %v2577
        %v2642 = vadd.f32 %v2130, %v2578
        %v2643 = vadd.f32 %v2131, %v2579
        %v2644 = vadd.f32 %v2132, %v2580
        %v2645 = vadd.f32 %v2133, %v2581
        %v2646 = vadd.f32 %v2134, %v2582
        %v2647 = vadd.f32 %v2135, %v2583
        %v2648 = vadd.f32 %v2136, %v2584
        %v2649 = vadd.f32 %v2137, %v2585
        %v2650 = vadd.f32 %v2138, %v2586
        %v2651 = vadd.f32 %v2139, %v2587
        %v2652 = vadd.f32 %v2140, %v2588
        %v2653 = vadd.f32 %v2141, %v2589
        %v2654 = vadd.f32 %v2142, %v2590
        %v2655 = vadd.f32 %v2143, %v2591
        %v2656 = vadd.f32 %v2144, %v2592
        %v2657 = vadd.f32 %v2145, %v2593
        %v2658 = vadd.f32 %v2146, %v2594
        %v2659 = vadd.f32 %v2147, %v2595
        %v2660 = vadd.f32 %v2148, %v2596
        %v2661 = vadd.f32 %v2149, %v2597
        %v2662 = vadd.f32 %v2150, %v2598
        %v2663 = vadd.f32 %v2151, %v2599
        %v2664 = vadd.f32 %v2152, %v2600
        %v2665 = vadd.f32 %v2153, %v2601
        %v2666 = vadd.f32 %v2154, %v2602
        %v2667 = vadd.f32 %v2155, %v2603
        %v2668 = vadd.f32 %v2156, %v2604
        %v2669 = vadd.f32 %v2157, %v2605
        %v2670 = vadd.f32 %v2158, %v2606
        %v2671 = vadd.f32 %v2159, %v2607
        %v2672 = vadd.f32 %v2160, %v2608
        %v2674 = vperm.slane %v249, 0
        %v2675 = vperm.slane %v249, 1
        %2679 = vset.pattern.permute.xlu0 0
        %2680 = vperm.xlu0 %2679, %v1004
        %v2681 = vpop.permute.xlu0 %2680
        %2684 = vset.pattern.permute.xlu0 0
        %2685 = vperm.xlu0 %2684, %v1005
        %v2686 = vpop.permute.xlu0 %2685
        %2689 = vset.pattern.permute.xlu0 0
        %2690 = vperm.xlu0 %2689, %v1006
        %v2691 = vpop.permute.xlu0 %2690
        %2694 = vset.pattern.permute.xlu0 0
        %2695 = vperm.xlu0 %2694, %v1007
        %v2696 = vpop.permute.xlu0 %2695
        %2699 = vset.pattern.permute.xlu0 0
        %2700 = vperm.xlu0 %2699, %v1008
        %v2701 = vpop.permute.xlu0 %2700
        %2704 = vset.pattern.permute.xlu0 0
        %2705 = vperm.xlu0 %2704, %v1009
        %v2706 = vpop.permute.xlu0 %2705
        %2709 = vset.pattern.permute.xlu0 0
        %2710 = vperm.xlu0 %2709, %v1010
        %v2711 = vpop.permute.xlu0 %2710
        %2714 = vset.pattern.permute.xlu0 0
        %2715 = vperm.xlu0 %2714, %v1011
        %v2716 = vpop.permute.xlu0 %2715
        %2719 = vset.pattern.permute.xlu0 0
        %2720 = vperm.xlu0 %2719, %v1012
        %v2721 = vpop.permute.xlu0 %2720
        %2724 = vset.pattern.permute.xlu0 0
        %2725 = vperm.xlu0 %2724, %v1013
        %v2726 = vpop.permute.xlu0 %2725
        %2729 = vset.pattern.permute.xlu0 0
        %2730 = vperm.xlu0 %2729, %v1014
        %v2731 = vpop.permute.xlu0 %2730
        %2734 = vset.pattern.permute.xlu0 0
        %2735 = vperm.xlu0 %2734, %v1015
        %v2736 = vpop.permute.xlu0 %2735
        %2739 = vset.pattern.permute.xlu0 0
        %2740 = vperm.xlu0 %2739, %v1016
        %v2741 = vpop.permute.xlu0 %2740
        %2744 = vset.pattern.permute.xlu0 0
        %2745 = vperm.xlu0 %2744, %v1017
        %v2746 = vpop.permute.xlu0 %2745
        %2749 = vset.pattern.permute.xlu0 0
        %2750 = vperm.xlu0 %2749, %v1018
        %v2751 = vpop.permute.xlu0 %2750
        %2754 = vset.pattern.permute.xlu0 0
        %2755 = vperm.xlu0 %2754, %v1019
        %v2756 = vpop.permute.xlu0 %2755
        %2759 = vset.pattern.permute.xlu0 0
        %2760 = vperm.xlu0 %2759, %v1020
        %v2761 = vpop.permute.xlu0 %2760
        %2764 = vset.pattern.permute.xlu0 0
        %2765 = vperm.xlu0 %2764, %v1021
        %v2766 = vpop.permute.xlu0 %2765
        %2769 = vset.pattern.permute.xlu0 0
        %2770 = vperm.xlu0 %2769, %v1022
        %v2771 = vpop.permute.xlu0 %2770
        %2774 = vset.pattern.permute.xlu0 0
        %2775 = vperm.xlu0 %2774, %v1023
        %v2776 = vpop.permute.xlu0 %2775
        %2779 = vset.pattern.permute.xlu0 0
        %2780 = vperm.xlu0 %2779, %v1024
        %v2781 = vpop.permute.xlu0 %2780
        %2784 = vset.pattern.permute.xlu0 0
        %2785 = vperm.xlu0 %2784, %v1025
        %v2786 = vpop.permute.xlu0 %2785
        %2789 = vset.pattern.permute.xlu0 0
        %2790 = vperm.xlu0 %2789, %v1026
        %v2791 = vpop.permute.xlu0 %2790
        %2794 = vset.pattern.permute.xlu0 0
        %2795 = vperm.xlu0 %2794, %v1027
        %v2796 = vpop.permute.xlu0 %2795
        %2799 = vset.pattern.permute.xlu0 0
        %2800 = vperm.xlu0 %2799, %v1028
        %v2801 = vpop.permute.xlu0 %2800
        %2804 = vset.pattern.permute.xlu0 0
        %2805 = vperm.xlu0 %2804, %v1029
        %v2806 = vpop.permute.xlu0 %2805
        %2809 = vset.pattern.permute.xlu0 0
        %2810 = vperm.xlu0 %2809, %v1030
        %v2811 = vpop.permute.xlu0 %2810
        %2814 = vset.pattern.permute.xlu0 0
        %2815 = vperm.xlu0 %2814, %v1031
        %v2816 = vpop.permute.xlu0 %2815
        %2819 = vset.pattern.permute.xlu0 0
        %2820 = vperm.xlu0 %2819, %v1032
        %v2821 = vpop.permute.xlu0 %2820
        %2824 = vset.pattern.permute.xlu0 0
        %2825 = vperm.xlu0 %2824, %v1033
        %v2826 = vpop.permute.xlu0 %2825
        %2829 = vset.pattern.permute.xlu0 0
        %2830 = vperm.xlu0 %2829, %v1034
        %v2831 = vpop.permute.xlu0 %2830
        %2834 = vset.pattern.permute.xlu0 0
        %2835 = vperm.xlu0 %2834, %v1035
        %v2836 = vpop.permute.xlu0 %2835
        %vm2838 = vcmp.eq.f32.partialorder %v2674, %v2681
        %vm2839 = vcmp.eq.f32.partialorder %v2675, %v2681
        %vm2840 = vcmp.eq.f32.partialorder %v2674, %v2686
        %vm2841 = vcmp.eq.f32.partialorder %v2675, %v2686
        %vm2842 = vcmp.eq.f32.partialorder %v2674, %v2691
        %vm2843 = vcmp.eq.f32.partialorder %v2675, %v2691
        %vm2844 = vcmp.eq.f32.partialorder %v2674, %v2696
        %vm2845 = vcmp.eq.f32.partialorder %v2675, %v2696
        %vm2846 = vcmp.eq.f32.partialorder %v2674, %v2701
        %vm2847 = vcmp.eq.f32.partialorder %v2675, %v2701
        %vm2848 = vcmp.eq.f32.partialorder %v2674, %v2706
        %vm2849 = vcmp.eq.f32.partialorder %v2675, %v2706
        %vm2850 = vcmp.eq.f32.partialorder %v2674, %v2711
        %vm2851 = vcmp.eq.f32.partialorder %v2675, %v2711
        %vm2852 = vcmp.eq.f32.partialorder %v2674, %v2716
        %vm2853 = vcmp.eq.f32.partialorder %v2675, %v2716
        %vm2854 = vcmp.eq.f32.partialorder %v2674, %v2721
        %vm2855 = vcmp.eq.f32.partialorder %v2675, %v2721
        %vm2856 = vcmp.eq.f32.partialorder %v2674, %v2726
        %vm2857 = vcmp.eq.f32.partialorder %v2675, %v2726
        %vm2858 = vcmp.eq.f32.partialorder %v2674, %v2731
        %vm2859 = vcmp.eq.f32.partialorder %v2675, %v2731
        %vm2860 = vcmp.eq.f32.partialorder %v2674, %v2736
        %vm2861 = vcmp.eq.f32.partialorder %v2675, %v2736
        %vm2862 = vcmp.eq.f32.partialorder %v2674, %v2741
        %vm2863 = vcmp.eq.f32.partialorder %v2675, %v2741
        %vm2864 = vcmp.eq.f32.partialorder %v2674, %v2746
        %vm2865 = vcmp.eq.f32.partialorder %v2675, %v2746
        %vm2866 = vcmp.eq.f32.partialorder %v2674, %v2751
        %vm2867 = vcmp.eq.f32.partialorder %v2675, %v2751
        %vm2868 = vcmp.eq.f32.partialorder %v2674, %v2756
        %vm2869 = vcmp.eq.f32.partialorder %v2675, %v2756
        %vm2870 = vcmp.eq.f32.partialorder %v2674, %v2761
        %vm2871 = vcmp.eq.f32.partialorder %v2675, %v2761
        %vm2872 = vcmp.eq.f32.partialorder %v2674, %v2766
        %vm2873 = vcmp.eq.f32.partialorder %v2675, %v2766
        %vm2874 = vcmp.eq.f32.partialorder %v2674, %v2771
        %vm2875 = vcmp.eq.f32.partialorder %v2675, %v2771
        %vm2876 = vcmp.eq.f32.partialorder %v2674, %v2776
        %vm2877 = vcmp.eq.f32.partialorder %v2675, %v2776
        %vm2878 = vcmp.eq.f32.partialorder %v2674, %v2781
        %vm2879 = vcmp.eq.f32.partialorder %v2675, %v2781
        %vm2880 = vcmp.eq.f32.partialorder %v2674, %v2786
        %vm2881 = vcmp.eq.f32.partialorder %v2675, %v2786
        %vm2882 = vcmp.eq.f32.partialorder %v2674, %v2791
        %vm2883 = vcmp.eq.f32.partialorder %v2675, %v2791
        %vm2884 = vcmp.eq.f32.partialorder %v2674, %v2796
        %vm2885 = vcmp.eq.f32.partialorder %v2675, %v2796
        %vm2886 = vcmp.eq.f32.partialorder %v2674, %v2801
        %vm2887 = vcmp.eq.f32.partialorder %v2675, %v2801
        %vm2888 = vcmp.eq.f32.partialorder %v2674, %v2806
        %vm2889 = vcmp.eq.f32.partialorder %v2675, %v2806
        %vm2890 = vcmp.eq.f32.partialorder %v2674, %v2811
        %vm2891 = vcmp.eq.f32.partialorder %v2675, %v2811
        %vm2892 = vcmp.eq.f32.partialorder %v2674, %v2816
        %vm2893 = vcmp.eq.f32.partialorder %v2675, %v2816
        %vm2894 = vcmp.eq.f32.partialorder %v2674, %v2821
        %vm2895 = vcmp.eq.f32.partialorder %v2675, %v2821
        %vm2896 = vcmp.eq.f32.partialorder %v2674, %v2826
        %vm2897 = vcmp.eq.f32.partialorder %v2675, %v2826
        %vm2898 = vcmp.eq.f32.partialorder %v2674, %v2831
        %vm2899 = vcmp.eq.f32.partialorder %v2675, %v2831
        %vm2900 = vcmp.eq.f32.partialorder %v2674, %v2836
        %vm2901 = vcmp.eq.f32.partialorder %v2675, %v2836
        %2903 = vset.pattern.permute.xlu0 0
        %2904 = vperm.xlu0 %2903, %v1548
        %v2905 = vpop.permute.xlu0 %2904
        %2908 = vset.pattern.permute.xlu0 0
        %2909 = vperm.xlu0 %2908, %v1549
        %v2910 = vpop.permute.xlu0 %2909
        %2913 = vset.pattern.permute.xlu0 0
        %2914 = vperm.xlu0 %2913, %v1550
        %v2915 = vpop.permute.xlu0 %2914
        %2918 = vset.pattern.permute.xlu0 0
        %2919 = vperm.xlu0 %2918, %v1551
        %v2920 = vpop.permute.xlu0 %2919
        %2923 = vset.pattern.permute.xlu0 0
        %2924 = vperm.xlu0 %2923, %v1552
        %v2925 = vpop.permute.xlu0 %2924
        %2928 = vset.pattern.permute.xlu0 0
        %2929 = vperm.xlu0 %2928, %v1553
        %v2930 = vpop.permute.xlu0 %2929
        %2933 = vset.pattern.permute.xlu0 0
        %2934 = vperm.xlu0 %2933, %v1554
        %v2935 = vpop.permute.xlu0 %2934
        %2938 = vset.pattern.permute.xlu0 0
        %2939 = vperm.xlu0 %2938, %v1555
        %v2940 = vpop.permute.xlu0 %2939
        %2943 = vset.pattern.permute.xlu0 0
        %2944 = vperm.xlu0 %2943, %v1556
        %v2945 = vpop.permute.xlu0 %2944
        %2948 = vset.pattern.permute.xlu0 0
        %2949 = vperm.xlu0 %2948, %v1557
        %v2950 = vpop.permute.xlu0 %2949
        %2953 = vset.pattern.permute.xlu0 0
        %2954 = vperm.xlu0 %2953, %v1558
        %v2955 = vpop.permute.xlu0 %2954
        %2958 = vset.pattern.permute.xlu0 0
        %2959 = vperm.xlu0 %2958, %v1559
        %v2960 = vpop.permute.xlu0 %2959
        %2963 = vset.pattern.permute.xlu0 0
        %2964 = vperm.xlu0 %2963, %v1560
        %v2965 = vpop.permute.xlu0 %2964
        %2968 = vset.pattern.permute.xlu0 0
        %2969 = vperm.xlu0 %2968, %v1561
        %v2970 = vpop.permute.xlu0 %2969
        %2973 = vset.pattern.permute.xlu0 0
        %2974 = vperm.xlu0 %2973, %v1562
        %v2975 = vpop.permute.xlu0 %2974
        %2978 = vset.pattern.permute.xlu0 0
        %2979 = vperm.xlu0 %2978, %v1563
        %v2980 = vpop.permute.xlu0 %2979
        %2983 = vset.pattern.permute.xlu0 0
        %2984 = vperm.xlu0 %2983, %v1564
        %v2985 = vpop.permute.xlu0 %2984
        %2988 = vset.pattern.permute.xlu0 0
        %2989 = vperm.xlu0 %2988, %v1565
        %v2990 = vpop.permute.xlu0 %2989
        %2993 = vset.pattern.permute.xlu0 0
        %2994 = vperm.xlu0 %2993, %v1566
        %v2995 = vpop.permute.xlu0 %2994
        %2998 = vset.pattern.permute.xlu0 0
        %2999 = vperm.xlu0 %2998, %v1567
        %v3000 = vpop.permute.xlu0 %2999
        %3003 = vset.pattern.permute.xlu0 0
        %3004 = vperm.xlu0 %3003, %v1568
        %v3005 = vpop.permute.xlu0 %3004
        %3008 = vset.pattern.permute.xlu0 0
        %3009 = vperm.xlu0 %3008, %v1569
        %v3010 = vpop.permute.xlu0 %3009
        %3013 = vset.pattern.permute.xlu0 0
        %3014 = vperm.xlu0 %3013, %v1570
        %v3015 = vpop.permute.xlu0 %3014
        %3018 = vset.pattern.permute.xlu0 0
        %3019 = vperm.xlu0 %3018, %v1571
        %v3020 = vpop.permute.xlu0 %3019
        %3023 = vset.pattern.permute.xlu0 0
        %3024 = vperm.xlu0 %3023, %v1572
        %v3025 = vpop.permute.xlu0 %3024
        %3028 = vset.pattern.permute.xlu0 0
        %3029 = vperm.xlu0 %3028, %v1573
        %v3030 = vpop.permute.xlu0 %3029
        %3033 = vset.pattern.permute.xlu0 0
        %3034 = vperm.xlu0 %3033, %v1574
        %v3035 = vpop.permute.xlu0 %3034
        %3038 = vset.pattern.permute.xlu0 0
        %3039 = vperm.xlu0 %3038, %v1575
        %v3040 = vpop.permute.xlu0 %3039
        %3043 = vset.pattern.permute.xlu0 0
        %3044 = vperm.xlu0 %3043, %v1576
        %v3045 = vpop.permute.xlu0 %3044
        %3048 = vset.pattern.permute.xlu0 0
        %3049 = vperm.xlu0 %3048, %v1577
        %v3050 = vpop.permute.xlu0 %3049
        %3053 = vset.pattern.permute.xlu0 0
        %3054 = vperm.xlu0 %3053, %v1578
        %v3055 = vpop.permute.xlu0 %3054
        %3058 = vset.pattern.permute.xlu0 0
        %3059 = vperm.xlu0 %3058, %v1579
        %v3060 = vpop.permute.xlu0 %3059
        %v3062 = vsel %vm2838, %v2905, 0.0
        %v3063 = vsel %vm2839, %v2905, 0.0
        %v3064 = vsel %vm2840, %v2910, 0.0
        %v3065 = vsel %vm2841, %v2910, 0.0
        %v3066 = vsel %vm2842, %v2915, 0.0
        %v3067 = vsel %vm2843, %v2915, 0.0
        %v3068 = vsel %vm2844, %v2920, 0.0
        %v3069 = vsel %vm2845, %v2920, 0.0
        %v3070 = vsel %vm2846, %v2925, 0.0
        %v3071 = vsel %vm2847, %v2925, 0.0
        %v3072 = vsel %vm2848, %v2930, 0.0
        %v3073 = vsel %vm2849, %v2930, 0.0
        %v3074 = vsel %vm2850, %v2935, 0.0
        %v3075 = vsel %vm2851, %v2935, 0.0
        %v3076 = vsel %vm2852, %v2940, 0.0
        %v3077 = vsel %vm2853, %v2940, 0.0
        %v3078 = vsel %vm2854, %v2945, 0.0
        %v3079 = vsel %vm2855, %v2945, 0.0
        %v3080 = vsel %vm2856, %v2950, 0.0
        %v3081 = vsel %vm2857, %v2950, 0.0
        %v3082 = vsel %vm2858, %v2955, 0.0
        %v3083 = vsel %vm2859, %v2955, 0.0
        %v3084 = vsel %vm2860, %v2960, 0.0
        %v3085 = vsel %vm2861, %v2960, 0.0
        %v3086 = vsel %vm2862, %v2965, 0.0
        %v3087 = vsel %vm2863, %v2965, 0.0
        %v3088 = vsel %vm2864, %v2970, 0.0
        %v3089 = vsel %vm2865, %v2970, 0.0
        %v3090 = vsel %vm2866, %v2975, 0.0
        %v3091 = vsel %vm2867, %v2975, 0.0
        %v3092 = vsel %vm2868, %v2980, 0.0
        %v3093 = vsel %vm2869, %v2980, 0.0
        %v3094 = vsel %vm2870, %v2985, 0.0
        %v3095 = vsel %vm2871, %v2985, 0.0
        %v3096 = vsel %vm2872, %v2990, 0.0
        %v3097 = vsel %vm2873, %v2990, 0.0
        %v3098 = vsel %vm2874, %v2995, 0.0
        %v3099 = vsel %vm2875, %v2995, 0.0
        %v3100 = vsel %vm2876, %v3000, 0.0
        %v3101 = vsel %vm2877, %v3000, 0.0
        %v3102 = vsel %vm2878, %v3005, 0.0
        %v3103 = vsel %vm2879, %v3005, 0.0
        %v3104 = vsel %vm2880, %v3010, 0.0
        %v3105 = vsel %vm2881, %v3010, 0.0
        %v3106 = vsel %vm2882, %v3015, 0.0
        %v3107 = vsel %vm2883, %v3015, 0.0
        %v3108 = vsel %vm2884, %v3020, 0.0
        %v3109 = vsel %vm2885, %v3020, 0.0
        %v3110 = vsel %vm2886, %v3025, 0.0
        %v3111 = vsel %vm2887, %v3025, 0.0
        %v3112 = vsel %vm2888, %v3030, 0.0
        %v3113 = vsel %vm2889, %v3030, 0.0
        %v3114 = vsel %vm2890, %v3035, 0.0
        %v3115 = vsel %vm2891, %v3035, 0.0
        %v3116 = vsel %vm2892, %v3040, 0.0
        %v3117 = vsel %vm2893, %v3040, 0.0
        %v3118 = vsel %vm2894, %v3045, 0.0
        %v3119 = vsel %vm2895, %v3045, 0.0
        %v3120 = vsel %vm2896, %v3050, 0.0
        %v3121 = vsel %vm2897, %v3050, 0.0
        %v3122 = vsel %vm2898, %v3055, 0.0
        %v3123 = vsel %vm2899, %v3055, 0.0
        %v3124 = vsel %vm2900, %v3060, 0.0
        %v3125 = vsel %vm2901, %v3060, 0.0
        %3127 = vset.pattern.permute.xlu0 0
        %3128 = vperm.xlu0 %3127, %v1036
        %v3129 = vpop.permute.xlu0 %3128
        %3132 = vset.pattern.permute.xlu0 0
        %3133 = vperm.xlu0 %3132, %v1037
        %v3134 = vpop.permute.xlu0 %3133
        %3137 = vset.pattern.permute.xlu0 0
        %3138 = vperm.xlu0 %3137, %v1038
        %v3139 = vpop.permute.xlu0 %3138
        %3142 = vset.pattern.permute.xlu0 0
        %3143 = vperm.xlu0 %3142, %v1039
        %v3144 = vpop.permute.xlu0 %3143
        %3147 = vset.pattern.permute.xlu0 0
        %3148 = vperm.xlu0 %3147, %v1040
        %v3149 = vpop.permute.xlu0 %3148
        %3152 = vset.pattern.permute.xlu0 0
        %3153 = vperm.xlu0 %3152, %v1041
        %v3154 = vpop.permute.xlu0 %3153
        %3157 = vset.pattern.permute.xlu0 0
        %3158 = vperm.xlu0 %3157, %v1042
        %v3159 = vpop.permute.xlu0 %3158
        %3162 = vset.pattern.permute.xlu0 0
        %3163 = vperm.xlu0 %3162, %v1043
        %v3164 = vpop.permute.xlu0 %3163
        %3167 = vset.pattern.permute.xlu0 0
        %3168 = vperm.xlu0 %3167, %v1044
        %v3169 = vpop.permute.xlu0 %3168
        %3172 = vset.pattern.permute.xlu0 0
        %3173 = vperm.xlu0 %3172, %v1045
        %v3174 = vpop.permute.xlu0 %3173
        %3177 = vset.pattern.permute.xlu0 0
        %3178 = vperm.xlu0 %3177, %v1046
        %v3179 = vpop.permute.xlu0 %3178
        %3182 = vset.pattern.permute.xlu0 0
        %3183 = vperm.xlu0 %3182, %v1047
        %v3184 = vpop.permute.xlu0 %3183
        %3187 = vset.pattern.permute.xlu0 0
        %3188 = vperm.xlu0 %3187, %v1048
        %v3189 = vpop.permute.xlu0 %3188
        %3192 = vset.pattern.permute.xlu0 0
        %3193 = vperm.xlu0 %3192, %v1049
        %v3194 = vpop.permute.xlu0 %3193
        %3197 = vset.pattern.permute.xlu0 0
        %3198 = vperm.xlu0 %3197, %v1050
        %v3199 = vpop.permute.xlu0 %3198
        %3202 = vset.pattern.permute.xlu0 0
        %3203 = vperm.xlu0 %3202, %v1051
        %v3204 = vpop.permute.xlu0 %3203
        %3207 = vset.pattern.permute.xlu0 0
        %3208 = vperm.xlu0 %3207, %v1052
        %v3209 = vpop.permute.xlu0 %3208
        %3212 = vset.pattern.permute.xlu0 0
        %3213 = vperm.xlu0 %3212, %v1053
        %v3214 = vpop.permute.xlu0 %3213
        %3217 = vset.pattern.permute.xlu0 0
        %3218 = vperm.xlu0 %3217, %v1054
        %v3219 = vpop.permute.xlu0 %3218
        %3222 = vset.pattern.permute.xlu0 0
        %3223 = vperm.xlu0 %3222, %v1055
        %v3224 = vpop.permute.xlu0 %3223
        %3227 = vset.pattern.permute.xlu0 0
        %3228 = vperm.xlu0 %3227, %v1056
        %v3229 = vpop.permute.xlu0 %3228
        %3232 = vset.pattern.permute.xlu0 0
        %3233 = vperm.xlu0 %3232, %v1057
        %v3234 = vpop.permute.xlu0 %3233
        %3237 = vset.pattern.permute.xlu0 0
        %3238 = vperm.xlu0 %3237, %v1058
        %v3239 = vpop.permute.xlu0 %3238
        %3242 = vset.pattern.permute.xlu0 0
        %3243 = vperm.xlu0 %3242, %v1059
        %v3244 = vpop.permute.xlu0 %3243
        %3247 = vset.pattern.permute.xlu0 0
        %3248 = vperm.xlu0 %3247, %v1060
        %v3249 = vpop.permute.xlu0 %3248
        %3252 = vset.pattern.permute.xlu0 0
        %3253 = vperm.xlu0 %3252, %v1061
        %v3254 = vpop.permute.xlu0 %3253
        %3257 = vset.pattern.permute.xlu0 0
        %3258 = vperm.xlu0 %3257, %v1062
        %v3259 = vpop.permute.xlu0 %3258
        %3262 = vset.pattern.permute.xlu0 0
        %3263 = vperm.xlu0 %3262, %v1063
        %v3264 = vpop.permute.xlu0 %3263
        %3267 = vset.pattern.permute.xlu0 0
        %3268 = vperm.xlu0 %3267, %v1064
        %v3269 = vpop.permute.xlu0 %3268
        %3272 = vset.pattern.permute.xlu0 0
        %3273 = vperm.xlu0 %3272, %v1065
        %v3274 = vpop.permute.xlu0 %3273
        %3277 = vset.pattern.permute.xlu0 0
        %3278 = vperm.xlu0 %3277, %v1066
        %v3279 = vpop.permute.xlu0 %3278
        %3282 = vset.pattern.permute.xlu0 0
        %3283 = vperm.xlu0 %3282, %v1067
        %v3284 = vpop.permute.xlu0 %3283
        %vm3286 = vcmp.eq.f32.partialorder %v2674, %v3129
        %vm3287 = vcmp.eq.f32.partialorder %v2675, %v3129
        %vm3288 = vcmp.eq.f32.partialorder %v2674, %v3134
        %vm3289 = vcmp.eq.f32.partialorder %v2675, %v3134
        %vm3290 = vcmp.eq.f32.partialorder %v2674, %v3139
        %vm3291 = vcmp.eq.f32.partialorder %v2675, %v3139
        %vm3292 = vcmp.eq.f32.partialorder %v2674, %v3144
        %vm3293 = vcmp.eq.f32.partialorder %v2675, %v3144
        %vm3294 = vcmp.eq.f32.partialorder %v2674, %v3149
        %vm3295 = vcmp.eq.f32.partialorder %v2675, %v3149
        %vm3296 = vcmp.eq.f32.partialorder %v2674, %v3154
        %vm3297 = vcmp.eq.f32.partialorder %v2675, %v3154
        %vm3298 = vcmp.eq.f32.partialorder %v2674, %v3159
        %vm3299 = vcmp.eq.f32.partialorder %v2675, %v3159
        %vm3300 = vcmp.eq.f32.partialorder %v2674, %v3164
        %vm3301 = vcmp.eq.f32.partialorder %v2675, %v3164
        %vm3302 = vcmp.eq.f32.partialorder %v2674, %v3169
        %vm3303 = vcmp.eq.f32.partialorder %v2675, %v3169
        %vm3304 = vcmp.eq.f32.partialorder %v2674, %v3174
        %vm3305 = vcmp.eq.f32.partialorder %v2675, %v3174
        %vm3306 = vcmp.eq.f32.partialorder %v2674, %v3179
        %vm3307 = vcmp.eq.f32.partialorder %v2675, %v3179
        %vm3308 = vcmp.eq.f32.partialorder %v2674, %v3184
        %vm3309 = vcmp.eq.f32.partialorder %v2675, %v3184
        %vm3310 = vcmp.eq.f32.partialorder %v2674, %v3189
        %vm3311 = vcmp.eq.f32.partialorder %v2675, %v3189
        %vm3312 = vcmp.eq.f32.partialorder %v2674, %v3194
        %vm3313 = vcmp.eq.f32.partialorder %v2675, %v3194
        %vm3314 = vcmp.eq.f32.partialorder %v2674, %v3199
        %vm3315 = vcmp.eq.f32.partialorder %v2675, %v3199
        %vm3316 = vcmp.eq.f32.partialorder %v2674, %v3204
        %vm3317 = vcmp.eq.f32.partialorder %v2675, %v3204
        %vm3318 = vcmp.eq.f32.partialorder %v2674, %v3209
        %vm3319 = vcmp.eq.f32.partialorder %v2675, %v3209
        %vm3320 = vcmp.eq.f32.partialorder %v2674, %v3214
        %vm3321 = vcmp.eq.f32.partialorder %v2675, %v3214
        %vm3322 = vcmp.eq.f32.partialorder %v2674, %v3219
        %vm3323 = vcmp.eq.f32.partialorder %v2675, %v3219
        %vm3324 = vcmp.eq.f32.partialorder %v2674, %v3224
        %vm3325 = vcmp.eq.f32.partialorder %v2675, %v3224
        %vm3326 = vcmp.eq.f32.partialorder %v2674, %v3229
        %vm3327 = vcmp.eq.f32.partialorder %v2675, %v3229
        %vm3328 = vcmp.eq.f32.partialorder %v2674, %v3234
        %vm3329 = vcmp.eq.f32.partialorder %v2675, %v3234
        %vm3330 = vcmp.eq.f32.partialorder %v2674, %v3239
        %vm3331 = vcmp.eq.f32.partialorder %v2675, %v3239
        %vm3332 = vcmp.eq.f32.partialorder %v2674, %v3244
        %vm3333 = vcmp.eq.f32.partialorder %v2675, %v3244
        %vm3334 = vcmp.eq.f32.partialorder %v2674, %v3249
        %vm3335 = vcmp.eq.f32.partialorder %v2675, %v3249
        %vm3336 = vcmp.eq.f32.partialorder %v2674, %v3254
        %vm3337 = vcmp.eq.f32.partialorder %v2675, %v3254
        %vm3338 = vcmp.eq.f32.partialorder %v2674, %v3259
        %vm3339 = vcmp.eq.f32.partialorder %v2675, %v3259
        %vm3340 = vcmp.eq.f32.partialorder %v2674, %v3264
        %vm3341 = vcmp.eq.f32.partialorder %v2675, %v3264
        %vm3342 = vcmp.eq.f32.partialorder %v2674, %v3269
        %vm3343 = vcmp.eq.f32.partialorder %v2675, %v3269
        %vm3344 = vcmp.eq.f32.partialorder %v2674, %v3274
        %vm3345 = vcmp.eq.f32.partialorder %v2675, %v3274
        %vm3346 = vcmp.eq.f32.partialorder %v2674, %v3279
        %vm3347 = vcmp.eq.f32.partialorder %v2675, %v3279
        %vm3348 = vcmp.eq.f32.partialorder %v2674, %v3284
        %vm3349 = vcmp.eq.f32.partialorder %v2675, %v3284
        %3351 = vset.pattern.permute.xlu0 0
        %3352 = vperm.xlu0 %3351, %v1676
        %v3353 = vpop.permute.xlu0 %3352
        %3356 = vset.pattern.permute.xlu0 0
        %3357 = vperm.xlu0 %3356, %v1677
        %v3358 = vpop.permute.xlu0 %3357
        %3361 = vset.pattern.permute.xlu0 0
        %3362 = vperm.xlu0 %3361, %v1678
        %v3363 = vpop.permute.xlu0 %3362
        %3366 = vset.pattern.permute.xlu0 0
        %3367 = vperm.xlu0 %3366, %v1679
        %v3368 = vpop.permute.xlu0 %3367
        %3371 = vset.pattern.permute.xlu0 0
        %3372 = vperm.xlu0 %3371, %v1680
        %v3373 = vpop.permute.xlu0 %3372
        %3376 = vset.pattern.permute.xlu0 0
        %3377 = vperm.xlu0 %3376, %v1681
        %v3378 = vpop.permute.xlu0 %3377
        %3381 = vset.pattern.permute.xlu0 0
        %3382 = vperm.xlu0 %3381, %v1682
        %v3383 = vpop.permute.xlu0 %3382
        %3386 = vset.pattern.permute.xlu0 0
        %3387 = vperm.xlu0 %3386, %v1683
        %v3388 = vpop.permute.xlu0 %3387
        %3391 = vset.pattern.permute.xlu0 0
        %3392 = vperm.xlu0 %3391, %v1684
        %v3393 = vpop.permute.xlu0 %3392
        %3396 = vset.pattern.permute.xlu0 0
        %3397 = vperm.xlu0 %3396, %v1685
        %v3398 = vpop.permute.xlu0 %3397
        %3401 = vset.pattern.permute.xlu0 0
        %3402 = vperm.xlu0 %3401, %v1686
        %v3403 = vpop.permute.xlu0 %3402
        %3406 = vset.pattern.permute.xlu0 0
        %3407 = vperm.xlu0 %3406, %v1687
        %v3408 = vpop.permute.xlu0 %3407
        %3411 = vset.pattern.permute.xlu0 0
        %3412 = vperm.xlu0 %3411, %v1688
        %v3413 = vpop.permute.xlu0 %3412
        %3416 = vset.pattern.permute.xlu0 0
        %3417 = vperm.xlu0 %3416, %v1689
        %v3418 = vpop.permute.xlu0 %3417
        %3421 = vset.pattern.permute.xlu0 0
        %3422 = vperm.xlu0 %3421, %v1690
        %v3423 = vpop.permute.xlu0 %3422
        %3426 = vset.pattern.permute.xlu0 0
        %3427 = vperm.xlu0 %3426, %v1691
        %v3428 = vpop.permute.xlu0 %3427
        %3431 = vset.pattern.permute.xlu0 0
        %3432 = vperm.xlu0 %3431, %v1692
        %v3433 = vpop.permute.xlu0 %3432
        %3436 = vset.pattern.permute.xlu0 0
        %3437 = vperm.xlu0 %3436, %v1693
        %v3438 = vpop.permute.xlu0 %3437
        %3441 = vset.pattern.permute.xlu0 0
        %3442 = vperm.xlu0 %3441, %v1694
        %v3443 = vpop.permute.xlu0 %3442
        %3446 = vset.pattern.permute.xlu0 0
        %3447 = vperm.xlu0 %3446, %v1695
        %v3448 = vpop.permute.xlu0 %3447
        %3451 = vset.pattern.permute.xlu0 0
        %3452 = vperm.xlu0 %3451, %v1696
        %v3453 = vpop.permute.xlu0 %3452
        %3456 = vset.pattern.permute.xlu0 0
        %3457 = vperm.xlu0 %3456, %v1697
        %v3458 = vpop.permute.xlu0 %3457
        %3461 = vset.pattern.permute.xlu0 0
        %3462 = vperm.xlu0 %3461, %v1698
        %v3463 = vpop.permute.xlu0 %3462
        %3466 = vset.pattern.permute.xlu0 0
        %3467 = vperm.xlu0 %3466, %v1699
        %v3468 = vpop.permute.xlu0 %3467
        %3471 = vset.pattern.permute.xlu0 0
        %3472 = vperm.xlu0 %3471, %v1700
        %v3473 = vpop.permute.xlu0 %3472
        %3476 = vset.pattern.permute.xlu0 0
        %3477 = vperm.xlu0 %3476, %v1701
        %v3478 = vpop.permute.xlu0 %3477
        %3481 = vset.pattern.permute.xlu0 0
        %3482 = vperm.xlu0 %3481, %v1702
        %v3483 = vpop.permute.xlu0 %3482
        %3486 = vset.pattern.permute.xlu0 0
        %3487 = vperm.xlu0 %3486, %v1703
        %v3488 = vpop.permute.xlu0 %3487
        %3491 = vset.pattern.permute.xlu0 0
        %3492 = vperm.xlu0 %3491, %v1704
        %v3493 = vpop.permute.xlu0 %3492
        %3496 = vset.pattern.permute.xlu0 0
        %3497 = vperm.xlu0 %3496, %v1705
        %v3498 = vpop.permute.xlu0 %3497
        %3501 = vset.pattern.permute.xlu0 0
        %3502 = vperm.xlu0 %3501, %v1706
        %v3503 = vpop.permute.xlu0 %3502
        %3506 = vset.pattern.permute.xlu0 0
        %3507 = vperm.xlu0 %3506, %v1707
        %v3508 = vpop.permute.xlu0 %3507
        %v3510 = vsel %vm3286, %v3353, 0.0
        %v3511 = vsel %vm3287, %v3353, 0.0
        %v3512 = vsel %vm3288, %v3358, 0.0
        %v3513 = vsel %vm3289, %v3358, 0.0
        %v3514 = vsel %vm3290, %v3363, 0.0
        %v3515 = vsel %vm3291, %v3363, 0.0
        %v3516 = vsel %vm3292, %v3368, 0.0
        %v3517 = vsel %vm3293, %v3368, 0.0
        %v3518 = vsel %vm3294, %v3373, 0.0
        %v3519 = vsel %vm3295, %v3373, 0.0
        %v3520 = vsel %vm3296, %v3378, 0.0
        %v3521 = vsel %vm3297, %v3378, 0.0
        %v3522 = vsel %vm3298, %v3383, 0.0
        %v3523 = vsel %vm3299, %v3383, 0.0
        %v3524 = vsel %vm3300, %v3388, 0.0
        %v3525 = vsel %vm3301, %v3388, 0.0
        %v3526 = vsel %vm3302, %v3393, 0.0
        %v3527 = vsel %vm3303, %v3393, 0.0
        %v3528 = vsel %vm3304, %v3398, 0.0
        %v3529 = vsel %vm3305, %v3398, 0.0
        %v3530 = vsel %vm3306, %v3403, 0.0
        %v3531 = vsel %vm3307, %v3403, 0.0
        %v3532 = vsel %vm3308, %v3408, 0.0
        %v3533 = vsel %vm3309, %v3408, 0.0
        %v3534 = vsel %vm3310, %v3413, 0.0
        %v3535 = vsel %vm3311, %v3413, 0.0
        %v3536 = vsel %vm3312, %v3418, 0.0
        %v3537 = vsel %vm3313, %v3418, 0.0
        %v3538 = vsel %vm3314, %v3423, 0.0
        %v3539 = vsel %vm3315, %v3423, 0.0
        %v3540 = vsel %vm3316, %v3428, 0.0
        %v3541 = vsel %vm3317, %v3428, 0.0
        %v3542 = vsel %vm3318, %v3433, 0.0
        %v3543 = vsel %vm3319, %v3433, 0.0
        %v3544 = vsel %vm3320, %v3438, 0.0
        %v3545 = vsel %vm3321, %v3438, 0.0
        %v3546 = vsel %vm3322, %v3443, 0.0
        %v3547 = vsel %vm3323, %v3443, 0.0
        %v3548 = vsel %vm3324, %v3448, 0.0
        %v3549 = vsel %vm3325, %v3448, 0.0
        %v3550 = vsel %vm3326, %v3453, 0.0
        %v3551 = vsel %vm3327, %v3453, 0.0
        %v3552 = vsel %vm3328, %v3458, 0.0
        %v3553 = vsel %vm3329, %v3458, 0.0
        %v3554 = vsel %vm3330, %v3463, 0.0
        %v3555 = vsel %vm3331, %v3463, 0.0
        %v3556 = vsel %vm3332, %v3468, 0.0
        %v3557 = vsel %vm3333, %v3468, 0.0
        %v3558 = vsel %vm3334, %v3473, 0.0
        %v3559 = vsel %vm3335, %v3473, 0.0
        %v3560 = vsel %vm3336, %v3478, 0.0
        %v3561 = vsel %vm3337, %v3478, 0.0
        %v3562 = vsel %vm3338, %v3483, 0.0
        %v3563 = vsel %vm3339, %v3483, 0.0
        %v3564 = vsel %vm3340, %v3488, 0.0
        %v3565 = vsel %vm3341, %v3488, 0.0
        %v3566 = vsel %vm3342, %v3493, 0.0
        %v3567 = vsel %vm3343, %v3493, 0.0
        %v3568 = vsel %vm3344, %v3498, 0.0
        %v3569 = vsel %vm3345, %v3498, 0.0
        %v3570 = vsel %vm3346, %v3503, 0.0
        %v3571 = vsel %vm3347, %v3503, 0.0
        %v3572 = vsel %vm3348, %v3508, 0.0
        %v3573 = vsel %vm3349, %v3508, 0.0
        %v3574 = vadd.f32 %v3062, %v3510
        %v3575 = vadd.f32 %v3063, %v3511
        %v3576 = vadd.f32 %v3064, %v3512
        %v3577 = vadd.f32 %v3065, %v3513
        %v3578 = vadd.f32 %v3066, %v3514
        %v3579 = vadd.f32 %v3067, %v3515
        %v3580 = vadd.f32 %v3068, %v3516
        %v3581 = vadd.f32 %v3069, %v3517
        %v3582 = vadd.f32 %v3070, %v3518
        %v3583 = vadd.f32 %v3071, %v3519
        %v3584 = vadd.f32 %v3072, %v3520
        %v3585 = vadd.f32 %v3073, %v3521
        %v3586 = vadd.f32 %v3074, %v3522
        %v3587 = vadd.f32 %v3075, %v3523
        %v3588 = vadd.f32 %v3076, %v3524
        %v3589 = vadd.f32 %v3077, %v3525
        %v3590 = vadd.f32 %v3078, %v3526
        %v3591 = vadd.f32 %v3079, %v3527
        %v3592 = vadd.f32 %v3080, %v3528
        %v3593 = vadd.f32 %v3081, %v3529
        %v3594 = vadd.f32 %v3082, %v3530
        %v3595 = vadd.f32 %v3083, %v3531
        %v3596 = vadd.f32 %v3084, %v3532
        %v3597 = vadd.f32 %v3085, %v3533
        %v3598 = vadd.f32 %v3086, %v3534
        %v3599 = vadd.f32 %v3087, %v3535
        %v3600 = vadd.f32 %v3088, %v3536
        %v3601 = vadd.f32 %v3089, %v3537
        %v3602 = vadd.f32 %v3090, %v3538
        %v3603 = vadd.f32 %v3091, %v3539
        %v3604 = vadd.f32 %v3092, %v3540
        %v3605 = vadd.f32 %v3093, %v3541
        %v3606 = vadd.f32 %v3094, %v3542
        %v3607 = vadd.f32 %v3095, %v3543
        %v3608 = vadd.f32 %v3096, %v3544
        %v3609 = vadd.f32 %v3097, %v3545
        %v3610 = vadd.f32 %v3098, %v3546
        %v3611 = vadd.f32 %v3099, %v3547
        %v3612 = vadd.f32 %v3100, %v3548
        %v3613 = vadd.f32 %v3101, %v3549
        %v3614 = vadd.f32 %v3102, %v3550
        %v3615 = vadd.f32 %v3103, %v3551
        %v3616 = vadd.f32 %v3104, %v3552
        %v3617 = vadd.f32 %v3105, %v3553
        %v3618 = vadd.f32 %v3106, %v3554
        %v3619 = vadd.f32 %v3107, %v3555
        %v3620 = vadd.f32 %v3108, %v3556
        %v3621 = vadd.f32 %v3109, %v3557
        %v3622 = vadd.f32 %v3110, %v3558
        %v3623 = vadd.f32 %v3111, %v3559
        %v3624 = vadd.f32 %v3112, %v3560
        %v3625 = vadd.f32 %v3113, %v3561
        %v3626 = vadd.f32 %v3114, %v3562
        %v3627 = vadd.f32 %v3115, %v3563
        %v3628 = vadd.f32 %v3116, %v3564
        %v3629 = vadd.f32 %v3117, %v3565
        %v3630 = vadd.f32 %v3118, %v3566
        %v3631 = vadd.f32 %v3119, %v3567
        %v3632 = vadd.f32 %v3120, %v3568
        %v3633 = vadd.f32 %v3121, %v3569
        %v3634 = vadd.f32 %v3122, %v3570
        %v3635 = vadd.f32 %v3123, %v3571
        %v3636 = vadd.f32 %v3124, %v3572
        %v3637 = vadd.f32 %v3125, %v3573
        %v3638 = vmul.f32 %v2609, %v3574
        %v3639 = vmul.f32 %v2610, %v3575
        %v3640 = vmul.f32 %v2611, %v3576
        %v3641 = vmul.f32 %v2612, %v3577
        %v3642 = vmul.f32 %v2613, %v3578
        %v3643 = vmul.f32 %v2614, %v3579
        %v3644 = vmul.f32 %v2615, %v3580
        %v3645 = vmul.f32 %v2616, %v3581
        %v3646 = vmul.f32 %v2617, %v3582
        %v3647 = vmul.f32 %v2618, %v3583
        %v3648 = vmul.f32 %v2619, %v3584
        %v3649 = vmul.f32 %v2620, %v3585
        %v3650 = vmul.f32 %v2621, %v3586
        %v3651 = vmul.f32 %v2622, %v3587
        %v3652 = vmul.f32 %v2623, %v3588
        %v3653 = vmul.f32 %v2624, %v3589
        %v3654 = vmul.f32 %v2625, %v3590
        %v3655 = vmul.f32 %v2626, %v3591
        %v3656 = vmul.f32 %v2627, %v3592
        %v3657 = vmul.f32 %v2628, %v3593
        %v3658 = vmul.f32 %v2629, %v3594
        %v3659 = vmul.f32 %v2630, %v3595
        %v3660 = vmul.f32 %v2631, %v3596
        %v3661 = vmul.f32 %v2632, %v3597
        %v3662 = vmul.f32 %v2633, %v3598
        %v3663 = vmul.f32 %v2634, %v3599
        %v3664 = vmul.f32 %v2635, %v3600
        %v3665 = vmul.f32 %v2636, %v3601
        %v3666 = vmul.f32 %v2637, %v3602
        %v3667 = vmul.f32 %v2638, %v3603
        %v3668 = vmul.f32 %v2639, %v3604
        %v3669 = vmul.f32 %v2640, %v3605
        %v3670 = vmul.f32 %v2641, %v3606
        %v3671 = vmul.f32 %v2642, %v3607
        %v3672 = vmul.f32 %v2643, %v3608
        %v3673 = vmul.f32 %v2644, %v3609
        %v3674 = vmul.f32 %v2645, %v3610
        %v3675 = vmul.f32 %v2646, %v3611
        %v3676 = vmul.f32 %v2647, %v3612
        %v3677 = vmul.f32 %v2648, %v3613
        %v3678 = vmul.f32 %v2649, %v3614
        %v3679 = vmul.f32 %v2650, %v3615
        %v3680 = vmul.f32 %v2651, %v3616
        %v3681 = vmul.f32 %v2652, %v3617
        %v3682 = vmul.f32 %v2653, %v3618
        %v3683 = vmul.f32 %v2654, %v3619
        %v3684 = vmul.f32 %v2655, %v3620
        %v3685 = vmul.f32 %v2656, %v3621
        %v3686 = vmul.f32 %v2657, %v3622
        %v3687 = vmul.f32 %v2658, %v3623
        %v3688 = vmul.f32 %v2659, %v3624
        %v3689 = vmul.f32 %v2660, %v3625
        %v3690 = vmul.f32 %v2661, %v3626
        %v3691 = vmul.f32 %v2662, %v3627
        %v3692 = vmul.f32 %v2663, %v3628
        %v3693 = vmul.f32 %v2664, %v3629
        %v3694 = vmul.f32 %v2665, %v3630
        %v3695 = vmul.f32 %v2666, %v3631
        %v3696 = vmul.f32 %v2667, %v3632
        %v3697 = vmul.f32 %v2668, %v3633
        %v3698 = vmul.f32 %v2669, %v3634
        %v3699 = vmul.f32 %v2670, %v3635
        %v3700 = vmul.f32 %v2671, %v3636
        %v3701 = vmul.f32 %v2672, %v3637
        %v3702 = vpack.c.bf16 %v3640, %v3638
        %v3703 = vpack.c.bf16 %v3641, %v3639
        %v3704 = vpack.c.bf16 %v3644, %v3642
        %v3705 = vpack.c.bf16 %v3645, %v3643
        %v3706 = vpack.c.bf16 %v3648, %v3646
        %v3707 = vpack.c.bf16 %v3649, %v3647
        %v3708 = vpack.c.bf16 %v3652, %v3650
        %v3709 = vpack.c.bf16 %v3653, %v3651
        %v3710 = vpack.c.bf16 %v3656, %v3654
        %v3711 = vpack.c.bf16 %v3657, %v3655
        %v3712 = vpack.c.bf16 %v3660, %v3658
        %v3713 = vpack.c.bf16 %v3661, %v3659
        %v3714 = vpack.c.bf16 %v3664, %v3662
        %v3715 = vpack.c.bf16 %v3665, %v3663
        %v3716 = vpack.c.bf16 %v3668, %v3666
        %v3717 = vpack.c.bf16 %v3669, %v3667
        %v3718 = vpack.c.bf16 %v3672, %v3670
        %v3719 = vpack.c.bf16 %v3673, %v3671
        %v3720 = vpack.c.bf16 %v3676, %v3674
        %v3721 = vpack.c.bf16 %v3677, %v3675
        %v3722 = vpack.c.bf16 %v3680, %v3678
        %v3723 = vpack.c.bf16 %v3681, %v3679
        %v3724 = vpack.c.bf16 %v3684, %v3682
        %v3725 = vpack.c.bf16 %v3685, %v3683
        %v3726 = vpack.c.bf16 %v3688, %v3686
        %v3727 = vpack.c.bf16 %v3689, %v3687
        %v3728 = vpack.c.bf16 %v3692, %v3690
        %v3729 = vpack.c.bf16 %v3693, %v3691
        %v3730 = vpack.c.bf16 %v3696, %v3694
        %v3731 = vpack.c.bf16 %v3697, %v3695
        %v3732 = vpack.c.bf16 %v3700, %v3698
        %v3733 = vpack.c.bf16 %v3701, %v3699
        %v3734 = vld [vmem:[%s245] sm:$0xff]
        %3736 = vst [vmem:[#allocation1] ss:$2 sm:$0xff] %v3734
        %v3737 = vld.sshfl [vmem:[#allocation1] sm:$0xff pattern:$0x75316420]
        %v3738 = vld.sshfl [vmem:[#allocation1 + $0x8] sm:$0xff pattern:$0x75316420]
        %v3741 = vpack.c.bf16 %v3737, %v3737
        %v3742 = vpack.c.bf16 %v3738, %v3738
        %3743 = vmatpush.bf16.xpose.msra.mxu0 %v3716
        %3744 = vmatpush.bf16.xpose.msra.mxu0 %v3714
        %3745 = vmatpush.bf16.xpose.msra.mxu0 %v3712
        %3746 = vmatpush.bf16.xpose.msra.mxu0 %v3710
        %3747 = vmatpush.bf16.xpose.msra.mxu0 %v3708
        %3748 = vmatpush.bf16.xpose.msra.mxu0 %v3706
        %3749 = vmatpush.bf16.xpose.msra.mxu0 %v3704
        %3750 = vmatpush.bf16.xpose.msra.mxu0 %v3702
        %3751 = vmatmul.bf16.gmra.mxu0 %v3741
        %v3752 = vpop.f32.mrf.mxu0
        %v3753 = vadd.f32 0.0, %v3752
        %v3754 = vpop.f32.mrf.mxu0
        %3755 = vdwg.mxu0
        %3756 = vmatpush.bf16.xpose.msra.mxu0 %v3717
        %3757 = vmatpush.bf16.xpose.msra.mxu0 %v3715
        %3758 = vmatpush.bf16.xpose.msra.mxu0 %v3713
        %3759 = vmatpush.bf16.xpose.msra.mxu0 %v3711
        %3760 = vmatpush.bf16.xpose.msra.mxu0 %v3709
        %3761 = vmatpush.bf16.xpose.msra.mxu0 %v3707
        %3762 = vmatpush.bf16.xpose.msra.mxu0 %v3705
        %3763 = vmatpush.bf16.xpose.msra.mxu0 %v3703
        %3764 = vmatmul.bf16.gmra.mxu0 %v3742
        %v3765 = vpop.f32.mrf.mxu0
        %v3766 = vadd.f32 %v3753, %v3765
        %v3767 = vpop.f32.mrf.mxu0
        %3768 = vdwg.mxu0
        %3769 = vmatpush.bf16.xpose.msra.mxu0 %v3732
        %3770 = vmatpush.bf16.xpose.msra.mxu0 %v3730
        %3771 = vmatpush.bf16.xpose.msra.mxu0 %v3728
        %3772 = vmatpush.bf16.xpose.msra.mxu0 %v3726
        %3773 = vmatpush.bf16.xpose.msra.mxu0 %v3724
        %3774 = vmatpush.bf16.xpose.msra.mxu0 %v3722
        %3775 = vmatpush.bf16.xpose.msra.mxu0 %v3720
        %3776 = vmatpush.bf16.xpose.msra.mxu0 %v3718
        %3777 = vmatmul.bf16.gmra.mxu0 %v3741
        %v3778 = vpop.f32.mrf.mxu0
        %v3779 = vadd.f32 0.0, %v3778
        %v3780 = vpop.f32.mrf.mxu0
        %3781 = vdwg.mxu0
        %3782 = vmatpush.bf16.xpose.msra.mxu0 %v3733
        %3783 = vmatpush.bf16.xpose.msra.mxu0 %v3731
        %3784 = vmatpush.bf16.xpose.msra.mxu0 %v3729
        %3785 = vmatpush.bf16.xpose.msra.mxu0 %v3727
        %3786 = vmatpush.bf16.xpose.msra.mxu0 %v3725
        %3787 = vmatpush.bf16.xpose.msra.mxu0 %v3723
        %3788 = vmatpush.bf16.xpose.msra.mxu0 %v3721
        %3789 = vmatpush.bf16.xpose.msra.mxu0 %v3719
        %3790 = vmatmul.bf16.gmra.mxu0 %v3742
        %v3791 = vpop.f32.mrf.mxu0
        %v3792 = vadd.f32 %v3779, %v3791
        %v3793 = vpop.f32.mrf.mxu0
        %3794 = vdwg.mxu0
        %v3797 = vrot.slane %v3792, 4
        %vm3798 = vcmask 1043456
        %v3799 = vsel %vm3798, %v3766, %v3797
        %3801 = vst [vmem:[%s234] sm:$0xff] %v3799
        %s3802 = sand.u32 %s135, 1
        %s3803 = scalar_lea.sflag [#allocation3], %s3802
        %s3804 = sand.u32 %s135, 1
        %s3805 = smul.addr %s3804, 8
        %s3806 = scalar_lea.vmem [#allocation5], %s3805
        // Predicated region
        $region41: #{tpu_custom_call.1} parent=35 // pred_check
          %p3807 = pneg %p145
        $region42: #{tpu_custom_call.1} parent=35 // pred_check_branch
          %3809 = sbr.rel (%p3807) target = $region44
        $region43: #{tpu_custom_call.1} parent=35 // pred_region
          %s3810 = smul.u32 2, %s24
          %3812 = vsyncadd %s3803, 0
          %s3813 = smul.addr %s23, 2
          %s3814 = sadd.s32 %s3810, %s3813
          %s3815 = smul.addr %s3814, 4
          %s3816 = scalar_lea.hbm %s4, %s3815
          %s3818 = sshll.u32 %s3806, 4
          %s3819 = int_to_ptr.vmem [resolvable:$true] %s3818
          %s3820 = sshll.u32 %s3816, 4
          %s3821 = int_to_ptr.hbm [resolvable:$true] %s3820
          %3823 = dma.vmem_to_hbm [thread:$0]  %s3819, 128, %s3821, %s3803
        $region44: #{tpu_custom_call.1} parent=35 // pred_fallthru
          _
      $region36: #{tpu_custom_call.1} parent=5 // pred_fallthru
        _
      %p3824 = scmp.le.s32.totalorder 2, %s14
      // Predicated region
      $region45: #{tpu_custom_call.1} parent=5 // pred_check
        %p3825 = pneg %p3824
      $region46: #{tpu_custom_call.1} parent=5 // pred_check_branch
        %3827 = sbr.rel (%p3825) target = $region48
      $region47: #{tpu_custom_call.1} parent=5 // pred_region
        %s3828 = ssub.s32 %s14, 2
        // Predicated region
        $region49: #{tpu_custom_call.1} parent=47 // pred_check
          %p3829 = pneg %p151
        $region50: #{tpu_custom_call.1} parent=47 // pred_check_branch
          %3831 = sbr.rel (%p3829) target = $region52
        $region51: #{tpu_custom_call.1} parent=47 // pred_region
          %s3832 = sand.u32 %s136, 1
          %s3833 = scalar_lea.sflag [#allocation3], %s3832
          %s3834 = sand.u32 %s136, 1
          %s3835 = smul.addr %s3834, 8
          %s3836 = scalar_lea.vmem [#allocation5], %s3835
          %3838 = dma.done %s3833, 128
        $region52: #{tpu_custom_call.1} parent=47 // pred_fallthru
          _
      $region48: #{tpu_custom_call.1} parent=5 // pred_fallthru
        _
    $region6: #{tpu_custom_call.1} parent=1 // loop_footer
      %s18 = sadd.s32 1, %s14
    $region7: #{tpu_custom_call.1} parent=1 // loop_footer_branch
      %13 = sbr.rel target = $region3
    $region8: #{tpu_custom_call.1} parent=1 // loop_exit
      _
    %3839 = vsyncpa [#allocation3], 1
    %s3840 = scalar_lea.sflag [#allocation3], 1
    %3841 = vsyncpa %s3840, 1
    %3842 = vsyncpa [#allocation4], 1
    %s3843 = scalar_lea.sflag [#allocation4], 1
    %3844 = vsyncpa %s3843, 1

</llo_original>
